<compile_context>
chip_gen: v7x
topology: tpu7x:2x2x1
jax: 0.10.0
libtpu: 0.0.40
codegen_flags: <defaults>
</compile_context>

<pallas_src>
import numpy as np
import jax
import jax.numpy as jnp
from jax.experimental import pallas as pl
from jax.experimental.pallas import tpu as pltpu

NUM_JOINTS = 17
NUM_XYZ = 3
NUM_BONE = 15
DIM = 256
KCS_PAD = 256            # 15*15 = 225 padded to 2 full lane groups
OUT_PAD = 128            # lane-dense output width (validity is column 0)

_BONE_LIST = [
    [1, -1, 0, 0, 0, 0, 0, 0, 0, 0, 0, 0, 0, 0, 0, 0, 0],
    [1, 0, 0, 0, -1, 0, 0, 0, 0, 0, 0, 0, 0, 0, 0, 0, 0],
    [1, 0, 0, 0, 0, 0, 0, -1, 0, 0, 0, 0, 0, 0, 0, 0, 0],
    [0, 1, -1, 0, 0, 0, 0, 0, 0, 0, 0, 0, 0, 0, 0, 0, 0],
    [0, 0, 1, -1, 0, 0, 0, 0, 0, 0, 0, 0, 0, 0, 0, 0, 0],
    [0, 0, 0, 0, 1, -1, 0, 0, 0, 0, 0, 0, 0, 0, 0, 0, 0],
    [0, 0, 0, 0, 0, 1, -1, 0, 0, 0, 0, 0, 0, 0, 0, 0, 0],
    [0, 0, 0, 0, 0, 0, 1, -1, 0, 0, 0, 0, 0, 0, 0, 0, 0],
    [0, 0, 0, 0, 0, 0, 0, 0, 1, -1, 0, 0, 0, 0, 0, 0, 0],
    [0, 0, 0, 0, 0, 0, 0, 0, 1, 0, 0, -1, 0, 0, 0, 0, 0],
    [0, 0, 0, 0, 0, 0, 0, 0, 1, 0, 0, 0, 0, 0, -1, 0, 0],
    [0, 0, 0, 0, 0, 0, 0, 0, 0, 0, 0, 1, -1, 0, 0, 0, 0],
    [0, 0, 0, 0, 0, 0, 0, 0, 0, 0, 0, 0, 1, -1, 0, 0, 0],
    [0, 0, 0, 0, 0, 0, 0, 0, 0, 0, 0, 0, 0, 0, 1, -1, 0],
    [0, 0, 0, 0, 0, 0, 0, 0, 0, 0, 0, 0, 0, 0, 0, 1, -1],
]
_BONE = np.asarray(_BONE_LIST, dtype=np.float64)   # (15, 17)


def _round_up(n, m):
    return ((n + m - 1) // m) * m


def _leaky(v):
    # nn.LeakyReLU(0.2) — the module uses slope 0.2 everywhere.
    return jnp.where(v > 0, v, 0.2 * v)


def _host_split_bf16(w):
    """Host-side bf16 hi/lo split (done once, outside the kernel)."""
    w = jnp.asarray(w, jnp.float32)
    hi = w.astype(jnp.bfloat16)
    lo = (w - hi.astype(jnp.float32)).astype(jnp.bfloat16)
    return hi, lo


def _make_kernel(mxu_passes):
    def _split(a):
        hi = a.astype(jnp.bfloat16)
        lo = (a - hi.astype(jnp.float32)).astype(jnp.bfloat16)
        return hi, lo

    def _mm(p, q):
        return jnp.dot(p, q, preferred_element_type=jnp.float32)

    def _dot_split(a_hi, a_lo, w_hi, w_lo):
        """a @ W with W pre-split into bf16 hi/lo (host-side)."""
        if mxu_passes <= 1:
            return _mm(a_hi, w_hi)
        if mxu_passes == 2:
            return _mm(a_hi, w_hi) + _mm(a_lo, w_hi)
        return _mm(a_hi, w_hi) + (_mm(a_hi, w_lo) + _mm(a_lo, w_hi))

    def _dot(a, w_hi_ref, w_lo_ref):
        a_hi, a_lo = _split(a)
        return _dot_split(a_hi, a_lo, w_hi_ref[...], w_lo_ref[...])

    def _dot_exact(a_hi, a_lo, w_bf16):
        """a @ W with W exact in bf16 (entries 0/+-1): W's lo part is 0."""
        if mxu_passes <= 1:
            return _mm(a_hi, w_bf16)
        return _mm(a_hi, w_bf16) + _mm(a_lo, w_bf16)

    def kernel(
        x_ref, w_ri, w_rm,
        wp1h, wp1l, bp1, wp2h, wp2l, bp2, wp3h, wp3l, bp3,
        wk1h, wk1l, bk1, wk2h, wk2l, bk2, wk3h, wk3l, bk3,
        wf1ph, wf1pl, wf1kh, wf1kl, bf1, wf2h, wf2l, bf2,
        out_ref,
    ):
        x = x_ref[...]                                   # (TM, 51) f32
        x_hi, x_lo = _split(x)                           # split once, reuse

        # ---- pose branch: Linear(51->256) + LeakyReLU + Res_Block ----
        h = _leaky(_dot_split(x_hi, x_lo, wp1h[...], wp1l[...]) + bp1[...])
        r = _dot(_leaky(_dot(h, wp2h, wp2l) + bp2[...]), wp3h, wp3l) + bp3[...]
        pose = _leaky(h + r)

        # ---- KCS bone-gram, accumulated per xyz component ----
        # psi[:, i*15+m] = sum_k (bone@J)[:,i,k] * (bone@J)[:,m,k]
        # Each term is a lane-aligned (TM, 256) block; no (TM,1536) intermediate.
        psi = None
        for k in range(NUM_XYZ):
            a = _dot_exact(x_hi, x_lo, w_ri[:, k * KCS_PAD:(k + 1) * KCS_PAD])
            b = _dot_exact(x_hi, x_lo, w_rm[:, k * KCS_PAD:(k + 1) * KCS_PAD])
            psi = a * b if psi is None else psi + a * b   # (TM, 256); cols 225.. == 0

        h2 = _leaky(_dot(psi, wk1h, wk1l) + bk1[...])
        r2 = _dot(_leaky(_dot(h2, wk2h, wk2l) + bk2[...]), wk3h, wk3l) + bk3[...]
        kcs = _leaky(h2 + r2)

        # ---- final MLP (concat folded into split first-layer weights) ----
        f = _leaky(_dot(pose, wf1ph, wf1pl) + _dot(kcs, wf1kh, wf1kl) + bf1[...])
        out_ref[...] = _dot(f, wf2h, wf2l) + bf2[...]     # (TM, 128); col 0 = validity

    return kernel


def _build_kcs_weights():
    """W_ri, W_rm (51, 768 each): x @ W gives the index-replicated
    (bone@J)-components needed for the gram product.  All entries are exactly
    0 / +-1, so the host-side fold is exact and W is exact in bf16."""
    A = np.zeros((NUM_XYZ, NUM_JOINTS * NUM_XYZ, NUM_BONE), dtype=np.float64)
    for k in range(NUM_XYZ):
        for j in range(NUM_JOINTS):
            A[k, NUM_XYZ * j + k, :] = _BONE[:, j]
    eye = np.eye(NUM_BONE, dtype=np.float64)
    ones = np.ones((1, NUM_BONE), dtype=np.float64)
    ri = np.zeros((NUM_BONE, KCS_PAD), dtype=np.float64)
    rm = np.zeros((NUM_BONE, KCS_PAD), dtype=np.float64)
    ri[:, :NUM_BONE * NUM_BONE] = np.kron(eye, ones)   # Ri[j, i*15+m] = [j == i]
    rm[:, :NUM_BONE * NUM_BONE] = np.kron(ones, eye)   # Rm[j, i*15+m] = [j == m]
    w_ri = np.concatenate([A[k] @ ri for k in range(NUM_XYZ)], axis=1)
    w_rm = np.concatenate([A[k] @ rm for k in range(NUM_XYZ)], axis=1)
    return w_ri.astype(np.float32), w_rm.astype(np.float32)   # (51, 768) each


def init_params(key):
    def lin(k, fan_in, fan_out):
        kw, kb = jax.random.split(k)
        bound = 1.0 / np.sqrt(fan_in)
        w = jax.random.uniform(kw, (fan_in, fan_out), jnp.float32, -bound, bound)
        b = jax.random.uniform(kb, (1, fan_out), jnp.float32, -bound, bound)
        return w, b

    ks = jax.random.split(key, 8)
    p = {}
    p["wp1"], p["bp1"] = lin(ks[0], NUM_JOINTS * NUM_XYZ, DIM)
    p["wp2"], p["bp2"] = lin(ks[1], DIM, DIM)
    p["wp3"], p["bp3"] = lin(ks[2], DIM, DIM)
    p["wk1"], p["bk1"] = lin(ks[3], NUM_BONE * NUM_BONE, DIM)
    p["wk2"], p["bk2"] = lin(ks[4], DIM, DIM)
    p["wk3"], p["bk3"] = lin(ks[5], DIM, DIM)
    p["wf1"], p["bf1"] = lin(ks[6], 2 * DIM, DIM // 2)
    p["wf2"], p["bf2"] = lin(ks[7], DIM // 2, 1)
    return p


def joints_discriminator(joints, params, *, batch_tile=512, mxu_passes=3):
    """mxu_passes: 3 = bf16_3x (~f32 accuracy, default); 2 or 1 = cheaper modes
    (useful on v5e's ~5x slower MXU when discriminator accuracy tolerates it)."""
    B = joints.shape[0]
    n_feat = NUM_JOINTS * NUM_XYZ
    x = joints.reshape(B, n_feat).astype(jnp.float32)

    # Batch tile: big tiles amortize per-step overhead; 16-row rounding for
    # small batches.  For large batches keep >= 2 grid steps so the
    # ("parallel",) axis shards across both v7x TensorCores.
    TM = min(batch_tile, _round_up(B, 16))
    if B > 256 and B <= TM:
        TM = _round_up((B + 1) // 2, 16)
    B_pad = _round_up(B, TM)
    if B_pad != B:
        x = jnp.pad(x, ((0, B_pad - B), (0, 0)))

    # KCS selection weights: exact in bf16, so ship bf16 only (half the DMA).
    w_ri_np, w_rm_np = _build_kcs_weights()
    w_ri = jnp.asarray(w_ri_np).astype(jnp.bfloat16)
    w_rm = jnp.asarray(w_rm_np).astype(jnp.bfloat16)

    # Pad wk1 rows (225 -> 256) to match padded psi; pad the final linear to
    # 128 output lanes so the kernel store is lane-dense.
    wk1_pad = jnp.zeros((KCS_PAD, DIM), jnp.float32).at[
        :NUM_BONE * NUM_BONE, :].set(params["wk1"])
    wf2_pad = jnp.zeros((DIM // 2, OUT_PAD), jnp.float32).at[:, :1].set(params["wf2"])
    bf2_pad = jnp.zeros((1, OUT_PAD), jnp.float32).at[:, :1].set(params["bf2"])

    # Host-side hi/lo splits (removes all per-step weight splitting VALU work).
    sp = _host_split_bf16
    wp1h, wp1l = sp(params["wp1"])
    wp2h, wp2l = sp(params["wp2"])
    wp3h, wp3l = sp(params["wp3"])
    wk1h, wk1l = sp(wk1_pad)
    wk2h, wk2l = sp(params["wk2"])
    wk3h, wk3l = sp(params["wk3"])
    wf1ph, wf1pl = sp(params["wf1"][:DIM, :])
    wf1kh, wf1kl = sp(params["wf1"][DIM:, :])
    wf2h, wf2l = sp(wf2_pad)

    args = (
        x, w_ri, w_rm,
        wp1h, wp1l, params["bp1"], wp2h, wp2l, params["bp2"],
        wp3h, wp3l, params["bp3"],
        wk1h, wk1l, params["bk1"], wk2h, wk2l, params["bk2"],
        wk3h, wk3l, params["bk3"],
        wf1ph, wf1pl, wf1kh, wf1kl, params["bf1"],
        wf2h, wf2l, bf2_pad,
    )

    def _resident(a):
        # Whole-array block + constant index map -> stays VMEM-resident
        # across every grid step (weights total only ~2 MiB).
        return pl.BlockSpec(a.shape, lambda i: (0, 0))

    in_specs = [pl.BlockSpec((TM, n_feat), lambda i: (i, 0))]
    in_specs += [_resident(a) for a in args[1:]]

    out = pl.pallas_call(
        _make_kernel(mxu_passes),
        out_shape=jax.ShapeDtypeStruct((B_pad, OUT_PAD), jnp.float32),
        grid=(B_pad // TM,),
        in_specs=in_specs,
        out_specs=pl.BlockSpec((TM, OUT_PAD), lambda i: (i, 0)),
        compiler_params=pltpu.CompilerParams(
            dimension_semantics=("parallel",),
            vmem_limit_bytes=32 * 1024 * 1024,
        ),
    )(*args)
    return out[:B, :1]


def reference_numpy(joints, params):
    """Float64 numpy reference following the PyTorch forward exactly."""
    def leaky(v):
        return np.where(v > 0, v, 0.2 * v)

    p = {k: np.asarray(v, dtype=np.float64) for k, v in params.items()}
    x = np.asarray(joints, dtype=np.float64).reshape(joints.shape[0], -1)

    pose = leaky(x @ p["wp1"] + p["bp1"])
    pose = leaky(pose + (leaky(pose @ p["wp2"] + p["bp2"]) @ p["wp3"] + p["bp3"]))

    J = x.reshape(-1, NUM_JOINTS, NUM_XYZ)
    Bm = np.einsum("ij,bjk->bik", _BONE, J)
    psi = np.einsum("bik,bmk->bim", Bm, Bm).reshape(x.shape[0], -1)
    kcs = leaky(psi @ p["wk1"] + p["bk1"])
    kcs = leaky(kcs + (leaky(kcs @ p["wk2"] + p["bk2"]) @ p["wk3"] + p["bk3"]))

    cat = np.concatenate([pose, kcs], axis=1)
    f = leaky(cat @ p["wf1"] + p["bf1"])
    return f @ p["wf2"] + p["bf2"]


if __name__ == "__main__":
    key = jax.random.PRNGKey(0)
    k_joints, k_params = jax.random.split(key)

    batch = 8
    joints = jax.random.normal(k_joints, (batch, NUM_JOINTS, NUM_XYZ), jnp.float32)
    params = init_params(k_params)

    out = joints_discriminator(joints, params)
    out = jax.block_until_ready(out)

    ref = reference_numpy(np.asarray(joints), params)
    # bf16_3x matmuls (exact 2-pass for the KCS gram) keep ~f32 accuracy.
    np.testing.assert_allclose(np.asarray(out), ref, rtol=5e-3, atol=5e-3)

    print("KERNEL_OK")
</pallas_src>

<mosaic_0001>
module attributes {stable_mosaic.version = 11 : i64} {
  func.func @kernel(%arg0: i32, %arg1: memref<16x51xf32, #tpu.memory_space<vmem>>, %arg2: memref<51x768xbf16, #tpu.memory_space<vmem>>, %arg3: memref<51x768xbf16, #tpu.memory_space<vmem>>, %arg4: memref<51x256xbf16, #tpu.memory_space<vmem>>, %arg5: memref<51x256xbf16, #tpu.memory_space<vmem>>, %arg6: memref<1x256xf32, #tpu.memory_space<vmem>>, %arg7: memref<256x256xbf16, #tpu.memory_space<vmem>>, %arg8: memref<256x256xbf16, #tpu.memory_space<vmem>>, %arg9: memref<1x256xf32, #tpu.memory_space<vmem>>, %arg10: memref<256x256xbf16, #tpu.memory_space<vmem>>, %arg11: memref<256x256xbf16, #tpu.memory_space<vmem>>, %arg12: memref<1x256xf32, #tpu.memory_space<vmem>>, %arg13: memref<256x256xbf16, #tpu.memory_space<vmem>>, %arg14: memref<256x256xbf16, #tpu.memory_space<vmem>>, %arg15: memref<1x256xf32, #tpu.memory_space<vmem>>, %arg16: memref<256x256xbf16, #tpu.memory_space<vmem>>, %arg17: memref<256x256xbf16, #tpu.memory_space<vmem>>, %arg18: memref<1x256xf32, #tpu.memory_space<vmem>>, %arg19: memref<256x256xbf16, #tpu.memory_space<vmem>>, %arg20: memref<256x256xbf16, #tpu.memory_space<vmem>>, %arg21: memref<1x256xf32, #tpu.memory_space<vmem>>, %arg22: memref<256x128xbf16, #tpu.memory_space<vmem>>, %arg23: memref<256x128xbf16, #tpu.memory_space<vmem>>, %arg24: memref<256x128xbf16, #tpu.memory_space<vmem>>, %arg25: memref<256x128xbf16, #tpu.memory_space<vmem>>, %arg26: memref<1x128xf32, #tpu.memory_space<vmem>>, %arg27: memref<128x128xbf16, #tpu.memory_space<vmem>>, %arg28: memref<128x128xbf16, #tpu.memory_space<vmem>>, %arg29: memref<1x128xf32, #tpu.memory_space<vmem>>, %arg30: memref<16x128xf32, #tpu.memory_space<vmem>>) attributes {dimension_semantics = [#tpu.dimension_semantics<parallel>], iteration_bounds = array<i64: 1>, scalar_prefetch = 0 : i64, scratch_operands = 0 : i64, tpu.core_type = #tpu.core_type<tc>, window_params = [{transform_indices = @transform_0, window_bounds = array<i64: 16, 51>}, {pipeline_mode = #tpu.pipeline_mode<synchronous>, transform_indices = @transform_1, window_bounds = array<i64: 51, 768>}, {pipeline_mode = #tpu.pipeline_mode<synchronous>, transform_indices = @transform_2, window_bounds = array<i64: 51, 768>}, {pipeline_mode = #tpu.pipeline_mode<synchronous>, transform_indices = @transform_3, window_bounds = array<i64: 51, 256>}, {pipeline_mode = #tpu.pipeline_mode<synchronous>, transform_indices = @transform_4, window_bounds = array<i64: 51, 256>}, {pipeline_mode = #tpu.pipeline_mode<synchronous>, transform_indices = @transform_5, window_bounds = array<i64: 1, 256>}, {pipeline_mode = #tpu.pipeline_mode<synchronous>, transform_indices = @transform_6, window_bounds = array<i64: 256, 256>}, {pipeline_mode = #tpu.pipeline_mode<synchronous>, transform_indices = @transform_7, window_bounds = array<i64: 256, 256>}, {pipeline_mode = #tpu.pipeline_mode<synchronous>, transform_indices = @transform_8, window_bounds = array<i64: 1, 256>}, {pipeline_mode = #tpu.pipeline_mode<synchronous>, transform_indices = @transform_9, window_bounds = array<i64: 256, 256>}, {pipeline_mode = #tpu.pipeline_mode<synchronous>, transform_indices = @transform_10, window_bounds = array<i64: 256, 256>}, {pipeline_mode = #tpu.pipeline_mode<synchronous>, transform_indices = @transform_11, window_bounds = array<i64: 1, 256>}, {pipeline_mode = #tpu.pipeline_mode<synchronous>, transform_indices = @transform_12, window_bounds = array<i64: 256, 256>}, {pipeline_mode = #tpu.pipeline_mode<synchronous>, transform_indices = @transform_13, window_bounds = array<i64: 256, 256>}, {pipeline_mode = #tpu.pipeline_mode<synchronous>, transform_indices = @transform_14, window_bounds = array<i64: 1, 256>}, {pipeline_mode = #tpu.pipeline_mode<synchronous>, transform_indices = @transform_15, window_bounds = array<i64: 256, 256>}, {pipeline_mode = #tpu.pipeline_mode<synchronous>, transform_indices = @transform_16, window_bounds = array<i64: 256, 256>}, {pipeline_mode = #tpu.pipeline_mode<synchronous>, transform_indices = @transform_17, window_bounds = array<i64: 1, 256>}, {pipeline_mode = #tpu.pipeline_mode<synchronous>, transform_indices = @transform_18, window_bounds = array<i64: 256, 256>}, {pipeline_mode = #tpu.pipeline_mode<synchronous>, transform_indices = @transform_19, window_bounds = array<i64: 256, 256>}, {pipeline_mode = #tpu.pipeline_mode<synchronous>, transform_indices = @transform_20, window_bounds = array<i64: 1, 256>}, {pipeline_mode = #tpu.pipeline_mode<synchronous>, transform_indices = @transform_21, window_bounds = array<i64: 256, 128>}, {pipeline_mode = #tpu.pipeline_mode<synchronous>, transform_indices = @transform_22, window_bounds = array<i64: 256, 128>}, {pipeline_mode = #tpu.pipeline_mode<synchronous>, transform_indices = @transform_23, window_bounds = array<i64: 256, 128>}, {pipeline_mode = #tpu.pipeline_mode<synchronous>, transform_indices = @transform_24, window_bounds = array<i64: 256, 128>}, {pipeline_mode = #tpu.pipeline_mode<synchronous>, transform_indices = @transform_25, window_bounds = array<i64: 1, 128>}, {pipeline_mode = #tpu.pipeline_mode<synchronous>, transform_indices = @transform_26, window_bounds = array<i64: 128, 128>}, {pipeline_mode = #tpu.pipeline_mode<synchronous>, transform_indices = @transform_27, window_bounds = array<i64: 128, 128>}, {pipeline_mode = #tpu.pipeline_mode<synchronous>, transform_indices = @transform_28, window_bounds = array<i64: 1, 128>}, {transform_indices = @transform_29, window_bounds = array<i64: 16, 128>}]} {
    %c0 = arith.constant 0 : index
    %c0_0 = arith.constant 0 : index
    %0 = vector.load %arg1[%c0, %c0_0] : memref<16x51xf32, #tpu.memory_space<vmem>>, vector<16x51xf32>
    %1 = arith.truncf %0 : vector<16x51xf32> to vector<16x51xbf16>
    %2 = arith.extf %1 : vector<16x51xbf16> to vector<16x51xf32>
    %3 = arith.subf %0, %2 : vector<16x51xf32>
    %4 = arith.truncf %3 : vector<16x51xf32> to vector<16x51xbf16>
    %c0_1 = arith.constant 0 : index
    %c0_2 = arith.constant 0 : index
    %5 = vector.load %arg4[%c0_1, %c0_2] : memref<51x256xbf16, #tpu.memory_space<vmem>>, vector<51x256xbf16>
    %c0_3 = arith.constant 0 : index
    %c0_4 = arith.constant 0 : index
    %6 = vector.load %arg5[%c0_3, %c0_4] : memref<51x256xbf16, #tpu.memory_space<vmem>>, vector<51x256xbf16>
    %cst = arith.constant dense<0.000000e+00> : vector<16x256xf32>
    %7 = tpu.matmul %1, %5, %cst {dimension_numbers = #tpu.dot_dimension_numbers<[1], [0], [0], [1], [0, 0, 1, 1], [], []>} : vector<16x51xbf16>, vector<51x256xbf16>, vector<16x256xf32> -> vector<16x256xf32>
    %cst_5 = arith.constant dense<0.000000e+00> : vector<16x256xf32>
    %8 = tpu.matmul %1, %6, %cst_5 {dimension_numbers = #tpu.dot_dimension_numbers<[1], [0], [0], [1], [0, 0, 1, 1], [], []>} : vector<16x51xbf16>, vector<51x256xbf16>, vector<16x256xf32> -> vector<16x256xf32>
    %cst_6 = arith.constant dense<0.000000e+00> : vector<16x256xf32>
    %9 = tpu.matmul %4, %5, %cst_6 {dimension_numbers = #tpu.dot_dimension_numbers<[1], [0], [0], [1], [0, 0, 1, 1], [], []>} : vector<16x51xbf16>, vector<51x256xbf16>, vector<16x256xf32> -> vector<16x256xf32>
    %10 = arith.addf %8, %9 : vector<16x256xf32>
    %11 = arith.addf %7, %10 : vector<16x256xf32>
    %c0_7 = arith.constant 0 : index
    %c0_8 = arith.constant 0 : index
    %12 = vector.load %arg6[%c0_7, %c0_8] : memref<1x256xf32, #tpu.memory_space<vmem>>, vector<1x256xf32>
    %13 = vector.broadcast %12 : vector<1x256xf32> to vector<16x256xf32>
    %14 = arith.addf %11, %13 : vector<16x256xf32>
    %cst_9 = arith.constant 0.000000e+00 : f32
    %15 = vector.broadcast %cst_9 : f32 to vector<16x256xf32>
    %16 = arith.cmpf ogt, %14, %15 : vector<16x256xf32>
    %cst_10 = arith.constant 2.000000e-01 : f32
    %17 = vector.broadcast %cst_10 : f32 to vector<16x256xf32>
    %18 = arith.mulf %17, %14 : vector<16x256xf32>
    %19 = arith.select %16, %14, %18 : vector<16x256xi1>, vector<16x256xf32>
    %20 = arith.truncf %19 : vector<16x256xf32> to vector<16x256xbf16>
    %21 = arith.extf %20 : vector<16x256xbf16> to vector<16x256xf32>
    %22 = arith.subf %19, %21 : vector<16x256xf32>
    %23 = arith.truncf %22 : vector<16x256xf32> to vector<16x256xbf16>
    %c0_11 = arith.constant 0 : index
    %c0_12 = arith.constant 0 : index
    %24 = vector.load %arg7[%c0_11, %c0_12] : memref<256x256xbf16, #tpu.memory_space<vmem>>, vector<256x256xbf16>
    %c0_13 = arith.constant 0 : index
    %c0_14 = arith.constant 0 : index
    %25 = vector.load %arg8[%c0_13, %c0_14] : memref<256x256xbf16, #tpu.memory_space<vmem>>, vector<256x256xbf16>
    %cst_15 = arith.constant dense<0.000000e+00> : vector<16x256xf32>
    %26 = tpu.matmul %20, %24, %cst_15 {dimension_numbers = #tpu.dot_dimension_numbers<[1], [0], [0], [1], [0, 0, 1, 1], [], []>} : vector<16x256xbf16>, vector<256x256xbf16>, vector<16x256xf32> -> vector<16x256xf32>
    %cst_16 = arith.constant dense<0.000000e+00> : vector<16x256xf32>
    %27 = tpu.matmul %20, %25, %cst_16 {dimension_numbers = #tpu.dot_dimension_numbers<[1], [0], [0], [1], [0, 0, 1, 1], [], []>} : vector<16x256xbf16>, vector<256x256xbf16>, vector<16x256xf32> -> vector<16x256xf32>
    %cst_17 = arith.constant dense<0.000000e+00> : vector<16x256xf32>
    %28 = tpu.matmul %23, %24, %cst_17 {dimension_numbers = #tpu.dot_dimension_numbers<[1], [0], [0], [1], [0, 0, 1, 1], [], []>} : vector<16x256xbf16>, vector<256x256xbf16>, vector<16x256xf32> -> vector<16x256xf32>
    %29 = arith.addf %27, %28 : vector<16x256xf32>
    %30 = arith.addf %26, %29 : vector<16x256xf32>
    %c0_18 = arith.constant 0 : index
    %c0_19 = arith.constant 0 : index
    %31 = vector.load %arg9[%c0_18, %c0_19] : memref<1x256xf32, #tpu.memory_space<vmem>>, vector<1x256xf32>
    %32 = vector.broadcast %31 : vector<1x256xf32> to vector<16x256xf32>
    %33 = arith.addf %30, %32 : vector<16x256xf32>
    %cst_20 = arith.constant 0.000000e+00 : f32
    %34 = vector.broadcast %cst_20 : f32 to vector<16x256xf32>
    %35 = arith.cmpf ogt, %33, %34 : vector<16x256xf32>
    %cst_21 = arith.constant 2.000000e-01 : f32
    %36 = vector.broadcast %cst_21 : f32 to vector<16x256xf32>
    %37 = arith.mulf %36, %33 : vector<16x256xf32>
    %38 = arith.select %35, %33, %37 : vector<16x256xi1>, vector<16x256xf32>
    %39 = arith.truncf %38 : vector<16x256xf32> to vector<16x256xbf16>
    %40 = arith.extf %39 : vector<16x256xbf16> to vector<16x256xf32>
    %41 = arith.subf %38, %40 : vector<16x256xf32>
    %42 = arith.truncf %41 : vector<16x256xf32> to vector<16x256xbf16>
    %c0_22 = arith.constant 0 : index
    %c0_23 = arith.constant 0 : index
    %43 = vector.load %arg10[%c0_22, %c0_23] : memref<256x256xbf16, #tpu.memory_space<vmem>>, vector<256x256xbf16>
    %c0_24 = arith.constant 0 : index
    %c0_25 = arith.constant 0 : index
    %44 = vector.load %arg11[%c0_24, %c0_25] : memref<256x256xbf16, #tpu.memory_space<vmem>>, vector<256x256xbf16>
    %cst_26 = arith.constant dense<0.000000e+00> : vector<16x256xf32>
    %45 = tpu.matmul %39, %43, %cst_26 {dimension_numbers = #tpu.dot_dimension_numbers<[1], [0], [0], [1], [0, 0, 1, 1], [], []>} : vector<16x256xbf16>, vector<256x256xbf16>, vector<16x256xf32> -> vector<16x256xf32>
    %cst_27 = arith.constant dense<0.000000e+00> : vector<16x256xf32>
    %46 = tpu.matmul %39, %44, %cst_27 {dimension_numbers = #tpu.dot_dimension_numbers<[1], [0], [0], [1], [0, 0, 1, 1], [], []>} : vector<16x256xbf16>, vector<256x256xbf16>, vector<16x256xf32> -> vector<16x256xf32>
    %cst_28 = arith.constant dense<0.000000e+00> : vector<16x256xf32>
    %47 = tpu.matmul %42, %43, %cst_28 {dimension_numbers = #tpu.dot_dimension_numbers<[1], [0], [0], [1], [0, 0, 1, 1], [], []>} : vector<16x256xbf16>, vector<256x256xbf16>, vector<16x256xf32> -> vector<16x256xf32>
    %48 = arith.addf %46, %47 : vector<16x256xf32>
    %49 = arith.addf %45, %48 : vector<16x256xf32>
    %c0_29 = arith.constant 0 : index
    %c0_30 = arith.constant 0 : index
    %50 = vector.load %arg12[%c0_29, %c0_30] : memref<1x256xf32, #tpu.memory_space<vmem>>, vector<1x256xf32>
    %51 = vector.broadcast %50 : vector<1x256xf32> to vector<16x256xf32>
    %52 = arith.addf %49, %51 : vector<16x256xf32>
    %53 = arith.addf %19, %52 : vector<16x256xf32>
    %cst_31 = arith.constant 0.000000e+00 : f32
    %54 = vector.broadcast %cst_31 : f32 to vector<16x256xf32>
    %55 = arith.cmpf ogt, %53, %54 : vector<16x256xf32>
    %cst_32 = arith.constant 2.000000e-01 : f32
    %56 = vector.broadcast %cst_32 : f32 to vector<16x256xf32>
    %57 = arith.mulf %56, %53 : vector<16x256xf32>
    %58 = arith.select %55, %53, %57 : vector<16x256xi1>, vector<16x256xf32>
    %c0_33 = arith.constant 0 : index
    %c0_34 = arith.constant 0 : index
    %59 = vector.load %arg2[%c0_33, %c0_34] : memref<51x768xbf16, #tpu.memory_space<vmem>>, vector<51x256xbf16>
    %cst_35 = arith.constant dense<0.000000e+00> : vector<16x256xf32>
    %60 = tpu.matmul %1, %59, %cst_35 {dimension_numbers = #tpu.dot_dimension_numbers<[1], [0], [0], [1], [0, 0, 1, 1], [], []>} : vector<16x51xbf16>, vector<51x256xbf16>, vector<16x256xf32> -> vector<16x256xf32>
    %cst_36 = arith.constant dense<0.000000e+00> : vector<16x256xf32>
    %61 = tpu.matmul %4, %59, %cst_36 {dimension_numbers = #tpu.dot_dimension_numbers<[1], [0], [0], [1], [0, 0, 1, 1], [], []>} : vector<16x51xbf16>, vector<51x256xbf16>, vector<16x256xf32> -> vector<16x256xf32>
    %62 = arith.addf %60, %61 : vector<16x256xf32>
    %c0_37 = arith.constant 0 : index
    %c0_38 = arith.constant 0 : index
    %63 = vector.load %arg3[%c0_37, %c0_38] : memref<51x768xbf16, #tpu.memory_space<vmem>>, vector<51x256xbf16>
    %cst_39 = arith.constant dense<0.000000e+00> : vector<16x256xf32>
    %64 = tpu.matmul %1, %63, %cst_39 {dimension_numbers = #tpu.dot_dimension_numbers<[1], [0], [0], [1], [0, 0, 1, 1], [], []>} : vector<16x51xbf16>, vector<51x256xbf16>, vector<16x256xf32> -> vector<16x256xf32>
    %cst_40 = arith.constant dense<0.000000e+00> : vector<16x256xf32>
    %65 = tpu.matmul %4, %63, %cst_40 {dimension_numbers = #tpu.dot_dimension_numbers<[1], [0], [0], [1], [0, 0, 1, 1], [], []>} : vector<16x51xbf16>, vector<51x256xbf16>, vector<16x256xf32> -> vector<16x256xf32>
    %66 = arith.addf %64, %65 : vector<16x256xf32>
    %67 = arith.mulf %62, %66 : vector<16x256xf32>
    %c0_41 = arith.constant 0 : index
    %c256 = arith.constant 256 : index
    %68 = vector.load %arg2[%c0_41, %c256] : memref<51x768xbf16, #tpu.memory_space<vmem>>, vector<51x256xbf16>
    %cst_42 = arith.constant dense<0.000000e+00> : vector<16x256xf32>
    %69 = tpu.matmul %1, %68, %cst_42 {dimension_numbers = #tpu.dot_dimension_numbers<[1], [0], [0], [1], [0, 0, 1, 1], [], []>} : vector<16x51xbf16>, vector<51x256xbf16>, vector<16x256xf32> -> vector<16x256xf32>
    %cst_43 = arith.constant dense<0.000000e+00> : vector<16x256xf32>
    %70 = tpu.matmul %4, %68, %cst_43 {dimension_numbers = #tpu.dot_dimension_numbers<[1], [0], [0], [1], [0, 0, 1, 1], [], []>} : vector<16x51xbf16>, vector<51x256xbf16>, vector<16x256xf32> -> vector<16x256xf32>
    %71 = arith.addf %69, %70 : vector<16x256xf32>
    %c0_44 = arith.constant 0 : index
    %c256_45 = arith.constant 256 : index
    %72 = vector.load %arg3[%c0_44, %c256_45] : memref<51x768xbf16, #tpu.memory_space<vmem>>, vector<51x256xbf16>
    %cst_46 = arith.constant dense<0.000000e+00> : vector<16x256xf32>
    %73 = tpu.matmul %1, %72, %cst_46 {dimension_numbers = #tpu.dot_dimension_numbers<[1], [0], [0], [1], [0, 0, 1, 1], [], []>} : vector<16x51xbf16>, vector<51x256xbf16>, vector<16x256xf32> -> vector<16x256xf32>
    %cst_47 = arith.constant dense<0.000000e+00> : vector<16x256xf32>
    %74 = tpu.matmul %4, %72, %cst_47 {dimension_numbers = #tpu.dot_dimension_numbers<[1], [0], [0], [1], [0, 0, 1, 1], [], []>} : vector<16x51xbf16>, vector<51x256xbf16>, vector<16x256xf32> -> vector<16x256xf32>
    %75 = arith.addf %73, %74 : vector<16x256xf32>
    %76 = arith.mulf %71, %75 : vector<16x256xf32>
    %77 = arith.addf %67, %76 : vector<16x256xf32>
    %c0_48 = arith.constant 0 : index
    %c512 = arith.constant 512 : index
    %78 = vector.load %arg2[%c0_48, %c512] : memref<51x768xbf16, #tpu.memory_space<vmem>>, vector<51x256xbf16>
    %cst_49 = arith.constant dense<0.000000e+00> : vector<16x256xf32>
    %79 = tpu.matmul %1, %78, %cst_49 {dimension_numbers = #tpu.dot_dimension_numbers<[1], [0], [0], [1], [0, 0, 1, 1], [], []>} : vector<16x51xbf16>, vector<51x256xbf16>, vector<16x256xf32> -> vector<16x256xf32>
    %cst_50 = arith.constant dense<0.000000e+00> : vector<16x256xf32>
    %80 = tpu.matmul %4, %78, %cst_50 {dimension_numbers = #tpu.dot_dimension_numbers<[1], [0], [0], [1], [0, 0, 1, 1], [], []>} : vector<16x51xbf16>, vector<51x256xbf16>, vector<16x256xf32> -> vector<16x256xf32>
    %81 = arith.addf %79, %80 : vector<16x256xf32>
    %c0_51 = arith.constant 0 : index
    %c512_52 = arith.constant 512 : index
    %82 = vector.load %arg3[%c0_51, %c512_52] : memref<51x768xbf16, #tpu.memory_space<vmem>>, vector<51x256xbf16>
    %cst_53 = arith.constant dense<0.000000e+00> : vector<16x256xf32>
    %83 = tpu.matmul %1, %82, %cst_53 {dimension_numbers = #tpu.dot_dimension_numbers<[1], [0], [0], [1], [0, 0, 1, 1], [], []>} : vector<16x51xbf16>, vector<51x256xbf16>, vector<16x256xf32> -> vector<16x256xf32>
    %cst_54 = arith.constant dense<0.000000e+00> : vector<16x256xf32>
    %84 = tpu.matmul %4, %82, %cst_54 {dimension_numbers = #tpu.dot_dimension_numbers<[1], [0], [0], [1], [0, 0, 1, 1], [], []>} : vector<16x51xbf16>, vector<51x256xbf16>, vector<16x256xf32> -> vector<16x256xf32>
    %85 = arith.addf %83, %84 : vector<16x256xf32>
    %86 = arith.mulf %81, %85 : vector<16x256xf32>
    %87 = arith.addf %77, %86 : vector<16x256xf32>
    %88 = arith.truncf %87 : vector<16x256xf32> to vector<16x256xbf16>
    %89 = arith.extf %88 : vector<16x256xbf16> to vector<16x256xf32>
    %90 = arith.subf %87, %89 : vector<16x256xf32>
    %91 = arith.truncf %90 : vector<16x256xf32> to vector<16x256xbf16>
    %c0_55 = arith.constant 0 : index
    %c0_56 = arith.constant 0 : index
    %92 = vector.load %arg13[%c0_55, %c0_56] : memref<256x256xbf16, #tpu.memory_space<vmem>>, vector<256x256xbf16>
    %c0_57 = arith.constant 0 : index
    %c0_58 = arith.constant 0 : index
    %93 = vector.load %arg14[%c0_57, %c0_58] : memref<256x256xbf16, #tpu.memory_space<vmem>>, vector<256x256xbf16>
    %cst_59 = arith.constant dense<0.000000e+00> : vector<16x256xf32>
    %94 = tpu.matmul %88, %92, %cst_59 {dimension_numbers = #tpu.dot_dimension_numbers<[1], [0], [0], [1], [0, 0, 1, 1], [], []>} : vector<16x256xbf16>, vector<256x256xbf16>, vector<16x256xf32> -> vector<16x256xf32>
    %cst_60 = arith.constant dense<0.000000e+00> : vector<16x256xf32>
    %95 = tpu.matmul %88, %93, %cst_60 {dimension_numbers = #tpu.dot_dimension_numbers<[1], [0], [0], [1], [0, 0, 1, 1], [], []>} : vector<16x256xbf16>, vector<256x256xbf16>, vector<16x256xf32> -> vector<16x256xf32>
    %cst_61 = arith.constant dense<0.000000e+00> : vector<16x256xf32>
    %96 = tpu.matmul %91, %92, %cst_61 {dimension_numbers = #tpu.dot_dimension_numbers<[1], [0], [0], [1], [0, 0, 1, 1], [], []>} : vector<16x256xbf16>, vector<256x256xbf16>, vector<16x256xf32> -> vector<16x256xf32>
    %97 = arith.addf %95, %96 : vector<16x256xf32>
    %98 = arith.addf %94, %97 : vector<16x256xf32>
    %c0_62 = arith.constant 0 : index
    %c0_63 = arith.constant 0 : index
    %99 = vector.load %arg15[%c0_62, %c0_63] : memref<1x256xf32, #tpu.memory_space<vmem>>, vector<1x256xf32>
    %100 = vector.broadcast %99 : vector<1x256xf32> to vector<16x256xf32>
    %101 = arith.addf %98, %100 : vector<16x256xf32>
    %cst_64 = arith.constant 0.000000e+00 : f32
    %102 = vector.broadcast %cst_64 : f32 to vector<16x256xf32>
    %103 = arith.cmpf ogt, %101, %102 : vector<16x256xf32>
    %cst_65 = arith.constant 2.000000e-01 : f32
    %104 = vector.broadcast %cst_65 : f32 to vector<16x256xf32>
    %105 = arith.mulf %104, %101 : vector<16x256xf32>
    %106 = arith.select %103, %101, %105 : vector<16x256xi1>, vector<16x256xf32>
    %107 = arith.truncf %106 : vector<16x256xf32> to vector<16x256xbf16>
    %108 = arith.extf %107 : vector<16x256xbf16> to vector<16x256xf32>
    %109 = arith.subf %106, %108 : vector<16x256xf32>
    %110 = arith.truncf %109 : vector<16x256xf32> to vector<16x256xbf16>
    %c0_66 = arith.constant 0 : index
    %c0_67 = arith.constant 0 : index
    %111 = vector.load %arg16[%c0_66, %c0_67] : memref<256x256xbf16, #tpu.memory_space<vmem>>, vector<256x256xbf16>
    %c0_68 = arith.constant 0 : index
    %c0_69 = arith.constant 0 : index
    %112 = vector.load %arg17[%c0_68, %c0_69] : memref<256x256xbf16, #tpu.memory_space<vmem>>, vector<256x256xbf16>
    %cst_70 = arith.constant dense<0.000000e+00> : vector<16x256xf32>
    %113 = tpu.matmul %107, %111, %cst_70 {dimension_numbers = #tpu.dot_dimension_numbers<[1], [0], [0], [1], [0, 0, 1, 1], [], []>} : vector<16x256xbf16>, vector<256x256xbf16>, vector<16x256xf32> -> vector<16x256xf32>
    %cst_71 = arith.constant dense<0.000000e+00> : vector<16x256xf32>
    %114 = tpu.matmul %107, %112, %cst_71 {dimension_numbers = #tpu.dot_dimension_numbers<[1], [0], [0], [1], [0, 0, 1, 1], [], []>} : vector<16x256xbf16>, vector<256x256xbf16>, vector<16x256xf32> -> vector<16x256xf32>
    %cst_72 = arith.constant dense<0.000000e+00> : vector<16x256xf32>
    %115 = tpu.matmul %110, %111, %cst_72 {dimension_numbers = #tpu.dot_dimension_numbers<[1], [0], [0], [1], [0, 0, 1, 1], [], []>} : vector<16x256xbf16>, vector<256x256xbf16>, vector<16x256xf32> -> vector<16x256xf32>
    %116 = arith.addf %114, %115 : vector<16x256xf32>
    %117 = arith.addf %113, %116 : vector<16x256xf32>
    %c0_73 = arith.constant 0 : index
    %c0_74 = arith.constant 0 : index
    %118 = vector.load %arg18[%c0_73, %c0_74] : memref<1x256xf32, #tpu.memory_space<vmem>>, vector<1x256xf32>
    %119 = vector.broadcast %118 : vector<1x256xf32> to vector<16x256xf32>
    %120 = arith.addf %117, %119 : vector<16x256xf32>
    %cst_75 = arith.constant 0.000000e+00 : f32
    %121 = vector.broadcast %cst_75 : f32 to vector<16x256xf32>
    %122 = arith.cmpf ogt, %120, %121 : vector<16x256xf32>
    %cst_76 = arith.constant 2.000000e-01 : f32
    %123 = vector.broadcast %cst_76 : f32 to vector<16x256xf32>
    %124 = arith.mulf %123, %120 : vector<16x256xf32>
    %125 = arith.select %122, %120, %124 : vector<16x256xi1>, vector<16x256xf32>
    %126 = arith.truncf %125 : vector<16x256xf32> to vector<16x256xbf16>
    %127 = arith.extf %126 : vector<16x256xbf16> to vector<16x256xf32>
    %128 = arith.subf %125, %127 : vector<16x256xf32>
    %129 = arith.truncf %128 : vector<16x256xf32> to vector<16x256xbf16>
    %c0_77 = arith.constant 0 : index
    %c0_78 = arith.constant 0 : index
    %130 = vector.load %arg19[%c0_77, %c0_78] : memref<256x256xbf16, #tpu.memory_space<vmem>>, vector<256x256xbf16>
    %c0_79 = arith.constant 0 : index
    %c0_80 = arith.constant 0 : index
    %131 = vector.load %arg20[%c0_79, %c0_80] : memref<256x256xbf16, #tpu.memory_space<vmem>>, vector<256x256xbf16>
    %cst_81 = arith.constant dense<0.000000e+00> : vector<16x256xf32>
    %132 = tpu.matmul %126, %130, %cst_81 {dimension_numbers = #tpu.dot_dimension_numbers<[1], [0], [0], [1], [0, 0, 1, 1], [], []>} : vector<16x256xbf16>, vector<256x256xbf16>, vector<16x256xf32> -> vector<16x256xf32>
    %cst_82 = arith.constant dense<0.000000e+00> : vector<16x256xf32>
    %133 = tpu.matmul %126, %131, %cst_82 {dimension_numbers = #tpu.dot_dimension_numbers<[1], [0], [0], [1], [0, 0, 1, 1], [], []>} : vector<16x256xbf16>, vector<256x256xbf16>, vector<16x256xf32> -> vector<16x256xf32>
    %cst_83 = arith.constant dense<0.000000e+00> : vector<16x256xf32>
    %134 = tpu.matmul %129, %130, %cst_83 {dimension_numbers = #tpu.dot_dimension_numbers<[1], [0], [0], [1], [0, 0, 1, 1], [], []>} : vector<16x256xbf16>, vector<256x256xbf16>, vector<16x256xf32> -> vector<16x256xf32>
    %135 = arith.addf %133, %134 : vector<16x256xf32>
    %136 = arith.addf %132, %135 : vector<16x256xf32>
    %c0_84 = arith.constant 0 : index
    %c0_85 = arith.constant 0 : index
    %137 = vector.load %arg21[%c0_84, %c0_85] : memref<1x256xf32, #tpu.memory_space<vmem>>, vector<1x256xf32>
    %138 = vector.broadcast %137 : vector<1x256xf32> to vector<16x256xf32>
    %139 = arith.addf %136, %138 : vector<16x256xf32>
    %140 = arith.addf %106, %139 : vector<16x256xf32>
    %cst_86 = arith.constant 0.000000e+00 : f32
    %141 = vector.broadcast %cst_86 : f32 to vector<16x256xf32>
    %142 = arith.cmpf ogt, %140, %141 : vector<16x256xf32>
    %cst_87 = arith.constant 2.000000e-01 : f32
    %143 = vector.broadcast %cst_87 : f32 to vector<16x256xf32>
    %144 = arith.mulf %143, %140 : vector<16x256xf32>
    %145 = arith.select %142, %140, %144 : vector<16x256xi1>, vector<16x256xf32>
    %146 = arith.truncf %58 : vector<16x256xf32> to vector<16x256xbf16>
    %147 = arith.extf %146 : vector<16x256xbf16> to vector<16x256xf32>
    %148 = arith.subf %58, %147 : vector<16x256xf32>
    %149 = arith.truncf %148 : vector<16x256xf32> to vector<16x256xbf16>
    %c0_88 = arith.constant 0 : index
    %c0_89 = arith.constant 0 : index
    %150 = vector.load %arg22[%c0_88, %c0_89] : memref<256x128xbf16, #tpu.memory_space<vmem>>, vector<256x128xbf16>
    %c0_90 = arith.constant 0 : index
    %c0_91 = arith.constant 0 : index
    %151 = vector.load %arg23[%c0_90, %c0_91] : memref<256x128xbf16, #tpu.memory_space<vmem>>, vector<256x128xbf16>
    %cst_92 = arith.constant dense<0.000000e+00> : vector<16x128xf32>
    %152 = tpu.matmul %146, %150, %cst_92 {dimension_numbers = #tpu.dot_dimension_numbers<[1], [0], [0], [1], [0, 0, 1, 1], [], []>} : vector<16x256xbf16>, vector<256x128xbf16>, vector<16x128xf32> -> vector<16x128xf32>
    %cst_93 = arith.constant dense<0.000000e+00> : vector<16x128xf32>
    %153 = tpu.matmul %146, %151, %cst_93 {dimension_numbers = #tpu.dot_dimension_numbers<[1], [0], [0], [1], [0, 0, 1, 1], [], []>} : vector<16x256xbf16>, vector<256x128xbf16>, vector<16x128xf32> -> vector<16x128xf32>
    %cst_94 = arith.constant dense<0.000000e+00> : vector<16x128xf32>
    %154 = tpu.matmul %149, %150, %cst_94 {dimension_numbers = #tpu.dot_dimension_numbers<[1], [0], [0], [1], [0, 0, 1, 1], [], []>} : vector<16x256xbf16>, vector<256x128xbf16>, vector<16x128xf32> -> vector<16x128xf32>
    %155 = arith.addf %153, %154 : vector<16x128xf32>
    %156 = arith.addf %152, %155 : vector<16x128xf32>
    %157 = arith.truncf %145 : vector<16x256xf32> to vector<16x256xbf16>
    %158 = arith.extf %157 : vector<16x256xbf16> to vector<16x256xf32>
    %159 = arith.subf %145, %158 : vector<16x256xf32>
    %160 = arith.truncf %159 : vector<16x256xf32> to vector<16x256xbf16>
    %c0_95 = arith.constant 0 : index
    %c0_96 = arith.constant 0 : index
    %161 = vector.load %arg24[%c0_95, %c0_96] : memref<256x128xbf16, #tpu.memory_space<vmem>>, vector<256x128xbf16>
    %c0_97 = arith.constant 0 : index
    %c0_98 = arith.constant 0 : index
    %162 = vector.load %arg25[%c0_97, %c0_98] : memref<256x128xbf16, #tpu.memory_space<vmem>>, vector<256x128xbf16>
    %cst_99 = arith.constant dense<0.000000e+00> : vector<16x128xf32>
    %163 = tpu.matmul %157, %161, %cst_99 {dimension_numbers = #tpu.dot_dimension_numbers<[1], [0], [0], [1], [0, 0, 1, 1], [], []>} : vector<16x256xbf16>, vector<256x128xbf16>, vector<16x128xf32> -> vector<16x128xf32>
    %cst_100 = arith.constant dense<0.000000e+00> : vector<16x128xf32>
    %164 = tpu.matmul %157, %162, %cst_100 {dimension_numbers = #tpu.dot_dimension_numbers<[1], [0], [0], [1], [0, 0, 1, 1], [], []>} : vector<16x256xbf16>, vector<256x128xbf16>, vector<16x128xf32> -> vector<16x128xf32>
    %cst_101 = arith.constant dense<0.000000e+00> : vector<16x128xf32>
    %165 = tpu.matmul %160, %161, %cst_101 {dimension_numbers = #tpu.dot_dimension_numbers<[1], [0], [0], [1], [0, 0, 1, 1], [], []>} : vector<16x256xbf16>, vector<256x128xbf16>, vector<16x128xf32> -> vector<16x128xf32>
    %166 = arith.addf %164, %165 : vector<16x128xf32>
    %167 = arith.addf %163, %166 : vector<16x128xf32>
    %168 = arith.addf %156, %167 : vector<16x128xf32>
    %c0_102 = arith.constant 0 : index
    %c0_103 = arith.constant 0 : index
    %169 = vector.load %arg26[%c0_102, %c0_103] : memref<1x128xf32, #tpu.memory_space<vmem>>, vector<1x128xf32>
    %170 = vector.broadcast %169 : vector<1x128xf32> to vector<16x128xf32>
    %171 = arith.addf %168, %170 : vector<16x128xf32>
    %cst_104 = arith.constant 0.000000e+00 : f32
    %172 = vector.broadcast %cst_104 : f32 to vector<16x128xf32>
    %173 = arith.cmpf ogt, %171, %172 : vector<16x128xf32>
    %cst_105 = arith.constant 2.000000e-01 : f32
    %174 = vector.broadcast %cst_105 : f32 to vector<16x128xf32>
    %175 = arith.mulf %174, %171 : vector<16x128xf32>
    %176 = arith.select %173, %171, %175 : vector<16x128xi1>, vector<16x128xf32>
    %177 = arith.truncf %176 : vector<16x128xf32> to vector<16x128xbf16>
    %178 = arith.extf %177 : vector<16x128xbf16> to vector<16x128xf32>
    %179 = arith.subf %176, %178 : vector<16x128xf32>
    %180 = arith.truncf %179 : vector<16x128xf32> to vector<16x128xbf16>
    %c0_106 = arith.constant 0 : index
    %c0_107 = arith.constant 0 : index
    %181 = vector.load %arg27[%c0_106, %c0_107] : memref<128x128xbf16, #tpu.memory_space<vmem>>, vector<128x128xbf16>
    %c0_108 = arith.constant 0 : index
    %c0_109 = arith.constant 0 : index
    %182 = vector.load %arg28[%c0_108, %c0_109] : memref<128x128xbf16, #tpu.memory_space<vmem>>, vector<128x128xbf16>
    %cst_110 = arith.constant dense<0.000000e+00> : vector<16x128xf32>
    %183 = tpu.matmul %177, %181, %cst_110 {dimension_numbers = #tpu.dot_dimension_numbers<[1], [0], [0], [1], [0, 0, 1, 1], [], []>} : vector<16x128xbf16>, vector<128x128xbf16>, vector<16x128xf32> -> vector<16x128xf32>
    %cst_111 = arith.constant dense<0.000000e+00> : vector<16x128xf32>
    %184 = tpu.matmul %177, %182, %cst_111 {dimension_numbers = #tpu.dot_dimension_numbers<[1], [0], [0], [1], [0, 0, 1, 1], [], []>} : vector<16x128xbf16>, vector<128x128xbf16>, vector<16x128xf32> -> vector<16x128xf32>
    %cst_112 = arith.constant dense<0.000000e+00> : vector<16x128xf32>
    %185 = tpu.matmul %180, %181, %cst_112 {dimension_numbers = #tpu.dot_dimension_numbers<[1], [0], [0], [1], [0, 0, 1, 1], [], []>} : vector<16x128xbf16>, vector<128x128xbf16>, vector<16x128xf32> -> vector<16x128xf32>
    %186 = arith.addf %184, %185 : vector<16x128xf32>
    %187 = arith.addf %183, %186 : vector<16x128xf32>
    %c0_113 = arith.constant 0 : index
    %c0_114 = arith.constant 0 : index
    %188 = vector.load %arg29[%c0_113, %c0_114] : memref<1x128xf32, #tpu.memory_space<vmem>>, vector<1x128xf32>
    %189 = vector.broadcast %188 : vector<1x128xf32> to vector<16x128xf32>
    %190 = arith.addf %187, %189 : vector<16x128xf32>
    %c0_115 = arith.constant 0 : index
    %c0_116 = arith.constant 0 : index
    %191 = vector.load %arg30[%c0_115, %c0_116] : memref<16x128xf32, #tpu.memory_space<vmem>>, vector<16x128xf32>
    tpu.vector_store %arg30[%c0_115, %c0_116], %190 {strides = array<i32>} : memref<16x128xf32, #tpu.memory_space<vmem>>, vector<16x128xf32>,
    return
  }
  func.func @transform_0(%arg0: i32) -> (i32, i32) {
    %c0_i32 = arith.constant 0 : i32
    %c0_i32_0 = arith.constant 0 : i32
    return %arg0, %c0_i32 : i32, i32
  }
  func.func @transform_1(%arg0: i32) -> (i32, i32) {
    %c0_i32 = arith.constant 0 : i32
    %c0_i32_0 = arith.constant 0 : i32
    %c0_i32_1 = arith.constant 0 : i32
    return %c0_i32, %c0_i32_0 : i32, i32
  }
  func.func @transform_2(%arg0: i32) -> (i32, i32) {
    %c0_i32 = arith.constant 0 : i32
    %c0_i32_0 = arith.constant 0 : i32
    %c0_i32_1 = arith.constant 0 : i32
    return %c0_i32, %c0_i32_0 : i32, i32
  }
  func.func @transform_3(%arg0: i32) -> (i32, i32) {
    %c0_i32 = arith.constant 0 : i32
    %c0_i32_0 = arith.constant 0 : i32
    %c0_i32_1 = arith.constant 0 : i32
    return %c0_i32, %c0_i32_0 : i32, i32
  }
  func.func @transform_4(%arg0: i32) -> (i32, i32) {
    %c0_i32 = arith.constant 0 : i32
    %c0_i32_0 = arith.constant 0 : i32
    %c0_i32_1 = arith.constant 0 : i32
    return %c0_i32, %c0_i32_0 : i32, i32
  }
  func.func @transform_5(%arg0: i32) -> (i32, i32) {
    %c0_i32 = arith.constant 0 : i32
    %c0_i32_0 = arith.constant 0 : i32
    %c0_i32_1 = arith.constant 0 : i32
    return %c0_i32, %c0_i32_0 : i32, i32
  }
  func.func @transform_6(%arg0: i32) -> (i32, i32) {
    %c0_i32 = arith.constant 0 : i32
    %c0_i32_0 = arith.constant 0 : i32
    %c0_i32_1 = arith.constant 0 : i32
    return %c0_i32, %c0_i32_0 : i32, i32
  }
  func.func @transform_7(%arg0: i32) -> (i32, i32) {
    %c0_i32 = arith.constant 0 : i32
    %c0_i32_0 = arith.constant 0 : i32
    %c0_i32_1 = arith.constant 0 : i32
    return %c0_i32, %c0_i32_0 : i32, i32
  }
  func.func @transform_8(%arg0: i32) -> (i32, i32) {
    %c0_i32 = arith.constant 0 : i32
    %c0_i32_0 = arith.constant 0 : i32
    %c0_i32_1 = arith.constant 0 : i32
    return %c0_i32, %c0_i32_0 : i32, i32
  }
  func.func @transform_9(%arg0: i32) -> (i32, i32) {
    %c0_i32 = arith.constant 0 : i32
    %c0_i32_0 = arith.constant 0 : i32
    %c0_i32_1 = arith.constant 0 : i32
    return %c0_i32, %c0_i32_0 : i32, i32
  }
  func.func @transform_10(%arg0: i32) -> (i32, i32) {
    %c0_i32 = arith.constant 0 : i32
    %c0_i32_0 = arith.constant 0 : i32
    %c0_i32_1 = arith.constant 0 : i32
    return %c0_i32, %c0_i32_0 : i32, i32
  }
  func.func @transform_11(%arg0: i32) -> (i32, i32) {
    %c0_i32 = arith.constant 0 : i32
    %c0_i32_0 = arith.constant 0 : i32
    %c0_i32_1 = arith.constant 0 : i32
    return %c0_i32, %c0_i32_0 : i32, i32
  }
  func.func @transform_12(%arg0: i32) -> (i32, i32) {
    %c0_i32 = arith.constant 0 : i32
    %c0_i32_0 = arith.constant 0 : i32
    %c0_i32_1 = arith.constant 0 : i32
    return %c0_i32, %c0_i32_0 : i32, i32
  }
  func.func @transform_13(%arg0: i32) -> (i32, i32) {
    %c0_i32 = arith.constant 0 : i32
    %c0_i32_0 = arith.constant 0 : i32
    %c0_i32_1 = arith.constant 0 : i32
    return %c0_i32, %c0_i32_0 : i32, i32
  }
  func.func @transform_14(%arg0: i32) -> (i32, i32) {
    %c0_i32 = arith.constant 0 : i32
    %c0_i32_0 = arith.constant 0 : i32
    %c0_i32_1 = arith.constant 0 : i32
    return %c0_i32, %c0_i32_0 : i32, i32
  }
  func.func @transform_15(%arg0: i32) -> (i32, i32) {
    %c0_i32 = arith.constant 0 : i32
    %c0_i32_0 = arith.constant 0 : i32
    %c0_i32_1 = arith.constant 0 : i32
    return %c0_i32, %c0_i32_0 : i32, i32
  }
  func.func @transform_16(%arg0: i32) -> (i32, i32) {
    %c0_i32 = arith.constant 0 : i32
    %c0_i32_0 = arith.constant 0 : i32
    %c0_i32_1 = arith.constant 0 : i32
    return %c0_i32, %c0_i32_0 : i32, i32
  }
  func.func @transform_17(%arg0: i32) -> (i32, i32) {
    %c0_i32 = arith.constant 0 : i32
    %c0_i32_0 = arith.constant 0 : i32
    %c0_i32_1 = arith.constant 0 : i32
    return %c0_i32, %c0_i32_0 : i32, i32
  }
  func.func @transform_18(%arg0: i32) -> (i32, i32) {
    %c0_i32 = arith.constant 0 : i32
    %c0_i32_0 = arith.constant 0 : i32
    %c0_i32_1 = arith.constant 0 : i32
    return %c0_i32, %c0_i32_0 : i32, i32
  }
  func.func @transform_19(%arg0: i32) -> (i32, i32) {
    %c0_i32 = arith.constant 0 : i32
    %c0_i32_0 = arith.constant 0 : i32
    %c0_i32_1 = arith.constant 0 : i32
    return %c0_i32, %c0_i32_0 : i32, i32
  }
  func.func @transform_20(%arg0: i32) -> (i32, i32) {
    %c0_i32 = arith.constant 0 : i32
    %c0_i32_0 = arith.constant 0 : i32
    %c0_i32_1 = arith.constant 0 : i32
    return %c0_i32, %c0_i32_0 : i32, i32
  }
  func.func @transform_21(%arg0: i32) -> (i32, i32) {
    %c0_i32 = arith.constant 0 : i32
    %c0_i32_0 = arith.constant 0 : i32
    %c0_i32_1 = arith.constant 0 : i32
    return %c0_i32, %c0_i32_0 : i32, i32
  }
  func.func @transform_22(%arg0: i32) -> (i32, i32) {
    %c0_i32 = arith.constant 0 : i32
    %c0_i32_0 = arith.constant 0 : i32
    %c0_i32_1 = arith.constant 0 : i32
    return %c0_i32, %c0_i32_0 : i32, i32
  }
  func.func @transform_23(%arg0: i32) -> (i32, i32) {
    %c0_i32 = arith.constant 0 : i32
    %c0_i32_0 = arith.constant 0 : i32
    %c0_i32_1 = arith.constant 0 : i32
    return %c0_i32, %c0_i32_0 : i32, i32
  }
  func.func @transform_24(%arg0: i32) -> (i32, i32) {
    %c0_i32 = arith.constant 0 : i32
    %c0_i32_0 = arith.constant 0 : i32
    %c0_i32_1 = arith.constant 0 : i32
    return %c0_i32, %c0_i32_0 : i32, i32
  }
  func.func @transform_25(%arg0: i32) -> (i32, i32) {
    %c0_i32 = arith.constant 0 : i32
    %c0_i32_0 = arith.constant 0 : i32
    %c0_i32_1 = arith.constant 0 : i32
    return %c0_i32, %c0_i32_0 : i32, i32
  }
  func.func @transform_26(%arg0: i32) -> (i32, i32) {
    %c0_i32 = arith.constant 0 : i32
    %c0_i32_0 = arith.constant 0 : i32
    %c0_i32_1 = arith.constant 0 : i32
    return %c0_i32, %c0_i32_0 : i32, i32
  }
  func.func @transform_27(%arg0: i32) -> (i32, i32) {
    %c0_i32 = arith.constant 0 : i32
    %c0_i32_0 = arith.constant 0 : i32
    %c0_i32_1 = arith.constant 0 : i32
    return %c0_i32, %c0_i32_0 : i32, i32
  }
  func.func @transform_28(%arg0: i32) -> (i32, i32) {
    %c0_i32 = arith.constant 0 : i32
    %c0_i32_0 = arith.constant 0 : i32
    %c0_i32_1 = arith.constant 0 : i32
    return %c0_i32, %c0_i32_0 : i32, i32
  }
  func.func @transform_29(%arg0: i32) -> (i32, i32) {
    %c0_i32 = arith.constant 0 : i32
    %c0_i32_0 = arith.constant 0 : i32
    return %arg0, %c0_i32 : i32, i32
  }
}

</mosaic_0001>

<llo_original>
// kernel: tpu_custom_call.1
$region0: #{tpu_custom_call.1}
  #allocation0 [shape = 'u32[]', space=smem, size = 0x4, offset = 0x4, fixed_abs, tag = 'smem constant byte address 0x4 - core index']
  #allocation1 [shape = 'u32[144,128]{1,0:T(1,128)}', space=vmem, size = 0x12000, scoped, tag = 'internal scratch']
  %s0 = inlined_call_operand.smem [shape: u32[30], index: -1, kind: input, shape index: {}]
  %s1 = sld [smem:[%s0]]
  %s2 = scalar_lea.smem %s0, 1
  %s3 = sld [smem:[%s2]]
  %s4 = scalar_lea.smem %s0, 2
  %s5 = sld [smem:[%s4]]
  %s6 = scalar_lea.smem %s0, 3
  %s7 = sld [smem:[%s6]]
  %s8 = scalar_lea.smem %s0, 4
  %s9 = sld [smem:[%s8]]
  %s10 = scalar_lea.smem %s0, 5
  %s11 = sld [smem:[%s10]]
  %s12 = scalar_lea.smem %s0, 6
  %s13 = sld [smem:[%s12]]
  %s14 = scalar_lea.smem %s0, 7
  %s15 = sld [smem:[%s14]]
  %s16 = scalar_lea.smem %s0, 8
  %s17 = sld [smem:[%s16]]
  %s18 = scalar_lea.smem %s0, 9
  %s19 = sld [smem:[%s18]]
  %s20 = scalar_lea.smem %s0, 10
  %s21 = sld [smem:[%s20]]
  %s22 = scalar_lea.smem %s0, 11
  %s23 = sld [smem:[%s22]]
  %s24 = scalar_lea.smem %s0, 12
  %s25 = sld [smem:[%s24]]
  %s26 = scalar_lea.smem %s0, 13
  %s27 = sld [smem:[%s26]]
  %s28 = scalar_lea.smem %s0, 14
  %s29 = sld [smem:[%s28]]
  %s30 = scalar_lea.smem %s0, 15
  %s31 = sld [smem:[%s30]]
  %s32 = scalar_lea.smem %s0, 16
  %s33 = sld [smem:[%s32]]
  %s34 = scalar_lea.smem %s0, 17
  %s35 = sld [smem:[%s34]]
  %s36 = scalar_lea.smem %s0, 18
  %s37 = sld [smem:[%s36]]
  %s38 = scalar_lea.smem %s0, 19
  %s39 = sld [smem:[%s38]]
  %s40 = scalar_lea.smem %s0, 20
  %s41 = sld [smem:[%s40]]
  %s42 = scalar_lea.smem %s0, 21
  %s43 = sld [smem:[%s42]]
  %s44 = scalar_lea.smem %s0, 22
  %s45 = sld [smem:[%s44]]
  %s46 = scalar_lea.smem %s0, 23
  %s47 = sld [smem:[%s46]]
  %s48 = scalar_lea.smem %s0, 24
  %s49 = sld [smem:[%s48]]
  %s50 = scalar_lea.smem %s0, 25
  %s51 = sld [smem:[%s50]]
  %s52 = scalar_lea.smem %s0, 26
  %s53 = sld [smem:[%s52]]
  %s54 = scalar_lea.smem %s0, 27
  %s55 = sld [smem:[%s54]]
  %s56 = scalar_lea.smem %s0, 28
  %s57 = sld [smem:[%s56]]
  %s58 = scalar_lea.smem %s0, 29
  %s59 = sld [smem:[%s58]]
  %s60 = sld [smem:[#allocation0]]
  $region206: #{tpu_custom_call.1} parent=0
    _
  %s62 = ssub.s32 1, %s60
  %s63 = scalar_select 0, %s62, %s60
  $region1: #{tpu_custom_call.1} parent=0
    #allocation2 [shape = 'u8[8192]{0}', space=vmem, size = 0x2000, scoped, tag = 'input window, operand 0, single buffered']
    #allocation3 [shape = 's32[1]{0}', space=sflag, size = 0x4, scoped, tag = 'scoped memory for tpu_custom_call.1']
    #allocation4 [shape = 's32[1]{0}', space=sflag, size = 0x4, scoped, tag = 'scoped memory for tpu_custom_call.1']
    #allocation5 [shape = 'u8[86016]{0}', space=vmem, size = 0x15000, scoped, tag = 'input window, operand 1, single buffered']
    #allocation6 [shape = 's32[1]{0}', space=sflag, size = 0x4, scoped, tag = 'scoped memory for tpu_custom_call.1']
    #allocation7 [shape = 'u8[86016]{0}', space=vmem, size = 0x15000, scoped, tag = 'input window, operand 2, single buffered']
    #allocation8 [shape = 'u8[28672]{0}', space=vmem, size = 0x7000, scoped, tag = 'input window, operand 3, single buffered']
    #allocation9 [shape = 's32[1]{0}', space=sflag, size = 0x4, scoped, tag = 'scoped memory for tpu_custom_call.1']
    #allocation10 [shape = 'u8[28672]{0}', space=vmem, size = 0x7000, scoped, tag = 'input window, operand 4, single buffered']
    #allocation11 [shape = 'u8[131072]{0}', space=vmem, size = 0x20000, scoped, tag = 'input window, operand 6, single buffered']
    #allocation12 [shape = 's32[1]{0}', space=sflag, size = 0x4, scoped, tag = 'scoped memory for tpu_custom_call.1']
    #allocation13 [shape = 'u8[131072]{0}', space=vmem, size = 0x20000, scoped, tag = 'input window, operand 7, single buffered']
    #allocation14 [shape = 'u8[131072]{0}', space=vmem, size = 0x20000, scoped, tag = 'input window, operand 9, single buffered']
    #allocation15 [shape = 's32[1]{0}', space=sflag, size = 0x4, scoped, tag = 'scoped memory for tpu_custom_call.1']
    #allocation16 [shape = 'u8[131072]{0}', space=vmem, size = 0x20000, scoped, tag = 'input window, operand 10, single buffered']
    #allocation17 [shape = 'u8[131072]{0}', space=vmem, size = 0x20000, scoped, tag = 'input window, operand 12, single buffered']
    #allocation18 [shape = 's32[1]{0}', space=sflag, size = 0x4, scoped, tag = 'scoped memory for tpu_custom_call.1']
    #allocation19 [shape = 'u8[131072]{0}', space=vmem, size = 0x20000, scoped, tag = 'input window, operand 13, single buffered']
    #allocation20 [shape = 'u8[131072]{0}', space=vmem, size = 0x20000, scoped, tag = 'input window, operand 15, single buffered']
    #allocation21 [shape = 's32[1]{0}', space=sflag, size = 0x4, scoped, tag = 'scoped memory for tpu_custom_call.1']
    #allocation22 [shape = 'u8[131072]{0}', space=vmem, size = 0x20000, scoped, tag = 'input window, operand 16, single buffered']
    #allocation23 [shape = 'u8[131072]{0}', space=vmem, size = 0x20000, scoped, tag = 'input window, operand 18, single buffered']
    #allocation24 [shape = 's32[1]{0}', space=sflag, size = 0x4, scoped, tag = 'scoped memory for tpu_custom_call.1']
    #allocation25 [shape = 'u8[131072]{0}', space=vmem, size = 0x20000, scoped, tag = 'input window, operand 19, single buffered']
    #allocation26 [shape = 'u8[65536]{0}', space=vmem, size = 0x10000, scoped, tag = 'input window, operand 21, single buffered']
    #allocation27 [shape = 's32[1]{0}', space=sflag, size = 0x4, scoped, tag = 'scoped memory for tpu_custom_call.1']
    #allocation28 [shape = 'u8[65536]{0}', space=vmem, size = 0x10000, scoped, tag = 'input window, operand 22, single buffered']
    #allocation29 [shape = 'u8[65536]{0}', space=vmem, size = 0x10000, scoped, tag = 'input window, operand 23, single buffered']
    #allocation30 [shape = 's32[1]{0}', space=sflag, size = 0x4, scoped, tag = 'scoped memory for tpu_custom_call.1']
    #allocation31 [shape = 'u8[65536]{0}', space=vmem, size = 0x10000, scoped, tag = 'input window, operand 24, single buffered']
    #allocation32 [shape = 'u8[32768]{0}', space=vmem, size = 0x8000, scoped, tag = 'input window, operand 27, single buffered']
    #allocation33 [shape = 's32[1]{0}', space=sflag, size = 0x4, scoped, tag = 'scoped memory for tpu_custom_call.1']
    #allocation34 [shape = 'u8[8192]{0}', space=vmem, size = 0x2000, scoped, tag = 'output window, operand 0, single buffered']
    %64 = vsyncpa [#allocation3], 0
    %65 = vsyncpa [#allocation6], 0
    %66 = vsyncpa [#allocation9], 0
    %67 = vsyncpa [#allocation12], 0
    %68 = vsyncpa [#allocation15], 0
    %69 = vsyncpa [#allocation18], 0
    %70 = vsyncpa [#allocation21], 0
    %71 = vsyncpa [#allocation24], 0
    %72 = vsyncpa [#allocation27], 0
    %73 = vsyncpa [#allocation30], 0
    %74 = vsyncpa [#allocation33], 0
    %75 = vsyncpa [#allocation4], 0
    // Predicated region
    $region2: #{tpu_custom_call.1} parent=1 // pred_check
      _
    $region3: #{tpu_custom_call.1} parent=1 // pred_check_branch
      %77 = sbr.rel (0) target = $region5
    $region4: #{tpu_custom_call.1} parent=1 // pred_region
      %s79 = ssub.s32 256, 256
      %80 = vsyncadd [#allocation3], %s79
      %s81 = sshll.u32 [#allocation2], 4
      %s82 = int_to_ptr.vmem [resolvable:$true] %s81
      %87 = dma.hbm_to_vmem [thread:$0]  %s1, 256, %s82, [#allocation3], 128, 128, 8
    $region5: #{tpu_custom_call.1} parent=1 // pred_fallthru
      _
    // Predicated region
    $region6: #{tpu_custom_call.1} parent=1 // pred_check
      _
    $region7: #{tpu_custom_call.1} parent=1 // pred_check_branch
      %89 = sbr.rel (0) target = $region9
    $region8: #{tpu_custom_call.1} parent=1 // pred_region
      %s91 = ssub.s32 2688, 2688
      %92 = vsyncadd [#allocation6], %s91
      %s93 = sshll.u32 [#allocation5], 4
      %s94 = int_to_ptr.vmem [resolvable:$true] %s93
      %99 = dma.hbm_to_vmem [thread:$0]  %s3, 2688, %s94, [#allocation6], 384, 384, 24
    $region9: #{tpu_custom_call.1} parent=1 // pred_fallthru
      _
    // Predicated region
    $region10: #{tpu_custom_call.1} parent=1 // pred_check
      _
    $region11: #{tpu_custom_call.1} parent=1 // pred_check_branch
      %101 = sbr.rel (0) target = $region13
    $region12: #{tpu_custom_call.1} parent=1 // pred_region
      %s103 = ssub.s32 2688, 2688
      %104 = vsyncadd [#allocation6], %s103
      %s105 = sshll.u32 [#allocation7], 4
      %s106 = int_to_ptr.vmem [resolvable:$true] %s105
      %111 = dma.hbm_to_vmem [thread:$0]  %s5, 2688, %s106, [#allocation6], 384, 384, 24
    $region13: #{tpu_custom_call.1} parent=1 // pred_fallthru
      _
    // Predicated region
    $region14: #{tpu_custom_call.1} parent=1 // pred_check
      _
    $region15: #{tpu_custom_call.1} parent=1 // pred_check_branch
      %113 = sbr.rel (0) target = $region17
    $region16: #{tpu_custom_call.1} parent=1 // pred_region
      %s115 = ssub.s32 896, 896
      %116 = vsyncadd [#allocation9], %s115
      %s117 = sshll.u32 [#allocation8], 4
      %s118 = int_to_ptr.vmem [resolvable:$true] %s117
      %123 = dma.hbm_to_vmem [thread:$0]  %s7, 896, %s118, [#allocation9], 128, 128, 8
    $region17: #{tpu_custom_call.1} parent=1 // pred_fallthru
      _
    // Predicated region
    $region18: #{tpu_custom_call.1} parent=1 // pred_check
      _
    $region19: #{tpu_custom_call.1} parent=1 // pred_check_branch
      %125 = sbr.rel (0) target = $region21
    $region20: #{tpu_custom_call.1} parent=1 // pred_region
      %s127 = ssub.s32 896, 896
      %128 = vsyncadd [#allocation9], %s127
      %s129 = sshll.u32 [#allocation10], 4
      %s130 = int_to_ptr.vmem [resolvable:$true] %s129
      %135 = dma.hbm_to_vmem [thread:$0]  %s9, 896, %s130, [#allocation9], 128, 128, 8
    $region21: #{tpu_custom_call.1} parent=1 // pred_fallthru
      _
    // Predicated region
    $region22: #{tpu_custom_call.1} parent=1 // pred_check
      _
    $region23: #{tpu_custom_call.1} parent=1 // pred_check_branch
      %137 = sbr.rel (0) target = $region25
    $region24: #{tpu_custom_call.1} parent=1 // pred_region
      _
    $region25: #{tpu_custom_call.1} parent=1 // pred_fallthru
      _
    // Predicated region
    $region26: #{tpu_custom_call.1} parent=1 // pred_check
      _
    $region27: #{tpu_custom_call.1} parent=1 // pred_check_branch
      %139 = sbr.rel (0) target = $region29
    $region28: #{tpu_custom_call.1} parent=1 // pred_region
      %s141 = ssub.s32 4096, 4096
      %142 = vsyncadd [#allocation12], %s141
      %s143 = sshll.u32 [#allocation11], 4
      %s144 = int_to_ptr.vmem [resolvable:$true] %s143
      %149 = dma.hbm_to_vmem [thread:$0]  %s13, 4096, %s144, [#allocation12], 128, 128, 8
    $region29: #{tpu_custom_call.1} parent=1 // pred_fallthru
      _
    // Predicated region
    $region30: #{tpu_custom_call.1} parent=1 // pred_check
      _
    $region31: #{tpu_custom_call.1} parent=1 // pred_check_branch
      %151 = sbr.rel (0) target = $region33
    $region32: #{tpu_custom_call.1} parent=1 // pred_region
      %s153 = ssub.s32 4096, 4096
      %154 = vsyncadd [#allocation12], %s153
      %s155 = sshll.u32 [#allocation13], 4
      %s156 = int_to_ptr.vmem [resolvable:$true] %s155
      %161 = dma.hbm_to_vmem [thread:$0]  %s15, 4096, %s156, [#allocation12], 128, 128, 8
    $region33: #{tpu_custom_call.1} parent=1 // pred_fallthru
      _
    // Predicated region
    $region34: #{tpu_custom_call.1} parent=1 // pred_check
      _
    $region35: #{tpu_custom_call.1} parent=1 // pred_check_branch
      %163 = sbr.rel (0) target = $region37
    $region36: #{tpu_custom_call.1} parent=1 // pred_region
      _
    $region37: #{tpu_custom_call.1} parent=1 // pred_fallthru
      _
    // Predicated region
    $region38: #{tpu_custom_call.1} parent=1 // pred_check
      _
    $region39: #{tpu_custom_call.1} parent=1 // pred_check_branch
      %165 = sbr.rel (0) target = $region41
    $region40: #{tpu_custom_call.1} parent=1 // pred_region
      %s167 = ssub.s32 4096, 4096
      %168 = vsyncadd [#allocation15], %s167
      %s169 = sshll.u32 [#allocation14], 4
      %s170 = int_to_ptr.vmem [resolvable:$true] %s169
      %175 = dma.hbm_to_vmem [thread:$0]  %s19, 4096, %s170, [#allocation15], 128, 128, 8
    $region41: #{tpu_custom_call.1} parent=1 // pred_fallthru
      _
    // Predicated region
    $region42: #{tpu_custom_call.1} parent=1 // pred_check
      _
    $region43: #{tpu_custom_call.1} parent=1 // pred_check_branch
      %177 = sbr.rel (0) target = $region45
    $region44: #{tpu_custom_call.1} parent=1 // pred_region
      %s179 = ssub.s32 4096, 4096
      %180 = vsyncadd [#allocation15], %s179
      %s181 = sshll.u32 [#allocation16], 4
      %s182 = int_to_ptr.vmem [resolvable:$true] %s181
      %187 = dma.hbm_to_vmem [thread:$0]  %s21, 4096, %s182, [#allocation15], 128, 128, 8
    $region45: #{tpu_custom_call.1} parent=1 // pred_fallthru
      _
    // Predicated region
    $region46: #{tpu_custom_call.1} parent=1 // pred_check
      _
    $region47: #{tpu_custom_call.1} parent=1 // pred_check_branch
      %189 = sbr.rel (0) target = $region49
    $region48: #{tpu_custom_call.1} parent=1 // pred_region
      _
    $region49: #{tpu_custom_call.1} parent=1 // pred_fallthru
      _
    // Predicated region
    $region50: #{tpu_custom_call.1} parent=1 // pred_check
      _
    $region51: #{tpu_custom_call.1} parent=1 // pred_check_branch
      %191 = sbr.rel (0) target = $region53
    $region52: #{tpu_custom_call.1} parent=1 // pred_region
      %s193 = ssub.s32 4096, 4096
      %194 = vsyncadd [#allocation18], %s193
      %s195 = sshll.u32 [#allocation17], 4
      %s196 = int_to_ptr.vmem [resolvable:$true] %s195
      %201 = dma.hbm_to_vmem [thread:$0]  %s25, 4096, %s196, [#allocation18], 128, 128, 8
    $region53: #{tpu_custom_call.1} parent=1 // pred_fallthru
      _
    // Predicated region
    $region54: #{tpu_custom_call.1} parent=1 // pred_check
      _
    $region55: #{tpu_custom_call.1} parent=1 // pred_check_branch
      %203 = sbr.rel (0) target = $region57
    $region56: #{tpu_custom_call.1} parent=1 // pred_region
      %s205 = ssub.s32 4096, 4096
      %206 = vsyncadd [#allocation18], %s205
      %s207 = sshll.u32 [#allocation19], 4
      %s208 = int_to_ptr.vmem [resolvable:$true] %s207
      %213 = dma.hbm_to_vmem [thread:$0]  %s27, 4096, %s208, [#allocation18], 128, 128, 8
    $region57: #{tpu_custom_call.1} parent=1 // pred_fallthru
      _
    // Predicated region
    $region58: #{tpu_custom_call.1} parent=1 // pred_check
      _
    $region59: #{tpu_custom_call.1} parent=1 // pred_check_branch
      %215 = sbr.rel (0) target = $region61
    $region60: #{tpu_custom_call.1} parent=1 // pred_region
      _
    $region61: #{tpu_custom_call.1} parent=1 // pred_fallthru
      _
    // Predicated region
    $region62: #{tpu_custom_call.1} parent=1 // pred_check
      _
    $region63: #{tpu_custom_call.1} parent=1 // pred_check_branch
      %217 = sbr.rel (0) target = $region65
    $region64: #{tpu_custom_call.1} parent=1 // pred_region
      %s219 = ssub.s32 4096, 4096
      %220 = vsyncadd [#allocation21], %s219
      %s221 = sshll.u32 [#allocation20], 4
      %s222 = int_to_ptr.vmem [resolvable:$true] %s221
      %227 = dma.hbm_to_vmem [thread:$0]  %s31, 4096, %s222, [#allocation21], 128, 128, 8
    $region65: #{tpu_custom_call.1} parent=1 // pred_fallthru
      _
    // Predicated region
    $region66: #{tpu_custom_call.1} parent=1 // pred_check
      _
    $region67: #{tpu_custom_call.1} parent=1 // pred_check_branch
      %229 = sbr.rel (0) target = $region69
    $region68: #{tpu_custom_call.1} parent=1 // pred_region
      %s231 = ssub.s32 4096, 4096
      %232 = vsyncadd [#allocation21], %s231
      %s233 = sshll.u32 [#allocation22], 4
      %s234 = int_to_ptr.vmem [resolvable:$true] %s233
      %239 = dma.hbm_to_vmem [thread:$0]  %s33, 4096, %s234, [#allocation21], 128, 128, 8
    $region69: #{tpu_custom_call.1} parent=1 // pred_fallthru
      _
    // Predicated region
    $region70: #{tpu_custom_call.1} parent=1 // pred_check
      _
    $region71: #{tpu_custom_call.1} parent=1 // pred_check_branch
      %241 = sbr.rel (0) target = $region73
    $region72: #{tpu_custom_call.1} parent=1 // pred_region
      _
    $region73: #{tpu_custom_call.1} parent=1 // pred_fallthru
      _
    // Predicated region
    $region74: #{tpu_custom_call.1} parent=1 // pred_check
      _
    $region75: #{tpu_custom_call.1} parent=1 // pred_check_branch
      %243 = sbr.rel (0) target = $region77
    $region76: #{tpu_custom_call.1} parent=1 // pred_region
      %s245 = ssub.s32 4096, 4096
      %246 = vsyncadd [#allocation24], %s245
      %s247 = sshll.u32 [#allocation23], 4
      %s248 = int_to_ptr.vmem [resolvable:$true] %s247
      %253 = dma.hbm_to_vmem [thread:$0]  %s37, 4096, %s248, [#allocation24], 128, 128, 8
    $region77: #{tpu_custom_call.1} parent=1 // pred_fallthru
      _
    // Predicated region
    $region78: #{tpu_custom_call.1} parent=1 // pred_check
      _
    $region79: #{tpu_custom_call.1} parent=1 // pred_check_branch
      %255 = sbr.rel (0) target = $region81
    $region80: #{tpu_custom_call.1} parent=1 // pred_region
      %s257 = ssub.s32 4096, 4096
      %258 = vsyncadd [#allocation24], %s257
      %s259 = sshll.u32 [#allocation25], 4
      %s260 = int_to_ptr.vmem [resolvable:$true] %s259
      %265 = dma.hbm_to_vmem [thread:$0]  %s39, 4096, %s260, [#allocation24], 128, 128, 8
    $region81: #{tpu_custom_call.1} parent=1 // pred_fallthru
      _
    // Predicated region
    $region82: #{tpu_custom_call.1} parent=1 // pred_check
      _
    $region83: #{tpu_custom_call.1} parent=1 // pred_check_branch
      %267 = sbr.rel (0) target = $region85
    $region84: #{tpu_custom_call.1} parent=1 // pred_region
      _
    $region85: #{tpu_custom_call.1} parent=1 // pred_fallthru
      _
    // Predicated region
    $region86: #{tpu_custom_call.1} parent=1 // pred_check
      _
    $region87: #{tpu_custom_call.1} parent=1 // pred_check_branch
      %269 = sbr.rel (0) target = $region89
    $region88: #{tpu_custom_call.1} parent=1 // pred_region
      %s271 = ssub.s32 2048, 2048
      %272 = vsyncadd [#allocation27], %s271
      %s273 = sshll.u32 [#allocation26], 4
      %s274 = int_to_ptr.vmem [resolvable:$true] %s273
      %279 = dma.hbm_to_vmem [thread:$0]  %s43, 2048, %s274, [#allocation27], 64, 64, 4
    $region89: #{tpu_custom_call.1} parent=1 // pred_fallthru
      _
    // Predicated region
    $region90: #{tpu_custom_call.1} parent=1 // pred_check
      _
    $region91: #{tpu_custom_call.1} parent=1 // pred_check_branch
      %281 = sbr.rel (0) target = $region93
    $region92: #{tpu_custom_call.1} parent=1 // pred_region
      %s283 = ssub.s32 2048, 2048
      %284 = vsyncadd [#allocation27], %s283
      %s285 = sshll.u32 [#allocation28], 4
      %s286 = int_to_ptr.vmem [resolvable:$true] %s285
      %291 = dma.hbm_to_vmem [thread:$0]  %s45, 2048, %s286, [#allocation27], 64, 64, 4
    $region93: #{tpu_custom_call.1} parent=1 // pred_fallthru
      _
    // Predicated region
    $region94: #{tpu_custom_call.1} parent=1 // pred_check
      _
    $region95: #{tpu_custom_call.1} parent=1 // pred_check_branch
      %293 = sbr.rel (0) target = $region97
    $region96: #{tpu_custom_call.1} parent=1 // pred_region
      %s295 = ssub.s32 2048, 2048
      %296 = vsyncadd [#allocation30], %s295
      %s297 = sshll.u32 [#allocation29], 4
      %s298 = int_to_ptr.vmem [resolvable:$true] %s297
      %303 = dma.hbm_to_vmem [thread:$0]  %s47, 2048, %s298, [#allocation30], 64, 64, 4
    $region97: #{tpu_custom_call.1} parent=1 // pred_fallthru
      _
    // Predicated region
    $region98: #{tpu_custom_call.1} parent=1 // pred_check
      _
    $region99: #{tpu_custom_call.1} parent=1 // pred_check_branch
      %305 = sbr.rel (0) target = $region101
    $region100: #{tpu_custom_call.1} parent=1 // pred_region
      %s307 = ssub.s32 2048, 2048
      %308 = vsyncadd [#allocation30], %s307
      %s309 = sshll.u32 [#allocation31], 4
      %s310 = int_to_ptr.vmem [resolvable:$true] %s309
      %315 = dma.hbm_to_vmem [thread:$0]  %s49, 2048, %s310, [#allocation30], 64, 64, 4
    $region101: #{tpu_custom_call.1} parent=1 // pred_fallthru
      _
    // Predicated region
    $region102: #{tpu_custom_call.1} parent=1 // pred_check
      _
    $region103: #{tpu_custom_call.1} parent=1 // pred_check_branch
      %317 = sbr.rel (0) target = $region105
    $region104: #{tpu_custom_call.1} parent=1 // pred_region
      _
    $region105: #{tpu_custom_call.1} parent=1 // pred_fallthru
      _
    // Predicated region
    $region106: #{tpu_custom_call.1} parent=1 // pred_check
      _
    $region107: #{tpu_custom_call.1} parent=1 // pred_check_branch
      %319 = sbr.rel (0) target = $region109
    $region108: #{tpu_custom_call.1} parent=1 // pred_region
      _
    $region109: #{tpu_custom_call.1} parent=1 // pred_fallthru
      _
    // Predicated region
    $region110: #{tpu_custom_call.1} parent=1 // pred_check
      _
    $region111: #{tpu_custom_call.1} parent=1 // pred_check_branch
      %321 = sbr.rel (0) target = $region113
    $region112: #{tpu_custom_call.1} parent=1 // pred_region
      %s323 = ssub.s32 1024, 1024
      %324 = vsyncadd [#allocation33], %s323
      %s325 = sshll.u32 [#allocation32], 4
      %s326 = int_to_ptr.vmem [resolvable:$true] %s325
      %331 = dma.hbm_to_vmem [thread:$0]  %s55, 1024, %s326, [#allocation33], 64, 64, 4
    $region113: #{tpu_custom_call.1} parent=1 // pred_fallthru
      _
    // Predicated region
    $region114: #{tpu_custom_call.1} parent=1 // pred_check
      _
    $region115: #{tpu_custom_call.1} parent=1 // pred_check_branch
      %333 = sbr.rel (0) target = $region117
    $region116: #{tpu_custom_call.1} parent=1 // pred_region
      _
    $region117: #{tpu_custom_call.1} parent=1 // pred_fallthru
      _
    // Predicated region
    $region118: #{tpu_custom_call.1} parent=1 // pred_check
      _
    $region119: #{tpu_custom_call.1} parent=1 // pred_check_branch
      %335 = sbr.rel (0) target = $region121
    $region120: #{tpu_custom_call.1} parent=1 // pred_region
      %336 = dma.done [#allocation3], 256
    $region121: #{tpu_custom_call.1} parent=1 // pred_fallthru
      _
    // Predicated region
    $region122: #{tpu_custom_call.1} parent=1 // pred_check
      _
    $region123: #{tpu_custom_call.1} parent=1 // pred_check_branch
      %338 = sbr.rel (0) target = $region125
    $region124: #{tpu_custom_call.1} parent=1 // pred_region
      %339 = dma.done [#allocation6], 2688
    $region125: #{tpu_custom_call.1} parent=1 // pred_fallthru
      _
    // Predicated region
    $region126: #{tpu_custom_call.1} parent=1 // pred_check
      _
    $region127: #{tpu_custom_call.1} parent=1 // pred_check_branch
      %341 = sbr.rel (0) target = $region129
    $region128: #{tpu_custom_call.1} parent=1 // pred_region
      %342 = dma.done [#allocation6], 2688
    $region129: #{tpu_custom_call.1} parent=1 // pred_fallthru
      _
    // Predicated region
    $region130: #{tpu_custom_call.1} parent=1 // pred_check
      _
    $region131: #{tpu_custom_call.1} parent=1 // pred_check_branch
      %344 = sbr.rel (0) target = $region133
    $region132: #{tpu_custom_call.1} parent=1 // pred_region
      %345 = dma.done [#allocation9], 896
    $region133: #{tpu_custom_call.1} parent=1 // pred_fallthru
      _
    // Predicated region
    $region134: #{tpu_custom_call.1} parent=1 // pred_check
      _
    $region135: #{tpu_custom_call.1} parent=1 // pred_check_branch
      %347 = sbr.rel (0) target = $region137
    $region136: #{tpu_custom_call.1} parent=1 // pred_region
      %348 = dma.done [#allocation9], 896
    $region137: #{tpu_custom_call.1} parent=1 // pred_fallthru
      _
    // Predicated region
    $region138: #{tpu_custom_call.1} parent=1 // pred_check
      _
    $region139: #{tpu_custom_call.1} parent=1 // pred_check_branch
      %350 = sbr.rel (0) target = $region141
    $region140: #{tpu_custom_call.1} parent=1 // pred_region
      %351 = dma.done [#allocation12], 4096
    $region141: #{tpu_custom_call.1} parent=1 // pred_fallthru
      _
    // Predicated region
    $region142: #{tpu_custom_call.1} parent=1 // pred_check
      _
    $region143: #{tpu_custom_call.1} parent=1 // pred_check_branch
      %353 = sbr.rel (0) target = $region145
    $region144: #{tpu_custom_call.1} parent=1 // pred_region
      %354 = dma.done [#allocation12], 4096
    $region145: #{tpu_custom_call.1} parent=1 // pred_fallthru
      _
    // Predicated region
    $region146: #{tpu_custom_call.1} parent=1 // pred_check
      _
    $region147: #{tpu_custom_call.1} parent=1 // pred_check_branch
      %356 = sbr.rel (0) target = $region149
    $region148: #{tpu_custom_call.1} parent=1 // pred_region
      %357 = dma.done [#allocation15], 4096
    $region149: #{tpu_custom_call.1} parent=1 // pred_fallthru
      _
    // Predicated region
    $region150: #{tpu_custom_call.1} parent=1 // pred_check
      _
    $region151: #{tpu_custom_call.1} parent=1 // pred_check_branch
      %359 = sbr.rel (0) target = $region153
    $region152: #{tpu_custom_call.1} parent=1 // pred_region
      %360 = dma.done [#allocation15], 4096
    $region153: #{tpu_custom_call.1} parent=1 // pred_fallthru
      _
    // Predicated region
    $region154: #{tpu_custom_call.1} parent=1 // pred_check
      _
    $region155: #{tpu_custom_call.1} parent=1 // pred_check_branch
      %362 = sbr.rel (0) target = $region157
    $region156: #{tpu_custom_call.1} parent=1 // pred_region
      %363 = dma.done [#allocation18], 4096
    $region157: #{tpu_custom_call.1} parent=1 // pred_fallthru
      _
    // Predicated region
    $region158: #{tpu_custom_call.1} parent=1 // pred_check
      _
    $region159: #{tpu_custom_call.1} parent=1 // pred_check_branch
      %365 = sbr.rel (0) target = $region161
    $region160: #{tpu_custom_call.1} parent=1 // pred_region
      %366 = dma.done [#allocation18], 4096
    $region161: #{tpu_custom_call.1} parent=1 // pred_fallthru
      _
    // Predicated region
    $region162: #{tpu_custom_call.1} parent=1 // pred_check
      _
    $region163: #{tpu_custom_call.1} parent=1 // pred_check_branch
      %368 = sbr.rel (0) target = $region165
    $region164: #{tpu_custom_call.1} parent=1 // pred_region
      %369 = dma.done [#allocation21], 4096
    $region165: #{tpu_custom_call.1} parent=1 // pred_fallthru
      _
    // Predicated region
    $region166: #{tpu_custom_call.1} parent=1 // pred_check
      _
    $region167: #{tpu_custom_call.1} parent=1 // pred_check_branch
      %371 = sbr.rel (0) target = $region169
    $region168: #{tpu_custom_call.1} parent=1 // pred_region
      %372 = dma.done [#allocation21], 4096
    $region169: #{tpu_custom_call.1} parent=1 // pred_fallthru
      _
    // Predicated region
    $region170: #{tpu_custom_call.1} parent=1 // pred_check
      _
    $region171: #{tpu_custom_call.1} parent=1 // pred_check_branch
      %374 = sbr.rel (0) target = $region173
    $region172: #{tpu_custom_call.1} parent=1 // pred_region
      %375 = dma.done [#allocation24], 4096
    $region173: #{tpu_custom_call.1} parent=1 // pred_fallthru
      _
    // Predicated region
    $region174: #{tpu_custom_call.1} parent=1 // pred_check
      _
    $region175: #{tpu_custom_call.1} parent=1 // pred_check_branch
      %377 = sbr.rel (0) target = $region177
    $region176: #{tpu_custom_call.1} parent=1 // pred_region
      %378 = dma.done [#allocation24], 4096
    $region177: #{tpu_custom_call.1} parent=1 // pred_fallthru
      _
    // Predicated region
    $region178: #{tpu_custom_call.1} parent=1 // pred_check
      _
    $region179: #{tpu_custom_call.1} parent=1 // pred_check_branch
      %380 = sbr.rel (0) target = $region181
    $region180: #{tpu_custom_call.1} parent=1 // pred_region
      %381 = dma.done [#allocation27], 2048
    $region181: #{tpu_custom_call.1} parent=1 // pred_fallthru
      _
    // Predicated region
    $region182: #{tpu_custom_call.1} parent=1 // pred_check
      _
    $region183: #{tpu_custom_call.1} parent=1 // pred_check_branch
      %383 = sbr.rel (0) target = $region185
    $region184: #{tpu_custom_call.1} parent=1 // pred_region
      %384 = dma.done [#allocation27], 2048
    $region185: #{tpu_custom_call.1} parent=1 // pred_fallthru
      _
    // Predicated region
    $region186: #{tpu_custom_call.1} parent=1 // pred_check
      _
    $region187: #{tpu_custom_call.1} parent=1 // pred_check_branch
      %386 = sbr.rel (0) target = $region189
    $region188: #{tpu_custom_call.1} parent=1 // pred_region
      %387 = dma.done [#allocation30], 2048
    $region189: #{tpu_custom_call.1} parent=1 // pred_fallthru
      _
    // Predicated region
    $region190: #{tpu_custom_call.1} parent=1 // pred_check
      _
    $region191: #{tpu_custom_call.1} parent=1 // pred_check_branch
      %389 = sbr.rel (0) target = $region193
    $region192: #{tpu_custom_call.1} parent=1 // pred_region
      %390 = dma.done [#allocation30], 2048
    $region193: #{tpu_custom_call.1} parent=1 // pred_fallthru
      _
    // Predicated region
    $region194: #{tpu_custom_call.1} parent=1 // pred_check
      _
    $region195: #{tpu_custom_call.1} parent=1 // pred_check_branch
      %392 = sbr.rel (0) target = $region197
    $region196: #{tpu_custom_call.1} parent=1 // pred_region
      %393 = dma.done [#allocation33], 1024
    $region197: #{tpu_custom_call.1} parent=1 // pred_fallthru
      _
    %v395 = vld [vmem:[#allocation2] sm:$0xff]
    %v396 = vld [vmem:[#allocation2 + $0x8] sm:$0xff]
    %v397 = vpack.c.bf16 %v396, %v395
    %v398 = vunpack.c.l.bf16 %v397
    %v399 = vunpack.c.h.bf16 %v397
    %v400 = vsub.f32 %v395, %v398
    %v401 = vsub.f32 %v396, %v399
    %v402 = vpack.c.bf16 %v401, %v400
    %v403 = vld [vmem:[#allocation8] sm:$0xff]
    %v404 = vld [vmem:[#allocation8 + $0x8] sm:$0xff]
    %v405 = vld [vmem:[#allocation8 + $0x10] sm:$0xff]
    %v406 = vld [vmem:[#allocation8 + $0x18] sm:$0xff]
    %v407 = vld [vmem:[#allocation8 + $0x20] sm:$0xff]
    %v408 = vld [vmem:[#allocation8 + $0x28] sm:$0xff]
    %v409 = vld [vmem:[#allocation8 + $0x30] sm:$0x33]
    %v410 = vld [vmem:[#allocation10] sm:$0xff]
    %v411 = vld [vmem:[#allocation10 + $0x8] sm:$0xff]
    %v412 = vld [vmem:[#allocation10 + $0x10] sm:$0xff]
    %v413 = vld [vmem:[#allocation10 + $0x18] sm:$0xff]
    %v414 = vld [vmem:[#allocation10 + $0x20] sm:$0xff]
    %v415 = vld [vmem:[#allocation10 + $0x28] sm:$0xff]
    %v416 = vld [vmem:[#allocation10 + $0x30] sm:$0x33]
    %v424 = vunpack.c.l.b16 %v403
    %v425 = vunpack.c.h.b16 %v403
    %v426 = vunpack.c.l.b16 %v404
    %v427 = vunpack.c.h.b16 %v404
    %v428 = vunpack.c.l.b16 %v405
    %v429 = vunpack.c.h.b16 %v405
    %v430 = vunpack.c.l.b16 %v406
    %v431 = vunpack.c.h.b16 %v406
    %v432 = vunpack.c.l.b16 %v407
    %v433 = vunpack.c.h.b16 %v407
    %v434 = vunpack.c.l.b16 %v408
    %v435 = vunpack.c.h.b16 %v408
    %v436 = vunpack.c.l.b16 %v409
    %v437 = vunpack.c.h.b16 %v409
    %v438 = vpack.c.b16 %v426, %v424
    %v439 = vpack.c.b16 %v427, %v425
    %v440 = vpack.c.b16 %v430, %v428
    %v441 = vpack.c.b16 %v431, %v429
    %v442 = vpack.c.b16 %v434, %v432
    %v443 = vpack.c.b16 %v435, %v433
    %v444 = vpack.c.b16 %v436, %v436
    %v445 = vpack.c.b16 %v437, %v437
    %vm452 = vcmask 416768
    %v454 = vsel %vm452, %v402, 0
    %vm456 = vcmask 1040384
    %vm457 = vcmask 1041408
    %v458 = vsel %vm456, 4294967295, 65535
    %v459 = vsel %vm457, %v458, 0
    %v461 = vand.u32 %v444, %v459
    %v464 = vand.u32 %v445, %v459
    %466 = vmatprep.subr.bf16.mxu0 %v439
    %467 = vmatpush1.bf16.msra.mxu0 %v438
    %468 = vmatprep.subr.bf16.mxu0 %v441
    %469 = vmatpush1.bf16.msra.mxu0 %v440
    %470 = vmatprep.subr.bf16.mxu0 %v443
    %471 = vmatpush1.bf16.msra.mxu0 %v442
    %472 = vmatprep.subr.bf16.mxu0 %v464
    %473 = vmatpush1.bf16.msra.mxu0 %v461
    %474 = vmatprep.subr.bf16.mxu0 0
    %475 = vmatpush1.bf16.msra.mxu0 0
    %476 = vmatprep.subr.bf16.mxu0 0
    %477 = vmatpush1.bf16.msra.mxu0 0
    %478 = vmatprep.subr.bf16.mxu0 0
    %479 = vmatpush1.bf16.msra.mxu0 0
    %480 = vmatprep.subr.bf16.mxu0 0
    %481 = vmatpush1.bf16.msra.mxu0 0
    %482 = vmatprep.subr.bf16.mxu0 0
    %483 = vmatpush1.bf16.msra.mxu0 0
    %484 = vmatprep.subr.bf16.mxu0 0
    %485 = vmatpush1.bf16.msra.mxu0 0
    %486 = vmatprep.subr.bf16.mxu0 0
    %487 = vmatpush1.bf16.msra.mxu0 0
    %488 = vmatprep.subr.bf16.mxu0 0
    %489 = vmatpush1.bf16.msra.mxu0 0
    %490 = vmatprep.subr.bf16.mxu0 0
    %491 = vmatpush1.bf16.msra.mxu0 0
    %492 = vmatprep.subr.bf16.mxu0 0
    %493 = vmatpush1.bf16.msra.mxu0 0
    %494 = vmatprep.subr.bf16.mxu0 0
    %495 = vmatpush1.bf16.msra.mxu0 0
    %496 = vmatprep.subr.bf16.mxu0 0
    %497 = vmatpush1.bf16.msra.mxu0 0
    %498 = vmatprep.mubr.bf16.mxu0 0
    %499 = vmatmul.mubr.bf16.gmra.mrb[0].mxu0 %v454
    %v500 = vpop.f32.mrb[0].mxu0
    %v501 = vadd.f32 0.0, %v500
    %v502 = vpop.f32.mrb[0].mxu0
    %v503 = vadd.f32 0.0, %v502
    %v504 = vpop.f32.mrb[0].mxu0
    %v505 = vadd.f32 0.0, %v504
    %v506 = vpop.f32.mrb[0].mxu0
    %v507 = vadd.f32 0.0, %v506
    %508 = vdwg.mxu0
    %v516 = vunpack.c.l.b16 %v410
    %v517 = vunpack.c.h.b16 %v410
    %v518 = vunpack.c.l.b16 %v411
    %v519 = vunpack.c.h.b16 %v411
    %v520 = vunpack.c.l.b16 %v412
    %v521 = vunpack.c.h.b16 %v412
    %v522 = vunpack.c.l.b16 %v413
    %v523 = vunpack.c.h.b16 %v413
    %v524 = vunpack.c.l.b16 %v414
    %v525 = vunpack.c.h.b16 %v414
    %v526 = vunpack.c.l.b16 %v415
    %v527 = vunpack.c.h.b16 %v415
    %v528 = vunpack.c.l.b16 %v416
    %v529 = vunpack.c.h.b16 %v416
    %v530 = vpack.c.b16 %v518, %v516
    %v531 = vpack.c.b16 %v519, %v517
    %v532 = vpack.c.b16 %v522, %v520
    %v533 = vpack.c.b16 %v523, %v521
    %v534 = vpack.c.b16 %v526, %v524
    %v535 = vpack.c.b16 %v527, %v525
    %v536 = vpack.c.b16 %v528, %v528
    %v537 = vpack.c.b16 %v529, %v529
    %v545 = vsel %vm452, %v397, 0
    %v548 = vand.u32 %v536, %v459
    %v551 = vand.u32 %v537, %v459
    %553 = vmatprep.subr.bf16.mxu0 %v531
    %554 = vmatpush1.bf16.msra.mxu0 %v530
    %555 = vmatprep.subr.bf16.mxu0 %v533
    %556 = vmatpush1.bf16.msra.mxu0 %v532
    %557 = vmatprep.subr.bf16.mxu0 %v535
    %558 = vmatpush1.bf16.msra.mxu0 %v534
    %559 = vmatprep.subr.bf16.mxu0 %v551
    %560 = vmatpush1.bf16.msra.mxu0 %v548
    %561 = vmatprep.subr.bf16.mxu0 0
    %562 = vmatpush1.bf16.msra.mxu0 0
    %563 = vmatprep.subr.bf16.mxu0 0
    %564 = vmatpush1.bf16.msra.mxu0 0
    %565 = vmatprep.subr.bf16.mxu0 0
    %566 = vmatpush1.bf16.msra.mxu0 0
    %567 = vmatprep.subr.bf16.mxu0 0
    %568 = vmatpush1.bf16.msra.mxu0 0
    %569 = vmatprep.subr.bf16.mxu0 0
    %570 = vmatpush1.bf16.msra.mxu0 0
    %571 = vmatprep.subr.bf16.mxu0 0
    %572 = vmatpush1.bf16.msra.mxu0 0
    %573 = vmatprep.subr.bf16.mxu0 0
    %574 = vmatpush1.bf16.msra.mxu0 0
    %575 = vmatprep.subr.bf16.mxu0 0
    %576 = vmatpush1.bf16.msra.mxu0 0
    %577 = vmatprep.subr.bf16.mxu0 0
    %578 = vmatpush1.bf16.msra.mxu0 0
    %579 = vmatprep.subr.bf16.mxu0 0
    %580 = vmatpush1.bf16.msra.mxu0 0
    %581 = vmatprep.subr.bf16.mxu0 0
    %582 = vmatpush1.bf16.msra.mxu0 0
    %583 = vmatprep.subr.bf16.mxu0 0
    %584 = vmatpush1.bf16.msra.mxu0 0
    %585 = vmatprep.mubr.bf16.mxu0 0
    %586 = vmatmul.mubr.bf16.gmra.mrb[0].mxu0 %v545
    %v587 = vpop.f32.mrb[0].mxu0
    %v588 = vadd.f32 %v501, %v587
    %v589 = vpop.f32.mrb[0].mxu0
    %v590 = vadd.f32 %v503, %v589
    %v591 = vpop.f32.mrb[0].mxu0
    %v592 = vadd.f32 %v505, %v591
    %v593 = vpop.f32.mrb[0].mxu0
    %v594 = vadd.f32 %v507, %v593
    %595 = vdwg.mxu0
    %596 = vmatprep.subr.bf16.mxu0 %v439
    %597 = vmatpush1.bf16.msra.mxu0 %v438
    %598 = vmatprep.subr.bf16.mxu0 %v441
    %599 = vmatpush1.bf16.msra.mxu0 %v440
    %600 = vmatprep.subr.bf16.mxu0 %v443
    %601 = vmatpush1.bf16.msra.mxu0 %v442
    %602 = vmatprep.subr.bf16.mxu0 %v464
    %603 = vmatpush1.bf16.msra.mxu0 %v461
    %604 = vmatprep.subr.bf16.mxu0 0
    %605 = vmatpush1.bf16.msra.mxu0 0
    %606 = vmatprep.subr.bf16.mxu0 0
    %607 = vmatpush1.bf16.msra.mxu0 0
    %608 = vmatprep.subr.bf16.mxu0 0
    %609 = vmatpush1.bf16.msra.mxu0 0
    %610 = vmatprep.subr.bf16.mxu0 0
    %611 = vmatpush1.bf16.msra.mxu0 0
    %612 = vmatprep.subr.bf16.mxu0 0
    %613 = vmatpush1.bf16.msra.mxu0 0
    %614 = vmatprep.subr.bf16.mxu0 0
    %615 = vmatpush1.bf16.msra.mxu0 0
    %616 = vmatprep.subr.bf16.mxu0 0
    %617 = vmatpush1.bf16.msra.mxu0 0
    %618 = vmatprep.subr.bf16.mxu0 0
    %619 = vmatpush1.bf16.msra.mxu0 0
    %620 = vmatprep.subr.bf16.mxu0 0
    %621 = vmatpush1.bf16.msra.mxu0 0
    %622 = vmatprep.subr.bf16.mxu0 0
    %623 = vmatpush1.bf16.msra.mxu0 0
    %624 = vmatprep.subr.bf16.mxu0 0
    %625 = vmatpush1.bf16.msra.mxu0 0
    %626 = vmatprep.subr.bf16.mxu0 0
    %627 = vmatpush1.bf16.msra.mxu0 0
    %628 = vmatprep.mubr.bf16.mxu0 0
    %629 = vmatmul.mubr.bf16.gmra.mrb[0].mxu0 %v545
    %v630 = vpop.f32.mrb[0].mxu0
    %v631 = vadd.f32 %v588, %v630
    %v632 = vpop.f32.mrb[0].mxu0
    %v633 = vadd.f32 %v590, %v632
    %v634 = vpop.f32.mrb[0].mxu0
    %v635 = vadd.f32 %v592, %v634
    %v636 = vpop.f32.mrb[0].mxu0
    %v637 = vadd.f32 %v594, %v636
    %638 = vdwg.mxu0
    %v639 = vld [vmem:[%s11] sm:$0x3]
    %v641 = vlaneseq
    %v642 = vshrl.u32 %v641, 7
    %v643 = vsub.s32 0, %v642
    %v644 = vrot.slane %v639, %v643
    %v645 = vlaneseq
    %v646 = vshrl.u32 %v645, 7
    %v647 = vsub.s32 1, %v646
    %v648 = vrot.slane %v639, %v647
    %v651 = vadd.f32 %v631, %v644
    %v652 = vadd.f32 %v633, %v648
    %v653 = vadd.f32 %v635, %v644
    %v654 = vadd.f32 %v637, %v648
    %vm655 = vcmp.gt.f32.partialorder %v651, 0.0
    %vm656 = vcmp.gt.f32.partialorder %v652, 0.0
    %vm657 = vcmp.gt.f32.partialorder %v653, 0.0
    %vm658 = vcmp.gt.f32.partialorder %v654, 0.0
    %v659 = vmul.f32 %v651, 0.2
    %v660 = vmul.f32 %v652, 0.2
    %v661 = vmul.f32 %v653, 0.2
    %v662 = vmul.f32 %v654, 0.2
    %v663 = vsel %vm655, %v651, %v659
    %v664 = vsel %vm656, %v652, %v660
    %v665 = vsel %vm657, %v653, %v661
    %v666 = vsel %vm658, %v654, %v662
    %v667 = vpack.c.bf16 %v665, %v663
    %v668 = vpack.c.bf16 %v666, %v664
    %v669 = vunpack.c.l.bf16 %v667
    %v670 = vunpack.c.l.bf16 %v668
    %v671 = vunpack.c.h.bf16 %v667
    %v672 = vunpack.c.h.bf16 %v668
    %v673 = vsub.f32 %v663, %v669
    %v674 = vsub.f32 %v664, %v670
    %v675 = vsub.f32 %v665, %v671
    %v676 = vsub.f32 %v666, %v672
    %v677 = vpack.c.bf16 %v675, %v673
    %v678 = vpack.c.bf16 %v676, %v674
    %v679 = vld [vmem:[#allocation11] sm:$0xff]
    %v680 = vld [vmem:[#allocation11 + $0x8] sm:$0xff]
    %v681 = vld [vmem:[#allocation11 + $0x10] sm:$0xff]
    %v682 = vld [vmem:[#allocation11 + $0x18] sm:$0xff]
    %v683 = vld [vmem:[#allocation11 + $0x20] sm:$0xff]
    %v684 = vld [vmem:[#allocation11 + $0x28] sm:$0xff]
    %v685 = vld [vmem:[#allocation11 + $0x30] sm:$0xff]
    %v686 = vld [vmem:[#allocation11 + $0x38] sm:$0xff]
    %v687 = vld [vmem:[#allocation11 + $0x40] sm:$0xff]
    %v688 = vld [vmem:[#allocation11 + $0x48] sm:$0xff]
    %v689 = vld [vmem:[#allocation11 + $0x50] sm:$0xff]
    %v690 = vld [vmem:[#allocation11 + $0x58] sm:$0xff]
    %v691 = vld [vmem:[#allocation11 + $0x60] sm:$0xff]
    %v692 = vld [vmem:[#allocation11 + $0x68] sm:$0xff]
    %v693 = vld [vmem:[#allocation11 + $0x70] sm:$0xff]
    %v694 = vld [vmem:[#allocation11 + $0x78] sm:$0xff]
    %v695 = vld [vmem:[#allocation11 + $0x80] sm:$0xff]
    %v696 = vld [vmem:[#allocation11 + $0x88] sm:$0xff]
    %v697 = vld [vmem:[#allocation11 + $0x90] sm:$0xff]
    %v698 = vld [vmem:[#allocation11 + $0x98] sm:$0xff]
    %v699 = vld [vmem:[#allocation11 + $0xa0] sm:$0xff]
    %v700 = vld [vmem:[#allocation11 + $0xa8] sm:$0xff]
    %v701 = vld [vmem:[#allocation11 + $0xb0] sm:$0xff]
    %v702 = vld [vmem:[#allocation11 + $0xb8] sm:$0xff]
    %v703 = vld [vmem:[#allocation11 + $0xc0] sm:$0xff]
    %v704 = vld [vmem:[#allocation11 + $0xc8] sm:$0xff]
    %v705 = vld [vmem:[#allocation11 + $0xd0] sm:$0xff]
    %v706 = vld [vmem:[#allocation11 + $0xd8] sm:$0xff]
    %v707 = vld [vmem:[#allocation11 + $0xe0] sm:$0xff]
    %v708 = vld [vmem:[#allocation11 + $0xe8] sm:$0xff]
    %v709 = vld [vmem:[#allocation11 + $0xf0] sm:$0xff]
    %v710 = vld [vmem:[#allocation11 + $0xf8] sm:$0xff]
    %v711 = vld [vmem:[#allocation13] sm:$0xff]
    %v712 = vld [vmem:[#allocation13 + $0x8] sm:$0xff]
    %v713 = vld [vmem:[#allocation13 + $0x10] sm:$0xff]
    %v714 = vld [vmem:[#allocation13 + $0x18] sm:$0xff]
    %v715 = vld [vmem:[#allocation13 + $0x20] sm:$0xff]
    %v716 = vld [vmem:[#allocation13 + $0x28] sm:$0xff]
    %v717 = vld [vmem:[#allocation13 + $0x30] sm:$0xff]
    %v718 = vld [vmem:[#allocation13 + $0x38] sm:$0xff]
    %v719 = vld [vmem:[#allocation13 + $0x40] sm:$0xff]
    %v720 = vld [vmem:[#allocation13 + $0x48] sm:$0xff]
    %v721 = vld [vmem:[#allocation13 + $0x50] sm:$0xff]
    %v722 = vld [vmem:[#allocation13 + $0x58] sm:$0xff]
    %v723 = vld [vmem:[#allocation13 + $0x60] sm:$0xff]
    %v724 = vld [vmem:[#allocation13 + $0x68] sm:$0xff]
    %v725 = vld [vmem:[#allocation13 + $0x70] sm:$0xff]
    %v726 = vld [vmem:[#allocation13 + $0x78] sm:$0xff]
    %v727 = vld [vmem:[#allocation13 + $0x80] sm:$0xff]
    %v728 = vld [vmem:[#allocation13 + $0x88] sm:$0xff]
    %v729 = vld [vmem:[#allocation13 + $0x90] sm:$0xff]
    %v730 = vld [vmem:[#allocation13 + $0x98] sm:$0xff]
    %v731 = vld [vmem:[#allocation13 + $0xa0] sm:$0xff]
    %v732 = vld [vmem:[#allocation13 + $0xa8] sm:$0xff]
    %v733 = vld [vmem:[#allocation13 + $0xb0] sm:$0xff]
    %v734 = vld [vmem:[#allocation13 + $0xb8] sm:$0xff]
    %v735 = vld [vmem:[#allocation13 + $0xc0] sm:$0xff]
    %v736 = vld [vmem:[#allocation13 + $0xc8] sm:$0xff]
    %v737 = vld [vmem:[#allocation13 + $0xd0] sm:$0xff]
    %v738 = vld [vmem:[#allocation13 + $0xd8] sm:$0xff]
    %v739 = vld [vmem:[#allocation13 + $0xe0] sm:$0xff]
    %v740 = vld [vmem:[#allocation13 + $0xe8] sm:$0xff]
    %v741 = vld [vmem:[#allocation13 + $0xf0] sm:$0xff]
    %v742 = vld [vmem:[#allocation13 + $0xf8] sm:$0xff]
    %v775 = vunpack.c.l.b16 %v679
    %v776 = vunpack.c.h.b16 %v679
    %v777 = vunpack.c.l.b16 %v680
    %v778 = vunpack.c.h.b16 %v680
    %v779 = vunpack.c.l.b16 %v681
    %v780 = vunpack.c.h.b16 %v681
    %v781 = vunpack.c.l.b16 %v682
    %v782 = vunpack.c.h.b16 %v682
    %v783 = vunpack.c.l.b16 %v683
    %v784 = vunpack.c.h.b16 %v683
    %v785 = vunpack.c.l.b16 %v684
    %v786 = vunpack.c.h.b16 %v684
    %v787 = vunpack.c.l.b16 %v685
    %v788 = vunpack.c.h.b16 %v685
    %v789 = vunpack.c.l.b16 %v686
    %v790 = vunpack.c.h.b16 %v686
    %v791 = vunpack.c.l.b16 %v687
    %v792 = vunpack.c.h.b16 %v687
    %v793 = vunpack.c.l.b16 %v688
    %v794 = vunpack.c.h.b16 %v688
    %v795 = vunpack.c.l.b16 %v689
    %v796 = vunpack.c.h.b16 %v689
    %v797 = vunpack.c.l.b16 %v690
    %v798 = vunpack.c.h.b16 %v690
    %v799 = vunpack.c.l.b16 %v691
    %v800 = vunpack.c.h.b16 %v691
    %v801 = vunpack.c.l.b16 %v692
    %v802 = vunpack.c.h.b16 %v692
    %v803 = vunpack.c.l.b16 %v693
    %v804 = vunpack.c.h.b16 %v693
    %v805 = vunpack.c.l.b16 %v694
    %v806 = vunpack.c.h.b16 %v694
    %v807 = vunpack.c.l.b16 %v695
    %v808 = vunpack.c.h.b16 %v695
    %v809 = vunpack.c.l.b16 %v696
    %v810 = vunpack.c.h.b16 %v696
    %v811 = vunpack.c.l.b16 %v697
    %v812 = vunpack.c.h.b16 %v697
    %v813 = vunpack.c.l.b16 %v698
    %v814 = vunpack.c.h.b16 %v698
    %v815 = vunpack.c.l.b16 %v699
    %v816 = vunpack.c.h.b16 %v699
    %v817 = vunpack.c.l.b16 %v700
    %v818 = vunpack.c.h.b16 %v700
    %v819 = vunpack.c.l.b16 %v701
    %v820 = vunpack.c.h.b16 %v701
    %v821 = vunpack.c.l.b16 %v702
    %v822 = vunpack.c.h.b16 %v702
    %v823 = vunpack.c.l.b16 %v703
    %v824 = vunpack.c.h.b16 %v703
    %v825 = vunpack.c.l.b16 %v704
    %v826 = vunpack.c.h.b16 %v704
    %v827 = vunpack.c.l.b16 %v705
    %v828 = vunpack.c.h.b16 %v705
    %v829 = vunpack.c.l.b16 %v706
    %v830 = vunpack.c.h.b16 %v706
    %v831 = vunpack.c.l.b16 %v707
    %v832 = vunpack.c.h.b16 %v707
    %v833 = vunpack.c.l.b16 %v708
    %v834 = vunpack.c.h.b16 %v708
    %v835 = vunpack.c.l.b16 %v709
    %v836 = vunpack.c.h.b16 %v709
    %v837 = vunpack.c.l.b16 %v710
    %v838 = vunpack.c.h.b16 %v710
    %v839 = vpack.c.b16 %v777, %v775
    %v840 = vpack.c.b16 %v778, %v776
    %v841 = vpack.c.b16 %v781, %v779
    %v842 = vpack.c.b16 %v782, %v780
    %v843 = vpack.c.b16 %v785, %v783
    %v844 = vpack.c.b16 %v786, %v784
    %v845 = vpack.c.b16 %v789, %v787
    %v846 = vpack.c.b16 %v790, %v788
    %v847 = vpack.c.b16 %v793, %v791
    %v848 = vpack.c.b16 %v794, %v792
    %v849 = vpack.c.b16 %v797, %v795
    %v850 = vpack.c.b16 %v798, %v796
    %v851 = vpack.c.b16 %v801, %v799
    %v852 = vpack.c.b16 %v802, %v800
    %v853 = vpack.c.b16 %v805, %v803
    %v854 = vpack.c.b16 %v806, %v804
    %v855 = vpack.c.b16 %v809, %v807
    %v856 = vpack.c.b16 %v810, %v808
    %v857 = vpack.c.b16 %v813, %v811
    %v858 = vpack.c.b16 %v814, %v812
    %v859 = vpack.c.b16 %v817, %v815
    %v860 = vpack.c.b16 %v818, %v816
    %v861 = vpack.c.b16 %v821, %v819
    %v862 = vpack.c.b16 %v822, %v820
    %v863 = vpack.c.b16 %v825, %v823
    %v864 = vpack.c.b16 %v826, %v824
    %v865 = vpack.c.b16 %v829, %v827
    %v866 = vpack.c.b16 %v830, %v828
    %v867 = vpack.c.b16 %v833, %v831
    %v868 = vpack.c.b16 %v834, %v832
    %v869 = vpack.c.b16 %v837, %v835
    %v870 = vpack.c.b16 %v838, %v836
    %903 = vmatprep.subr.bf16.mxu0 %v840
    %904 = vmatpush1.bf16.msra.mxu0 %v839
    %905 = vmatprep.subr.bf16.mxu0 %v842
    %906 = vmatpush1.bf16.msra.mxu0 %v841
    %907 = vmatprep.subr.bf16.mxu0 %v844
    %908 = vmatpush1.bf16.msra.mxu0 %v843
    %909 = vmatprep.subr.bf16.mxu0 %v846
    %910 = vmatpush1.bf16.msra.mxu0 %v845
    %911 = vmatprep.subr.bf16.mxu0 %v848
    %912 = vmatpush1.bf16.msra.mxu0 %v847
    %913 = vmatprep.subr.bf16.mxu0 %v850
    %914 = vmatpush1.bf16.msra.mxu0 %v849
    %915 = vmatprep.subr.bf16.mxu0 %v852
    %916 = vmatpush1.bf16.msra.mxu0 %v851
    %917 = vmatprep.subr.bf16.mxu0 %v854
    %918 = vmatpush1.bf16.msra.mxu0 %v853
    %919 = vmatprep.subr.bf16.mxu0 %v856
    %920 = vmatpush1.bf16.msra.mxu0 %v855
    %921 = vmatprep.subr.bf16.mxu0 %v858
    %922 = vmatpush1.bf16.msra.mxu0 %v857
    %923 = vmatprep.subr.bf16.mxu0 %v860
    %924 = vmatpush1.bf16.msra.mxu0 %v859
    %925 = vmatprep.subr.bf16.mxu0 %v862
    %926 = vmatpush1.bf16.msra.mxu0 %v861
    %927 = vmatprep.subr.bf16.mxu0 %v864
    %928 = vmatpush1.bf16.msra.mxu0 %v863
    %929 = vmatprep.subr.bf16.mxu0 %v866
    %930 = vmatpush1.bf16.msra.mxu0 %v865
    %931 = vmatprep.subr.bf16.mxu0 %v868
    %932 = vmatpush1.bf16.msra.mxu0 %v867
    %933 = vmatprep.subr.bf16.mxu0 %v870
    %934 = vmatpush1.bf16.msra.mxu0 %v869
    %935 = vmatprep.mubr.bf16.mxu0 %v678
    %936 = vmatmul.mubr.bf16.gmra.mrb[0].mxu0 %v677
    %v937 = vpop.f32.mrb[0].mxu0
    %v938 = vadd.f32 0.0, %v937
    %v939 = vpop.f32.mrb[0].mxu0
    %v940 = vadd.f32 0.0, %v939
    %v941 = vpop.f32.mrb[0].mxu0
    %v942 = vadd.f32 0.0, %v941
    %v943 = vpop.f32.mrb[0].mxu0
    %v944 = vadd.f32 0.0, %v943
    %945 = vdwg.mxu0
    %v978 = vunpack.c.l.b16 %v711
    %v979 = vunpack.c.h.b16 %v711
    %v980 = vunpack.c.l.b16 %v712
    %v981 = vunpack.c.h.b16 %v712
    %v982 = vunpack.c.l.b16 %v713
    %v983 = vunpack.c.h.b16 %v713
    %v984 = vunpack.c.l.b16 %v714
    %v985 = vunpack.c.h.b16 %v714
    %v986 = vunpack.c.l.b16 %v715
    %v987 = vunpack.c.h.b16 %v715
    %v988 = vunpack.c.l.b16 %v716
    %v989 = vunpack.c.h.b16 %v716
    %v990 = vunpack.c.l.b16 %v717
    %v991 = vunpack.c.h.b16 %v717
    %v992 = vunpack.c.l.b16 %v718
    %v993 = vunpack.c.h.b16 %v718
    %v994 = vunpack.c.l.b16 %v719
    %v995 = vunpack.c.h.b16 %v719
    %v996 = vunpack.c.l.b16 %v720
    %v997 = vunpack.c.h.b16 %v720
    %v998 = vunpack.c.l.b16 %v721
    %v999 = vunpack.c.h.b16 %v721
    %v1000 = vunpack.c.l.b16 %v722
    %v1001 = vunpack.c.h.b16 %v722
    %v1002 = vunpack.c.l.b16 %v723
    %v1003 = vunpack.c.h.b16 %v723
    %v1004 = vunpack.c.l.b16 %v724
    %v1005 = vunpack.c.h.b16 %v724
    %v1006 = vunpack.c.l.b16 %v725
    %v1007 = vunpack.c.h.b16 %v725
    %v1008 = vunpack.c.l.b16 %v726
    %v1009 = vunpack.c.h.b16 %v726
    %v1010 = vunpack.c.l.b16 %v727
    %v1011 = vunpack.c.h.b16 %v727
    %v1012 = vunpack.c.l.b16 %v728
    %v1013 = vunpack.c.h.b16 %v728
    %v1014 = vunpack.c.l.b16 %v729
    %v1015 = vunpack.c.h.b16 %v729
    %v1016 = vunpack.c.l.b16 %v730
    %v1017 = vunpack.c.h.b16 %v730
    %v1018 = vunpack.c.l.b16 %v731
    %v1019 = vunpack.c.h.b16 %v731
    %v1020 = vunpack.c.l.b16 %v732
    %v1021 = vunpack.c.h.b16 %v732
    %v1022 = vunpack.c.l.b16 %v733
    %v1023 = vunpack.c.h.b16 %v733
    %v1024 = vunpack.c.l.b16 %v734
    %v1025 = vunpack.c.h.b16 %v734
    %v1026 = vunpack.c.l.b16 %v735
    %v1027 = vunpack.c.h.b16 %v735
    %v1028 = vunpack.c.l.b16 %v736
    %v1029 = vunpack.c.h.b16 %v736
    %v1030 = vunpack.c.l.b16 %v737
    %v1031 = vunpack.c.h.b16 %v737
    %v1032 = vunpack.c.l.b16 %v738
    %v1033 = vunpack.c.h.b16 %v738
    %v1034 = vunpack.c.l.b16 %v739
    %v1035 = vunpack.c.h.b16 %v739
    %v1036 = vunpack.c.l.b16 %v740
    %v1037 = vunpack.c.h.b16 %v740
    %v1038 = vunpack.c.l.b16 %v741
    %v1039 = vunpack.c.h.b16 %v741
    %v1040 = vunpack.c.l.b16 %v742
    %v1041 = vunpack.c.h.b16 %v742
    %v1042 = vpack.c.b16 %v980, %v978
    %v1043 = vpack.c.b16 %v981, %v979
    %v1044 = vpack.c.b16 %v984, %v982
    %v1045 = vpack.c.b16 %v985, %v983
    %v1046 = vpack.c.b16 %v988, %v986
    %v1047 = vpack.c.b16 %v989, %v987
    %v1048 = vpack.c.b16 %v992, %v990
    %v1049 = vpack.c.b16 %v993, %v991
    %v1050 = vpack.c.b16 %v996, %v994
    %v1051 = vpack.c.b16 %v997, %v995
    %v1052 = vpack.c.b16 %v1000, %v998
    %v1053 = vpack.c.b16 %v1001, %v999
    %v1054 = vpack.c.b16 %v1004, %v1002
    %v1055 = vpack.c.b16 %v1005, %v1003
    %v1056 = vpack.c.b16 %v1008, %v1006
    %v1057 = vpack.c.b16 %v1009, %v1007
    %v1058 = vpack.c.b16 %v1012, %v1010
    %v1059 = vpack.c.b16 %v1013, %v1011
    %v1060 = vpack.c.b16 %v1016, %v1014
    %v1061 = vpack.c.b16 %v1017, %v1015
    %v1062 = vpack.c.b16 %v1020, %v1018
    %v1063 = vpack.c.b16 %v1021, %v1019
    %v1064 = vpack.c.b16 %v1024, %v1022
    %v1065 = vpack.c.b16 %v1025, %v1023
    %v1066 = vpack.c.b16 %v1028, %v1026
    %v1067 = vpack.c.b16 %v1029, %v1027
    %v1068 = vpack.c.b16 %v1032, %v1030
    %v1069 = vpack.c.b16 %v1033, %v1031
    %v1070 = vpack.c.b16 %v1036, %v1034
    %v1071 = vpack.c.b16 %v1037, %v1035
    %v1072 = vpack.c.b16 %v1040, %v1038
    %v1073 = vpack.c.b16 %v1041, %v1039
    %1106 = vmatprep.subr.bf16.mxu0 %v1043
    %1107 = vmatpush1.bf16.msra.mxu0 %v1042
    %1108 = vmatprep.subr.bf16.mxu0 %v1045
    %1109 = vmatpush1.bf16.msra.mxu0 %v1044
    %1110 = vmatprep.subr.bf16.mxu0 %v1047
    %1111 = vmatpush1.bf16.msra.mxu0 %v1046
    %1112 = vmatprep.subr.bf16.mxu0 %v1049
    %1113 = vmatpush1.bf16.msra.mxu0 %v1048
    %1114 = vmatprep.subr.bf16.mxu0 %v1051
    %1115 = vmatpush1.bf16.msra.mxu0 %v1050
    %1116 = vmatprep.subr.bf16.mxu0 %v1053
    %1117 = vmatpush1.bf16.msra.mxu0 %v1052
    %1118 = vmatprep.subr.bf16.mxu0 %v1055
    %1119 = vmatpush1.bf16.msra.mxu0 %v1054
    %1120 = vmatprep.subr.bf16.mxu0 %v1057
    %1121 = vmatpush1.bf16.msra.mxu0 %v1056
    %1122 = vmatprep.subr.bf16.mxu0 %v1059
    %1123 = vmatpush1.bf16.msra.mxu0 %v1058
    %1124 = vmatprep.subr.bf16.mxu0 %v1061
    %1125 = vmatpush1.bf16.msra.mxu0 %v1060
    %1126 = vmatprep.subr.bf16.mxu0 %v1063
    %1127 = vmatpush1.bf16.msra.mxu0 %v1062
    %1128 = vmatprep.subr.bf16.mxu0 %v1065
    %1129 = vmatpush1.bf16.msra.mxu0 %v1064
    %1130 = vmatprep.subr.bf16.mxu0 %v1067
    %1131 = vmatpush1.bf16.msra.mxu0 %v1066
    %1132 = vmatprep.subr.bf16.mxu0 %v1069
    %1133 = vmatpush1.bf16.msra.mxu0 %v1068
    %1134 = vmatprep.subr.bf16.mxu0 %v1071
    %1135 = vmatpush1.bf16.msra.mxu0 %v1070
    %1136 = vmatprep.subr.bf16.mxu0 %v1073
    %1137 = vmatpush1.bf16.msra.mxu0 %v1072
    %1138 = vmatprep.mubr.bf16.mxu0 %v668
    %1139 = vmatmul.mubr.bf16.gmra.mrb[0].mxu0 %v667
    %v1140 = vpop.f32.mrb[0].mxu0
    %v1141 = vadd.f32 %v938, %v1140
    %v1142 = vpop.f32.mrb[0].mxu0
    %v1143 = vadd.f32 %v940, %v1142
    %v1144 = vpop.f32.mrb[0].mxu0
    %v1145 = vadd.f32 %v942, %v1144
    %v1146 = vpop.f32.mrb[0].mxu0
    %v1147 = vadd.f32 %v944, %v1146
    %1148 = vdwg.mxu0
    %1149 = vmatprep.subr.bf16.mxu0 %v840
    %1150 = vmatpush1.bf16.msra.mxu0 %v839
    %1151 = vmatprep.subr.bf16.mxu0 %v842
    %1152 = vmatpush1.bf16.msra.mxu0 %v841
    %1153 = vmatprep.subr.bf16.mxu0 %v844
    %1154 = vmatpush1.bf16.msra.mxu0 %v843
    %1155 = vmatprep.subr.bf16.mxu0 %v846
    %1156 = vmatpush1.bf16.msra.mxu0 %v845
    %1157 = vmatprep.subr.bf16.mxu0 %v848
    %1158 = vmatpush1.bf16.msra.mxu0 %v847
    %1159 = vmatprep.subr.bf16.mxu0 %v850
    %1160 = vmatpush1.bf16.msra.mxu0 %v849
    %1161 = vmatprep.subr.bf16.mxu0 %v852
    %1162 = vmatpush1.bf16.msra.mxu0 %v851
    %1163 = vmatprep.subr.bf16.mxu0 %v854
    %1164 = vmatpush1.bf16.msra.mxu0 %v853
    %1165 = vmatprep.subr.bf16.mxu0 %v856
    %1166 = vmatpush1.bf16.msra.mxu0 %v855
    %1167 = vmatprep.subr.bf16.mxu0 %v858
    %1168 = vmatpush1.bf16.msra.mxu0 %v857
    %1169 = vmatprep.subr.bf16.mxu0 %v860
    %1170 = vmatpush1.bf16.msra.mxu0 %v859
    %1171 = vmatprep.subr.bf16.mxu0 %v862
    %1172 = vmatpush1.bf16.msra.mxu0 %v861
    %1173 = vmatprep.subr.bf16.mxu0 %v864
    %1174 = vmatpush1.bf16.msra.mxu0 %v863
    %1175 = vmatprep.subr.bf16.mxu0 %v866
    %1176 = vmatpush1.bf16.msra.mxu0 %v865
    %1177 = vmatprep.subr.bf16.mxu0 %v868
    %1178 = vmatpush1.bf16.msra.mxu0 %v867
    %1179 = vmatprep.subr.bf16.mxu0 %v870
    %1180 = vmatpush1.bf16.msra.mxu0 %v869
    %1181 = vmatprep.mubr.bf16.mxu0 %v668
    %1182 = vmatmul.mubr.bf16.gmra.mrb[0].mxu0 %v667
    %v1183 = vpop.f32.mrb[0].mxu0
    %v1184 = vadd.f32 %v1141, %v1183
    %v1185 = vpop.f32.mrb[0].mxu0
    %v1186 = vadd.f32 %v1143, %v1185
    %v1187 = vpop.f32.mrb[0].mxu0
    %v1188 = vadd.f32 %v1145, %v1187
    %v1189 = vpop.f32.mrb[0].mxu0
    %v1190 = vadd.f32 %v1147, %v1189
    %1191 = vdwg.mxu0
    %v1192 = vld [vmem:[%s17] sm:$0x3]
    %v1194 = vlaneseq
    %v1195 = vshrl.u32 %v1194, 7
    %v1196 = vsub.s32 0, %v1195
    %v1197 = vrot.slane %v1192, %v1196
    %v1198 = vlaneseq
    %v1199 = vshrl.u32 %v1198, 7
    %v1200 = vsub.s32 1, %v1199
    %v1201 = vrot.slane %v1192, %v1200
    %v1204 = vadd.f32 %v1184, %v1197
    %v1205 = vadd.f32 %v1186, %v1201
    %v1206 = vadd.f32 %v1188, %v1197
    %v1207 = vadd.f32 %v1190, %v1201
    %vm1208 = vcmp.gt.f32.partialorder %v1204, 0.0
    %vm1209 = vcmp.gt.f32.partialorder %v1205, 0.0
    %vm1210 = vcmp.gt.f32.partialorder %v1206, 0.0
    %vm1211 = vcmp.gt.f32.partialorder %v1207, 0.0
    %v1212 = vmul.f32 %v1204, 0.2
    %v1213 = vmul.f32 %v1205, 0.2
    %v1214 = vmul.f32 %v1206, 0.2
    %v1215 = vmul.f32 %v1207, 0.2
    %v1216 = vsel %vm1208, %v1204, %v1212
    %v1217 = vsel %vm1209, %v1205, %v1213
    %v1218 = vsel %vm1210, %v1206, %v1214
    %v1219 = vsel %vm1211, %v1207, %v1215
    %v1220 = vpack.c.bf16 %v1218, %v1216
    %v1221 = vpack.c.bf16 %v1219, %v1217
    %v1222 = vunpack.c.l.bf16 %v1220
    %v1223 = vunpack.c.l.bf16 %v1221
    %v1224 = vunpack.c.h.bf16 %v1220
    %v1225 = vunpack.c.h.bf16 %v1221
    %v1226 = vsub.f32 %v1216, %v1222
    %v1227 = vsub.f32 %v1217, %v1223
    %v1228 = vsub.f32 %v1218, %v1224
    %v1229 = vsub.f32 %v1219, %v1225
    %v1230 = vpack.c.bf16 %v1228, %v1226
    %v1231 = vpack.c.bf16 %v1229, %v1227
    %v1232 = vld [vmem:[#allocation14] sm:$0xff]
    %v1233 = vld [vmem:[#allocation14 + $0x8] sm:$0xff]
    %v1234 = vld [vmem:[#allocation14 + $0x10] sm:$0xff]
    %v1235 = vld [vmem:[#allocation14 + $0x18] sm:$0xff]
    %v1236 = vld [vmem:[#allocation14 + $0x20] sm:$0xff]
    %v1237 = vld [vmem:[#allocation14 + $0x28] sm:$0xff]
    %v1238 = vld [vmem:[#allocation14 + $0x30] sm:$0xff]
    %v1239 = vld [vmem:[#allocation14 + $0x38] sm:$0xff]
    %v1240 = vld [vmem:[#allocation14 + $0x40] sm:$0xff]
    %v1241 = vld [vmem:[#allocation14 + $0x48] sm:$0xff]
    %v1242 = vld [vmem:[#allocation14 + $0x50] sm:$0xff]
    %v1243 = vld [vmem:[#allocation14 + $0x58] sm:$0xff]
    %v1244 = vld [vmem:[#allocation14 + $0x60] sm:$0xff]
    %v1245 = vld [vmem:[#allocation14 + $0x68] sm:$0xff]
    %v1246 = vld [vmem:[#allocation14 + $0x70] sm:$0xff]
    %v1247 = vld [vmem:[#allocation14 + $0x78] sm:$0xff]
    %v1248 = vld [vmem:[#allocation14 + $0x80] sm:$0xff]
    %v1249 = vld [vmem:[#allocation14 + $0x88] sm:$0xff]
    %v1250 = vld [vmem:[#allocation14 + $0x90] sm:$0xff]
    %v1251 = vld [vmem:[#allocation14 + $0x98] sm:$0xff]
    %v1252 = vld [vmem:[#allocation14 + $0xa0] sm:$0xff]
    %v1253 = vld [vmem:[#allocation14 + $0xa8] sm:$0xff]
    %v1254 = vld [vmem:[#allocation14 + $0xb0] sm:$0xff]
    %v1255 = vld [vmem:[#allocation14 + $0xb8] sm:$0xff]
    %v1256 = vld [vmem:[#allocation14 + $0xc0] sm:$0xff]
    %v1257 = vld [vmem:[#allocation14 + $0xc8] sm:$0xff]
    %v1258 = vld [vmem:[#allocation14 + $0xd0] sm:$0xff]
    %v1259 = vld [vmem:[#allocation14 + $0xd8] sm:$0xff]
    %v1260 = vld [vmem:[#allocation14 + $0xe0] sm:$0xff]
    %v1261 = vld [vmem:[#allocation14 + $0xe8] sm:$0xff]
    %v1262 = vld [vmem:[#allocation14 + $0xf0] sm:$0xff]
    %v1263 = vld [vmem:[#allocation14 + $0xf8] sm:$0xff]
    %v1264 = vld [vmem:[#allocation16] sm:$0xff]
    %v1265 = vld [vmem:[#allocation16 + $0x8] sm:$0xff]
    %v1266 = vld [vmem:[#allocation16 + $0x10] sm:$0xff]
    %v1267 = vld [vmem:[#allocation16 + $0x18] sm:$0xff]
    %v1268 = vld [vmem:[#allocation16 + $0x20] sm:$0xff]
    %v1269 = vld [vmem:[#allocation16 + $0x28] sm:$0xff]
    %v1270 = vld [vmem:[#allocation16 + $0x30] sm:$0xff]
    %v1271 = vld [vmem:[#allocation16 + $0x38] sm:$0xff]
    %v1272 = vld [vmem:[#allocation16 + $0x40] sm:$0xff]
    %v1273 = vld [vmem:[#allocation16 + $0x48] sm:$0xff]
    %v1274 = vld [vmem:[#allocation16 + $0x50] sm:$0xff]
    %v1275 = vld [vmem:[#allocation16 + $0x58] sm:$0xff]
    %v1276 = vld [vmem:[#allocation16 + $0x60] sm:$0xff]
    %v1277 = vld [vmem:[#allocation16 + $0x68] sm:$0xff]
    %v1278 = vld [vmem:[#allocation16 + $0x70] sm:$0xff]
    %v1279 = vld [vmem:[#allocation16 + $0x78] sm:$0xff]
    %v1280 = vld [vmem:[#allocation16 + $0x80] sm:$0xff]
    %v1281 = vld [vmem:[#allocation16 + $0x88] sm:$0xff]
    %v1282 = vld [vmem:[#allocation16 + $0x90] sm:$0xff]
    %v1283 = vld [vmem:[#allocation16 + $0x98] sm:$0xff]
    %v1284 = vld [vmem:[#allocation16 + $0xa0] sm:$0xff]
    %v1285 = vld [vmem:[#allocation16 + $0xa8] sm:$0xff]
    %v1286 = vld [vmem:[#allocation16 + $0xb0] sm:$0xff]
    %v1287 = vld [vmem:[#allocation16 + $0xb8] sm:$0xff]
    %v1288 = vld [vmem:[#allocation16 + $0xc0] sm:$0xff]
    %v1289 = vld [vmem:[#allocation16 + $0xc8] sm:$0xff]
    %v1290 = vld [vmem:[#allocation16 + $0xd0] sm:$0xff]
    %v1291 = vld [vmem:[#allocation16 + $0xd8] sm:$0xff]
    %v1292 = vld [vmem:[#allocation16 + $0xe0] sm:$0xff]
    %v1293 = vld [vmem:[#allocation16 + $0xe8] sm:$0xff]
    %v1294 = vld [vmem:[#allocation16 + $0xf0] sm:$0xff]
    %v1295 = vld [vmem:[#allocation16 + $0xf8] sm:$0xff]
    %v1328 = vunpack.c.l.b16 %v1232
    %v1329 = vunpack.c.h.b16 %v1232
    %v1330 = vunpack.c.l.b16 %v1233
    %v1331 = vunpack.c.h.b16 %v1233
    %v1332 = vunpack.c.l.b16 %v1234
    %v1333 = vunpack.c.h.b16 %v1234
    %v1334 = vunpack.c.l.b16 %v1235
    %v1335 = vunpack.c.h.b16 %v1235
    %v1336 = vunpack.c.l.b16 %v1236
    %v1337 = vunpack.c.h.b16 %v1236
    %v1338 = vunpack.c.l.b16 %v1237
    %v1339 = vunpack.c.h.b16 %v1237
    %v1340 = vunpack.c.l.b16 %v1238
    %v1341 = vunpack.c.h.b16 %v1238
    %v1342 = vunpack.c.l.b16 %v1239
    %v1343 = vunpack.c.h.b16 %v1239
    %v1344 = vunpack.c.l.b16 %v1240
    %v1345 = vunpack.c.h.b16 %v1240
    %v1346 = vunpack.c.l.b16 %v1241
    %v1347 = vunpack.c.h.b16 %v1241
    %v1348 = vunpack.c.l.b16 %v1242
    %v1349 = vunpack.c.h.b16 %v1242
    %v1350 = vunpack.c.l.b16 %v1243
    %v1351 = vunpack.c.h.b16 %v1243
    %v1352 = vunpack.c.l.b16 %v1244
    %v1353 = vunpack.c.h.b16 %v1244
    %v1354 = vunpack.c.l.b16 %v1245
    %v1355 = vunpack.c.h.b16 %v1245
    %v1356 = vunpack.c.l.b16 %v1246
    %v1357 = vunpack.c.h.b16 %v1246
    %v1358 = vunpack.c.l.b16 %v1247
    %v1359 = vunpack.c.h.b16 %v1247
    %v1360 = vunpack.c.l.b16 %v1248
    %v1361 = vunpack.c.h.b16 %v1248
    %v1362 = vunpack.c.l.b16 %v1249
    %v1363 = vunpack.c.h.b16 %v1249
    %v1364 = vunpack.c.l.b16 %v1250
    %v1365 = vunpack.c.h.b16 %v1250
    %v1366 = vunpack.c.l.b16 %v1251
    %v1367 = vunpack.c.h.b16 %v1251
    %v1368 = vunpack.c.l.b16 %v1252
    %v1369 = vunpack.c.h.b16 %v1252
    %v1370 = vunpack.c.l.b16 %v1253
    %v1371 = vunpack.c.h.b16 %v1253
    %v1372 = vunpack.c.l.b16 %v1254
    %v1373 = vunpack.c.h.b16 %v1254
    %v1374 = vunpack.c.l.b16 %v1255
    %v1375 = vunpack.c.h.b16 %v1255
    %v1376 = vunpack.c.l.b16 %v1256
    %v1377 = vunpack.c.h.b16 %v1256
    %v1378 = vunpack.c.l.b16 %v1257
    %v1379 = vunpack.c.h.b16 %v1257
    %v1380 = vunpack.c.l.b16 %v1258
    %v1381 = vunpack.c.h.b16 %v1258
    %v1382 = vunpack.c.l.b16 %v1259
    %v1383 = vunpack.c.h.b16 %v1259
    %v1384 = vunpack.c.l.b16 %v1260
    %v1385 = vunpack.c.h.b16 %v1260
    %v1386 = vunpack.c.l.b16 %v1261
    %v1387 = vunpack.c.h.b16 %v1261
    %v1388 = vunpack.c.l.b16 %v1262
    %v1389 = vunpack.c.h.b16 %v1262
    %v1390 = vunpack.c.l.b16 %v1263
    %v1391 = vunpack.c.h.b16 %v1263
    %v1392 = vpack.c.b16 %v1330, %v1328
    %v1393 = vpack.c.b16 %v1331, %v1329
    %v1394 = vpack.c.b16 %v1334, %v1332
    %v1395 = vpack.c.b16 %v1335, %v1333
    %v1396 = vpack.c.b16 %v1338, %v1336
    %v1397 = vpack.c.b16 %v1339, %v1337
    %v1398 = vpack.c.b16 %v1342, %v1340
    %v1399 = vpack.c.b16 %v1343, %v1341
    %v1400 = vpack.c.b16 %v1346, %v1344
    %v1401 = vpack.c.b16 %v1347, %v1345
    %v1402 = vpack.c.b16 %v1350, %v1348
    %v1403 = vpack.c.b16 %v1351, %v1349
    %v1404 = vpack.c.b16 %v1354, %v1352
    %v1405 = vpack.c.b16 %v1355, %v1353
    %v1406 = vpack.c.b16 %v1358, %v1356
    %v1407 = vpack.c.b16 %v1359, %v1357
    %v1408 = vpack.c.b16 %v1362, %v1360
    %v1409 = vpack.c.b16 %v1363, %v1361
    %v1410 = vpack.c.b16 %v1366, %v1364
    %v1411 = vpack.c.b16 %v1367, %v1365
    %v1412 = vpack.c.b16 %v1370, %v1368
    %v1413 = vpack.c.b16 %v1371, %v1369
    %v1414 = vpack.c.b16 %v1374, %v1372
    %v1415 = vpack.c.b16 %v1375, %v1373
    %v1416 = vpack.c.b16 %v1378, %v1376
    %v1417 = vpack.c.b16 %v1379, %v1377
    %v1418 = vpack.c.b16 %v1382, %v1380
    %v1419 = vpack.c.b16 %v1383, %v1381
    %v1420 = vpack.c.b16 %v1386, %v1384
    %v1421 = vpack.c.b16 %v1387, %v1385
    %v1422 = vpack.c.b16 %v1390, %v1388
    %v1423 = vpack.c.b16 %v1391, %v1389
    %1456 = vmatprep.subr.bf16.mxu0 %v1393
    %1457 = vmatpush1.bf16.msra.mxu0 %v1392
    %1458 = vmatprep.subr.bf16.mxu0 %v1395
    %1459 = vmatpush1.bf16.msra.mxu0 %v1394
    %1460 = vmatprep.subr.bf16.mxu0 %v1397
    %1461 = vmatpush1.bf16.msra.mxu0 %v1396
    %1462 = vmatprep.subr.bf16.mxu0 %v1399
    %1463 = vmatpush1.bf16.msra.mxu0 %v1398
    %1464 = vmatprep.subr.bf16.mxu0 %v1401
    %1465 = vmatpush1.bf16.msra.mxu0 %v1400
    %1466 = vmatprep.subr.bf16.mxu0 %v1403
    %1467 = vmatpush1.bf16.msra.mxu0 %v1402
    %1468 = vmatprep.subr.bf16.mxu0 %v1405
    %1469 = vmatpush1.bf16.msra.mxu0 %v1404
    %1470 = vmatprep.subr.bf16.mxu0 %v1407
    %1471 = vmatpush1.bf16.msra.mxu0 %v1406
    %1472 = vmatprep.subr.bf16.mxu0 %v1409
    %1473 = vmatpush1.bf16.msra.mxu0 %v1408
    %1474 = vmatprep.subr.bf16.mxu0 %v1411
    %1475 = vmatpush1.bf16.msra.mxu0 %v1410
    %1476 = vmatprep.subr.bf16.mxu0 %v1413
    %1477 = vmatpush1.bf16.msra.mxu0 %v1412
    %1478 = vmatprep.subr.bf16.mxu0 %v1415
    %1479 = vmatpush1.bf16.msra.mxu0 %v1414
    %1480 = vmatprep.subr.bf16.mxu0 %v1417
    %1481 = vmatpush1.bf16.msra.mxu0 %v1416
    %1482 = vmatprep.subr.bf16.mxu0 %v1419
    %1483 = vmatpush1.bf16.msra.mxu0 %v1418
    %1484 = vmatprep.subr.bf16.mxu0 %v1421
    %1485 = vmatpush1.bf16.msra.mxu0 %v1420
    %1486 = vmatprep.subr.bf16.mxu0 %v1423
    %1487 = vmatpush1.bf16.msra.mxu0 %v1422
    %1488 = vmatprep.mubr.bf16.mxu0 %v1231
    %1489 = vmatmul.mubr.bf16.gmra.mrb[0].mxu0 %v1230
    %v1490 = vpop.f32.mrb[0].mxu0
    %v1491 = vadd.f32 0.0, %v1490
    %v1492 = vpop.f32.mrb[0].mxu0
    %v1493 = vadd.f32 0.0, %v1492
    %v1494 = vpop.f32.mrb[0].mxu0
    %v1495 = vadd.f32 0.0, %v1494
    %v1496 = vpop.f32.mrb[0].mxu0
    %v1497 = vadd.f32 0.0, %v1496
    %1498 = vdwg.mxu0
    %v1531 = vunpack.c.l.b16 %v1264
    %v1532 = vunpack.c.h.b16 %v1264
    %v1533 = vunpack.c.l.b16 %v1265
    %v1534 = vunpack.c.h.b16 %v1265
    %v1535 = vunpack.c.l.b16 %v1266
    %v1536 = vunpack.c.h.b16 %v1266
    %v1537 = vunpack.c.l.b16 %v1267
    %v1538 = vunpack.c.h.b16 %v1267
    %v1539 = vunpack.c.l.b16 %v1268
    %v1540 = vunpack.c.h.b16 %v1268
    %v1541 = vunpack.c.l.b16 %v1269
    %v1542 = vunpack.c.h.b16 %v1269
    %v1543 = vunpack.c.l.b16 %v1270
    %v1544 = vunpack.c.h.b16 %v1270
    %v1545 = vunpack.c.l.b16 %v1271
    %v1546 = vunpack.c.h.b16 %v1271
    %v1547 = vunpack.c.l.b16 %v1272
    %v1548 = vunpack.c.h.b16 %v1272
    %v1549 = vunpack.c.l.b16 %v1273
    %v1550 = vunpack.c.h.b16 %v1273
    %v1551 = vunpack.c.l.b16 %v1274
    %v1552 = vunpack.c.h.b16 %v1274
    %v1553 = vunpack.c.l.b16 %v1275
    %v1554 = vunpack.c.h.b16 %v1275
    %v1555 = vunpack.c.l.b16 %v1276
    %v1556 = vunpack.c.h.b16 %v1276
    %v1557 = vunpack.c.l.b16 %v1277
    %v1558 = vunpack.c.h.b16 %v1277
    %v1559 = vunpack.c.l.b16 %v1278
    %v1560 = vunpack.c.h.b16 %v1278
    %v1561 = vunpack.c.l.b16 %v1279
    %v1562 = vunpack.c.h.b16 %v1279
    %v1563 = vunpack.c.l.b16 %v1280
    %v1564 = vunpack.c.h.b16 %v1280
    %v1565 = vunpack.c.l.b16 %v1281
    %v1566 = vunpack.c.h.b16 %v1281
    %v1567 = vunpack.c.l.b16 %v1282
    %v1568 = vunpack.c.h.b16 %v1282
    %v1569 = vunpack.c.l.b16 %v1283
    %v1570 = vunpack.c.h.b16 %v1283
    %v1571 = vunpack.c.l.b16 %v1284
    %v1572 = vunpack.c.h.b16 %v1284
    %v1573 = vunpack.c.l.b16 %v1285
    %v1574 = vunpack.c.h.b16 %v1285
    %v1575 = vunpack.c.l.b16 %v1286
    %v1576 = vunpack.c.h.b16 %v1286
    %v1577 = vunpack.c.l.b16 %v1287
    %v1578 = vunpack.c.h.b16 %v1287
    %v1579 = vunpack.c.l.b16 %v1288
    %v1580 = vunpack.c.h.b16 %v1288
    %v1581 = vunpack.c.l.b16 %v1289
    %v1582 = vunpack.c.h.b16 %v1289
    %v1583 = vunpack.c.l.b16 %v1290
    %v1584 = vunpack.c.h.b16 %v1290
    %v1585 = vunpack.c.l.b16 %v1291
    %v1586 = vunpack.c.h.b16 %v1291
    %v1587 = vunpack.c.l.b16 %v1292
    %v1588 = vunpack.c.h.b16 %v1292
    %v1589 = vunpack.c.l.b16 %v1293
    %v1590 = vunpack.c.h.b16 %v1293
    %v1591 = vunpack.c.l.b16 %v1294
    %v1592 = vunpack.c.h.b16 %v1294
    %v1593 = vunpack.c.l.b16 %v1295
    %v1594 = vunpack.c.h.b16 %v1295
    %v1595 = vpack.c.b16 %v1533, %v1531
    %v1596 = vpack.c.b16 %v1534, %v1532
    %v1597 = vpack.c.b16 %v1537, %v1535
    %v1598 = vpack.c.b16 %v1538, %v1536
    %v1599 = vpack.c.b16 %v1541, %v1539
    %v1600 = vpack.c.b16 %v1542, %v1540
    %v1601 = vpack.c.b16 %v1545, %v1543
    %v1602 = vpack.c.b16 %v1546, %v1544
    %v1603 = vpack.c.b16 %v1549, %v1547
    %v1604 = vpack.c.b16 %v1550, %v1548
    %v1605 = vpack.c.b16 %v1553, %v1551
    %v1606 = vpack.c.b16 %v1554, %v1552
    %v1607 = vpack.c.b16 %v1557, %v1555
    %v1608 = vpack.c.b16 %v1558, %v1556
    %v1609 = vpack.c.b16 %v1561, %v1559
    %v1610 = vpack.c.b16 %v1562, %v1560
    %v1611 = vpack.c.b16 %v1565, %v1563
    %v1612 = vpack.c.b16 %v1566, %v1564
    %v1613 = vpack.c.b16 %v1569, %v1567
    %v1614 = vpack.c.b16 %v1570, %v1568
    %v1615 = vpack.c.b16 %v1573, %v1571
    %v1616 = vpack.c.b16 %v1574, %v1572
    %v1617 = vpack.c.b16 %v1577, %v1575
    %v1618 = vpack.c.b16 %v1578, %v1576
    %v1619 = vpack.c.b16 %v1581, %v1579
    %v1620 = vpack.c.b16 %v1582, %v1580
    %v1621 = vpack.c.b16 %v1585, %v1583
    %v1622 = vpack.c.b16 %v1586, %v1584
    %v1623 = vpack.c.b16 %v1589, %v1587
    %v1624 = vpack.c.b16 %v1590, %v1588
    %v1625 = vpack.c.b16 %v1593, %v1591
    %v1626 = vpack.c.b16 %v1594, %v1592
    %1659 = vmatprep.subr.bf16.mxu0 %v1596
    %1660 = vmatpush1.bf16.msra.mxu0 %v1595
    %1661 = vmatprep.subr.bf16.mxu0 %v1598
    %1662 = vmatpush1.bf16.msra.mxu0 %v1597
    %1663 = vmatprep.subr.bf16.mxu0 %v1600
    %1664 = vmatpush1.bf16.msra.mxu0 %v1599
    %1665 = vmatprep.subr.bf16.mxu0 %v1602
    %1666 = vmatpush1.bf16.msra.mxu0 %v1601
    %1667 = vmatprep.subr.bf16.mxu0 %v1604
    %1668 = vmatpush1.bf16.msra.mxu0 %v1603
    %1669 = vmatprep.subr.bf16.mxu0 %v1606
    %1670 = vmatpush1.bf16.msra.mxu0 %v1605
    %1671 = vmatprep.subr.bf16.mxu0 %v1608
    %1672 = vmatpush1.bf16.msra.mxu0 %v1607
    %1673 = vmatprep.subr.bf16.mxu0 %v1610
    %1674 = vmatpush1.bf16.msra.mxu0 %v1609
    %1675 = vmatprep.subr.bf16.mxu0 %v1612
    %1676 = vmatpush1.bf16.msra.mxu0 %v1611
    %1677 = vmatprep.subr.bf16.mxu0 %v1614
    %1678 = vmatpush1.bf16.msra.mxu0 %v1613
    %1679 = vmatprep.subr.bf16.mxu0 %v1616
    %1680 = vmatpush1.bf16.msra.mxu0 %v1615
    %1681 = vmatprep.subr.bf16.mxu0 %v1618
    %1682 = vmatpush1.bf16.msra.mxu0 %v1617
    %1683 = vmatprep.subr.bf16.mxu0 %v1620
    %1684 = vmatpush1.bf16.msra.mxu0 %v1619
    %1685 = vmatprep.subr.bf16.mxu0 %v1622
    %1686 = vmatpush1.bf16.msra.mxu0 %v1621
    %1687 = vmatprep.subr.bf16.mxu0 %v1624
    %1688 = vmatpush1.bf16.msra.mxu0 %v1623
    %1689 = vmatprep.subr.bf16.mxu0 %v1626
    %1690 = vmatpush1.bf16.msra.mxu0 %v1625
    %1691 = vmatprep.mubr.bf16.mxu0 %v1221
    %1692 = vmatmul.mubr.bf16.gmra.mrb[0].mxu0 %v1220
    %v1693 = vpop.f32.mrb[0].mxu0
    %v1694 = vadd.f32 %v1491, %v1693
    %v1695 = vpop.f32.mrb[0].mxu0
    %v1696 = vadd.f32 %v1493, %v1695
    %v1697 = vpop.f32.mrb[0].mxu0
    %v1698 = vadd.f32 %v1495, %v1697
    %v1699 = vpop.f32.mrb[0].mxu0
    %v1700 = vadd.f32 %v1497, %v1699
    %1701 = vdwg.mxu0
    %1702 = vmatprep.subr.bf16.mxu0 %v1393
    %1703 = vmatpush1.bf16.msra.mxu0 %v1392
    %1704 = vmatprep.subr.bf16.mxu0 %v1395
    %1705 = vmatpush1.bf16.msra.mxu0 %v1394
    %1706 = vmatprep.subr.bf16.mxu0 %v1397
    %1707 = vmatpush1.bf16.msra.mxu0 %v1396
    %1708 = vmatprep.subr.bf16.mxu0 %v1399
    %1709 = vmatpush1.bf16.msra.mxu0 %v1398
    %1710 = vmatprep.subr.bf16.mxu0 %v1401
    %1711 = vmatpush1.bf16.msra.mxu0 %v1400
    %1712 = vmatprep.subr.bf16.mxu0 %v1403
    %1713 = vmatpush1.bf16.msra.mxu0 %v1402
    %1714 = vmatprep.subr.bf16.mxu0 %v1405
    %1715 = vmatpush1.bf16.msra.mxu0 %v1404
    %1716 = vmatprep.subr.bf16.mxu0 %v1407
    %1717 = vmatpush1.bf16.msra.mxu0 %v1406
    %1718 = vmatprep.subr.bf16.mxu0 %v1409
    %1719 = vmatpush1.bf16.msra.mxu0 %v1408
    %1720 = vmatprep.subr.bf16.mxu0 %v1411
    %1721 = vmatpush1.bf16.msra.mxu0 %v1410
    %1722 = vmatprep.subr.bf16.mxu0 %v1413
    %1723 = vmatpush1.bf16.msra.mxu0 %v1412
    %1724 = vmatprep.subr.bf16.mxu0 %v1415
    %1725 = vmatpush1.bf16.msra.mxu0 %v1414
    %1726 = vmatprep.subr.bf16.mxu0 %v1417
    %1727 = vmatpush1.bf16.msra.mxu0 %v1416
    %1728 = vmatprep.subr.bf16.mxu0 %v1419
    %1729 = vmatpush1.bf16.msra.mxu0 %v1418
    %1730 = vmatprep.subr.bf16.mxu0 %v1421
    %1731 = vmatpush1.bf16.msra.mxu0 %v1420
    %1732 = vmatprep.subr.bf16.mxu0 %v1423
    %1733 = vmatpush1.bf16.msra.mxu0 %v1422
    %1734 = vmatprep.mubr.bf16.mxu0 %v1221
    %1735 = vmatmul.mubr.bf16.gmra.mrb[0].mxu0 %v1220
    %v1736 = vpop.f32.mrb[0].mxu0
    %v1737 = vadd.f32 %v1694, %v1736
    %v1738 = vpop.f32.mrb[0].mxu0
    %v1739 = vadd.f32 %v1696, %v1738
    %v1740 = vpop.f32.mrb[0].mxu0
    %v1741 = vadd.f32 %v1698, %v1740
    %v1742 = vpop.f32.mrb[0].mxu0
    %v1743 = vadd.f32 %v1700, %v1742
    %1744 = vdwg.mxu0
    %v1745 = vld [vmem:[%s23] sm:$0x3]
    %v1747 = vlaneseq
    %v1748 = vshrl.u32 %v1747, 7
    %v1749 = vsub.s32 0, %v1748
    %v1750 = vrot.slane %v1745, %v1749
    %v1751 = vlaneseq
    %v1752 = vshrl.u32 %v1751, 7
    %v1753 = vsub.s32 1, %v1752
    %v1754 = vrot.slane %v1745, %v1753
    %v1757 = vadd.f32 %v1737, %v1750
    %v1758 = vadd.f32 %v1739, %v1754
    %v1759 = vadd.f32 %v1741, %v1750
    %v1760 = vadd.f32 %v1743, %v1754
    %v1761 = vadd.f32 %v663, %v1757
    %v1762 = vadd.f32 %v664, %v1758
    %v1763 = vadd.f32 %v665, %v1759
    %v1764 = vadd.f32 %v666, %v1760
    %vm1765 = vcmp.gt.f32.partialorder %v1761, 0.0
    %vm1766 = vcmp.gt.f32.partialorder %v1762, 0.0
    %vm1767 = vcmp.gt.f32.partialorder %v1763, 0.0
    %vm1768 = vcmp.gt.f32.partialorder %v1764, 0.0
    %v1769 = vmul.f32 %v1761, 0.2
    %v1770 = vmul.f32 %v1762, 0.2
    %v1771 = vmul.f32 %v1763, 0.2
    %v1772 = vmul.f32 %v1764, 0.2
    %v1773 = vsel %vm1765, %v1761, %v1769
    %v1774 = vsel %vm1766, %v1762, %v1770
    %v1775 = vsel %vm1767, %v1763, %v1771
    %v1776 = vsel %vm1768, %v1764, %v1772
    %v1777 = vld [vmem:[#allocation5] sm:$0xff]
    %v1778 = vld [vmem:[#allocation5 + $0x18] sm:$0xff]
    %v1779 = vld [vmem:[#allocation5 + $0x30] sm:$0xff]
    %v1780 = vld [vmem:[#allocation5 + $0x48] sm:$0xff]
    %v1781 = vld [vmem:[#allocation5 + $0x60] sm:$0xff]
    %v1782 = vld [vmem:[#allocation5 + $0x78] sm:$0xff]
    %v1783 = vld [vmem:[#allocation5 + $0x90] sm:$0x33]
    %v1791 = vunpack.c.l.b16 %v1777
    %v1792 = vunpack.c.h.b16 %v1777
    %v1793 = vunpack.c.l.b16 %v1778
    %v1794 = vunpack.c.h.b16 %v1778
    %v1795 = vunpack.c.l.b16 %v1779
    %v1796 = vunpack.c.h.b16 %v1779
    %v1797 = vunpack.c.l.b16 %v1780
    %v1798 = vunpack.c.h.b16 %v1780
    %v1799 = vunpack.c.l.b16 %v1781
    %v1800 = vunpack.c.h.b16 %v1781
    %v1801 = vunpack.c.l.b16 %v1782
    %v1802 = vunpack.c.h.b16 %v1782
    %v1803 = vunpack.c.l.b16 %v1783
    %v1804 = vunpack.c.h.b16 %v1783
    %v1805 = vpack.c.b16 %v1793, %v1791
    %v1806 = vpack.c.b16 %v1794, %v1792
    %v1807 = vpack.c.b16 %v1797, %v1795
    %v1808 = vpack.c.b16 %v1798, %v1796
    %v1809 = vpack.c.b16 %v1801, %v1799
    %v1810 = vpack.c.b16 %v1802, %v1800
    %v1811 = vpack.c.b16 %v1803, %v1803
    %v1812 = vpack.c.b16 %v1804, %v1804
    %v1820 = vand.u32 %v1811, %v459
    %v1823 = vand.u32 %v1812, %v459
    %1825 = vmatprep.subr.bf16.mxu0 %v1806
    %1826 = vmatpush1.bf16.msra.mxu0 %v1805
    %1827 = vmatprep.subr.bf16.mxu0 %v1808
    %1828 = vmatpush1.bf16.msra.mxu0 %v1807
    %1829 = vmatprep.subr.bf16.mxu0 %v1810
    %1830 = vmatpush1.bf16.msra.mxu0 %v1809
    %1831 = vmatprep.subr.bf16.mxu0 %v1823
    %1832 = vmatpush1.bf16.msra.mxu0 %v1820
    %1833 = vmatprep.subr.bf16.mxu0 0
    %1834 = vmatpush1.bf16.msra.mxu0 0
    %1835 = vmatprep.subr.bf16.mxu0 0
    %1836 = vmatpush1.bf16.msra.mxu0 0
    %1837 = vmatprep.subr.bf16.mxu0 0
    %1838 = vmatpush1.bf16.msra.mxu0 0
    %1839 = vmatprep.subr.bf16.mxu0 0
    %1840 = vmatpush1.bf16.msra.mxu0 0
    %1841 = vmatprep.subr.bf16.mxu0 0
    %1842 = vmatpush1.bf16.msra.mxu0 0
    %1843 = vmatprep.subr.bf16.mxu0 0
    %1844 = vmatpush1.bf16.msra.mxu0 0
    %1845 = vmatprep.subr.bf16.mxu0 0
    %1846 = vmatpush1.bf16.msra.mxu0 0
    %1847 = vmatprep.subr.bf16.mxu0 0
    %1848 = vmatpush1.bf16.msra.mxu0 0
    %1849 = vmatprep.subr.bf16.mxu0 0
    %1850 = vmatpush1.bf16.msra.mxu0 0
    %1851 = vmatprep.subr.bf16.mxu0 0
    %1852 = vmatpush1.bf16.msra.mxu0 0
    %1853 = vmatprep.subr.bf16.mxu0 0
    %1854 = vmatpush1.bf16.msra.mxu0 0
    %1855 = vmatprep.subr.bf16.mxu0 0
    %1856 = vmatpush1.bf16.msra.mxu0 0
    %1857 = vmatprep.mubr.bf16.mxu0 0
    %1858 = vmatmul.mubr.bf16.gmra.mrb[0].mxu0 %v454
    %v1859 = vpop.f32.mrb[0].mxu0
    %v1860 = vadd.f32 0.0, %v1859
    %v1861 = vpop.f32.mrb[0].mxu0
    %v1862 = vadd.f32 0.0, %v1861
    %v1863 = vpop.f32.mrb[0].mxu0
    %v1864 = vadd.f32 0.0, %v1863
    %v1865 = vpop.f32.mrb[0].mxu0
    %v1866 = vadd.f32 0.0, %v1865
    %1867 = vdwg.mxu0
    %1868 = vmatprep.subr.bf16.mxu0 %v1806
    %1869 = vmatpush1.bf16.msra.mxu0 %v1805
    %1870 = vmatprep.subr.bf16.mxu0 %v1808
    %1871 = vmatpush1.bf16.msra.mxu0 %v1807
    %1872 = vmatprep.subr.bf16.mxu0 %v1810
    %1873 = vmatpush1.bf16.msra.mxu0 %v1809
    %1874 = vmatprep.subr.bf16.mxu0 %v1823
    %1875 = vmatpush1.bf16.msra.mxu0 %v1820
    %1876 = vmatprep.subr.bf16.mxu0 0
    %1877 = vmatpush1.bf16.msra.mxu0 0
    %1878 = vmatprep.subr.bf16.mxu0 0
    %1879 = vmatpush1.bf16.msra.mxu0 0
    %1880 = vmatprep.subr.bf16.mxu0 0
    %1881 = vmatpush1.bf16.msra.mxu0 0
    %1882 = vmatprep.subr.bf16.mxu0 0
    %1883 = vmatpush1.bf16.msra.mxu0 0
    %1884 = vmatprep.subr.bf16.mxu0 0
    %1885 = vmatpush1.bf16.msra.mxu0 0
    %1886 = vmatprep.subr.bf16.mxu0 0
    %1887 = vmatpush1.bf16.msra.mxu0 0
    %1888 = vmatprep.subr.bf16.mxu0 0
    %1889 = vmatpush1.bf16.msra.mxu0 0
    %1890 = vmatprep.subr.bf16.mxu0 0
    %1891 = vmatpush1.bf16.msra.mxu0 0
    %1892 = vmatprep.subr.bf16.mxu0 0
    %1893 = vmatpush1.bf16.msra.mxu0 0
    %1894 = vmatprep.subr.bf16.mxu0 0
    %1895 = vmatpush1.bf16.msra.mxu0 0
    %1896 = vmatprep.subr.bf16.mxu0 0
    %1897 = vmatpush1.bf16.msra.mxu0 0
    %1898 = vmatprep.subr.bf16.mxu0 0
    %1899 = vmatpush1.bf16.msra.mxu0 0
    %1900 = vmatprep.mubr.bf16.mxu0 0
    %1901 = vmatmul.mubr.bf16.gmra.mrb[0].mxu0 %v545
    %v1902 = vpop.f32.mrb[0].mxu0
    %v1903 = vadd.f32 %v1860, %v1902
    %v1904 = vpop.f32.mrb[0].mxu0
    %v1905 = vadd.f32 %v1862, %v1904
    %v1906 = vpop.f32.mrb[0].mxu0
    %v1907 = vadd.f32 %v1864, %v1906
    %v1908 = vpop.f32.mrb[0].mxu0
    %v1909 = vadd.f32 %v1866, %v1908
    %1910 = vdwg.mxu0
    %v1911 = vld [vmem:[#allocation7] sm:$0xff]
    %v1912 = vld [vmem:[#allocation7 + $0x18] sm:$0xff]
    %v1913 = vld [vmem:[#allocation7 + $0x30] sm:$0xff]
    %v1914 = vld [vmem:[#allocation7 + $0x48] sm:$0xff]
    %v1915 = vld [vmem:[#allocation7 + $0x60] sm:$0xff]
    %v1916 = vld [vmem:[#allocation7 + $0x78] sm:$0xff]
    %v1917 = vld [vmem:[#allocation7 + $0x90] sm:$0x33]
    %v1925 = vunpack.c.l.b16 %v1911
    %v1926 = vunpack.c.h.b16 %v1911
    %v1927 = vunpack.c.l.b16 %v1912
    %v1928 = vunpack.c.h.b16 %v1912
    %v1929 = vunpack.c.l.b16 %v1913
    %v1930 = vunpack.c.h.b16 %v1913
    %v1931 = vunpack.c.l.b16 %v1914
    %v1932 = vunpack.c.h.b16 %v1914
    %v1933 = vunpack.c.l.b16 %v1915
    %v1934 = vunpack.c.h.b16 %v1915
    %v1935 = vunpack.c.l.b16 %v1916
    %v1936 = vunpack.c.h.b16 %v1916
    %v1937 = vunpack.c.l.b16 %v1917
    %v1938 = vunpack.c.h.b16 %v1917
    %v1939 = vpack.c.b16 %v1927, %v1925
    %v1940 = vpack.c.b16 %v1928, %v1926
    %v1941 = vpack.c.b16 %v1931, %v1929
    %v1942 = vpack.c.b16 %v1932, %v1930
    %v1943 = vpack.c.b16 %v1935, %v1933
    %v1944 = vpack.c.b16 %v1936, %v1934
    %v1945 = vpack.c.b16 %v1937, %v1937
    %v1946 = vpack.c.b16 %v1938, %v1938
    %v1954 = vand.u32 %v1945, %v459
    %v1957 = vand.u32 %v1946, %v459
    %1959 = vmatprep.subr.bf16.mxu0 %v1940
    %1960 = vmatpush1.bf16.msra.mxu0 %v1939
    %1961 = vmatprep.subr.bf16.mxu0 %v1942
    %1962 = vmatpush1.bf16.msra.mxu0 %v1941
    %1963 = vmatprep.subr.bf16.mxu0 %v1944
    %1964 = vmatpush1.bf16.msra.mxu0 %v1943
    %1965 = vmatprep.subr.bf16.mxu0 %v1957
    %1966 = vmatpush1.bf16.msra.mxu0 %v1954
    %1967 = vmatprep.subr.bf16.mxu0 0
    %1968 = vmatpush1.bf16.msra.mxu0 0
    %1969 = vmatprep.subr.bf16.mxu0 0
    %1970 = vmatpush1.bf16.msra.mxu0 0
    %1971 = vmatprep.subr.bf16.mxu0 0
    %1972 = vmatpush1.bf16.msra.mxu0 0
    %1973 = vmatprep.subr.bf16.mxu0 0
    %1974 = vmatpush1.bf16.msra.mxu0 0
    %1975 = vmatprep.subr.bf16.mxu0 0
    %1976 = vmatpush1.bf16.msra.mxu0 0
    %1977 = vmatprep.subr.bf16.mxu0 0
    %1978 = vmatpush1.bf16.msra.mxu0 0
    %1979 = vmatprep.subr.bf16.mxu0 0
    %1980 = vmatpush1.bf16.msra.mxu0 0
    %1981 = vmatprep.subr.bf16.mxu0 0
    %1982 = vmatpush1.bf16.msra.mxu0 0
    %1983 = vmatprep.subr.bf16.mxu0 0
    %1984 = vmatpush1.bf16.msra.mxu0 0
    %1985 = vmatprep.subr.bf16.mxu0 0
    %1986 = vmatpush1.bf16.msra.mxu0 0
    %1987 = vmatprep.subr.bf16.mxu0 0
    %1988 = vmatpush1.bf16.msra.mxu0 0
    %1989 = vmatprep.subr.bf16.mxu0 0
    %1990 = vmatpush1.bf16.msra.mxu0 0
    %1991 = vmatprep.mubr.bf16.mxu0 0
    %1992 = vmatmul.mubr.bf16.gmra.mrb[0].mxu0 %v454
    %v1993 = vpop.f32.mrb[0].mxu0
    %v1994 = vadd.f32 0.0, %v1993
    %v1995 = vpop.f32.mrb[0].mxu0
    %v1996 = vadd.f32 0.0, %v1995
    %v1997 = vpop.f32.mrb[0].mxu0
    %v1998 = vadd.f32 0.0, %v1997
    %v1999 = vpop.f32.mrb[0].mxu0
    %v2000 = vadd.f32 0.0, %v1999
    %2001 = vdwg.mxu0
    %2002 = vmatprep.subr.bf16.mxu0 %v1940
    %2003 = vmatpush1.bf16.msra.mxu0 %v1939
    %2004 = vmatprep.subr.bf16.mxu0 %v1942
    %2005 = vmatpush1.bf16.msra.mxu0 %v1941
    %2006 = vmatprep.subr.bf16.mxu0 %v1944
    %2007 = vmatpush1.bf16.msra.mxu0 %v1943
    %2008 = vmatprep.subr.bf16.mxu0 %v1957
    %2009 = vmatpush1.bf16.msra.mxu0 %v1954
    %2010 = vmatprep.subr.bf16.mxu0 0
    %2011 = vmatpush1.bf16.msra.mxu0 0
    %2012 = vmatprep.subr.bf16.mxu0 0
    %2013 = vmatpush1.bf16.msra.mxu0 0
    %2014 = vmatprep.subr.bf16.mxu0 0
    %2015 = vmatpush1.bf16.msra.mxu0 0
    %2016 = vmatprep.subr.bf16.mxu0 0
    %2017 = vmatpush1.bf16.msra.mxu0 0
    %2018 = vmatprep.subr.bf16.mxu0 0
    %2019 = vmatpush1.bf16.msra.mxu0 0
    %2020 = vmatprep.subr.bf16.mxu0 0
    %2021 = vmatpush1.bf16.msra.mxu0 0
    %2022 = vmatprep.subr.bf16.mxu0 0
    %2023 = vmatpush1.bf16.msra.mxu0 0
    %2024 = vmatprep.subr.bf16.mxu0 0
    %2025 = vmatpush1.bf16.msra.mxu0 0
    %2026 = vmatprep.subr.bf16.mxu0 0
    %2027 = vmatpush1.bf16.msra.mxu0 0
    %2028 = vmatprep.subr.bf16.mxu0 0
    %2029 = vmatpush1.bf16.msra.mxu0 0
    %2030 = vmatprep.subr.bf16.mxu0 0
    %2031 = vmatpush1.bf16.msra.mxu0 0
    %2032 = vmatprep.subr.bf16.mxu0 0
    %2033 = vmatpush1.bf16.msra.mxu0 0
    %2034 = vmatprep.mubr.bf16.mxu0 0
    %2035 = vmatmul.mubr.bf16.gmra.mrb[0].mxu0 %v545
    %v2036 = vpop.f32.mrb[0].mxu0
    %v2037 = vadd.f32 %v1994, %v2036
    %v2038 = vpop.f32.mrb[0].mxu0
    %v2039 = vadd.f32 %v1996, %v2038
    %v2040 = vpop.f32.mrb[0].mxu0
    %v2041 = vadd.f32 %v1998, %v2040
    %v2042 = vpop.f32.mrb[0].mxu0
    %v2043 = vadd.f32 %v2000, %v2042
    %2044 = vdwg.mxu0
    %v2045 = vmul.f32 %v1903, %v2037
    %v2046 = vmul.f32 %v1905, %v2039
    %v2047 = vmul.f32 %v1907, %v2041
    %v2048 = vmul.f32 %v1909, %v2043
    %v2049 = vld [vmem:[#allocation5 + $0x8] sm:$0xff]
    %v2050 = vld [vmem:[#allocation5 + $0x20] sm:$0xff]
    %v2051 = vld [vmem:[#allocation5 + $0x38] sm:$0xff]
    %v2052 = vld [vmem:[#allocation5 + $0x50] sm:$0xff]
    %v2053 = vld [vmem:[#allocation5 + $0x68] sm:$0xff]
    %v2054 = vld [vmem:[#allocation5 + $0x80] sm:$0xff]
    %v2055 = vld [vmem:[#allocation5 + $0x98] sm:$0x33]
    %v2063 = vunpack.c.l.b16 %v2049
    %v2064 = vunpack.c.h.b16 %v2049
    %v2065 = vunpack.c.l.b16 %v2050
    %v2066 = vunpack.c.h.b16 %v2050
    %v2067 = vunpack.c.l.b16 %v2051
    %v2068 = vunpack.c.h.b16 %v2051
    %v2069 = vunpack.c.l.b16 %v2052
    %v2070 = vunpack.c.h.b16 %v2052
    %v2071 = vunpack.c.l.b16 %v2053
    %v2072 = vunpack.c.h.b16 %v2053
    %v2073 = vunpack.c.l.b16 %v2054
    %v2074 = vunpack.c.h.b16 %v2054
    %v2075 = vunpack.c.l.b16 %v2055
    %v2076 = vunpack.c.h.b16 %v2055
    %v2077 = vpack.c.b16 %v2065, %v2063
    %v2078 = vpack.c.b16 %v2066, %v2064
    %v2079 = vpack.c.b16 %v2069, %v2067
    %v2080 = vpack.c.b16 %v2070, %v2068
    %v2081 = vpack.c.b16 %v2073, %v2071
    %v2082 = vpack.c.b16 %v2074, %v2072
    %v2083 = vpack.c.b16 %v2075, %v2075
    %v2084 = vpack.c.b16 %v2076, %v2076
    %v2092 = vand.u32 %v2083, %v459
    %v2095 = vand.u32 %v2084, %v459
    %2097 = vmatprep.subr.bf16.mxu0 %v2078
    %2098 = vmatpush1.bf16.msra.mxu0 %v2077
    %2099 = vmatprep.subr.bf16.mxu0 %v2080
    %2100 = vmatpush1.bf16.msra.mxu0 %v2079
    %2101 = vmatprep.subr.bf16.mxu0 %v2082
    %2102 = vmatpush1.bf16.msra.mxu0 %v2081
    %2103 = vmatprep.subr.bf16.mxu0 %v2095
    %2104 = vmatpush1.bf16.msra.mxu0 %v2092
    %2105 = vmatprep.subr.bf16.mxu0 0
    %2106 = vmatpush1.bf16.msra.mxu0 0
    %2107 = vmatprep.subr.bf16.mxu0 0
    %2108 = vmatpush1.bf16.msra.mxu0 0
    %2109 = vmatprep.subr.bf16.mxu0 0
    %2110 = vmatpush1.bf16.msra.mxu0 0
    %2111 = vmatprep.subr.bf16.mxu0 0
    %2112 = vmatpush1.bf16.msra.mxu0 0
    %2113 = vmatprep.subr.bf16.mxu0 0
    %2114 = vmatpush1.bf16.msra.mxu0 0
    %2115 = vmatprep.subr.bf16.mxu0 0
    %2116 = vmatpush1.bf16.msra.mxu0 0
    %2117 = vmatprep.subr.bf16.mxu0 0
    %2118 = vmatpush1.bf16.msra.mxu0 0
    %2119 = vmatprep.subr.bf16.mxu0 0
    %2120 = vmatpush1.bf16.msra.mxu0 0
    %2121 = vmatprep.subr.bf16.mxu0 0
    %2122 = vmatpush1.bf16.msra.mxu0 0
    %2123 = vmatprep.subr.bf16.mxu0 0
    %2124 = vmatpush1.bf16.msra.mxu0 0
    %2125 = vmatprep.subr.bf16.mxu0 0
    %2126 = vmatpush1.bf16.msra.mxu0 0
    %2127 = vmatprep.subr.bf16.mxu0 0
    %2128 = vmatpush1.bf16.msra.mxu0 0
    %2129 = vmatprep.mubr.bf16.mxu0 0
    %2130 = vmatmul.mubr.bf16.gmra.mrb[0].mxu0 %v454
    %v2131 = vpop.f32.mrb[0].mxu0
    %v2132 = vadd.f32 0.0, %v2131
    %v2133 = vpop.f32.mrb[0].mxu0
    %v2134 = vadd.f32 0.0, %v2133
    %v2135 = vpop.f32.mrb[0].mxu0
    %v2136 = vadd.f32 0.0, %v2135
    %v2137 = vpop.f32.mrb[0].mxu0
    %v2138 = vadd.f32 0.0, %v2137
    %2139 = vdwg.mxu0
    %2140 = vmatprep.subr.bf16.mxu0 %v2078
    %2141 = vmatpush1.bf16.msra.mxu0 %v2077
    %2142 = vmatprep.subr.bf16.mxu0 %v2080
    %2143 = vmatpush1.bf16.msra.mxu0 %v2079
    %2144 = vmatprep.subr.bf16.mxu0 %v2082
    %2145 = vmatpush1.bf16.msra.mxu0 %v2081
    %2146 = vmatprep.subr.bf16.mxu0 %v2095
    %2147 = vmatpush1.bf16.msra.mxu0 %v2092
    %2148 = vmatprep.subr.bf16.mxu0 0
    %2149 = vmatpush1.bf16.msra.mxu0 0
    %2150 = vmatprep.subr.bf16.mxu0 0
    %2151 = vmatpush1.bf16.msra.mxu0 0
    %2152 = vmatprep.subr.bf16.mxu0 0
    %2153 = vmatpush1.bf16.msra.mxu0 0
    %2154 = vmatprep.subr.bf16.mxu0 0
    %2155 = vmatpush1.bf16.msra.mxu0 0
    %2156 = vmatprep.subr.bf16.mxu0 0
    %2157 = vmatpush1.bf16.msra.mxu0 0
    %2158 = vmatprep.subr.bf16.mxu0 0
    %2159 = vmatpush1.bf16.msra.mxu0 0
    %2160 = vmatprep.subr.bf16.mxu0 0
    %2161 = vmatpush1.bf16.msra.mxu0 0
    %2162 = vmatprep.subr.bf16.mxu0 0
    %2163 = vmatpush1.bf16.msra.mxu0 0
    %2164 = vmatprep.subr.bf16.mxu0 0
    %2165 = vmatpush1.bf16.msra.mxu0 0
    %2166 = vmatprep.subr.bf16.mxu0 0
    %2167 = vmatpush1.bf16.msra.mxu0 0
    %2168 = vmatprep.subr.bf16.mxu0 0
    %2169 = vmatpush1.bf16.msra.mxu0 0
    %2170 = vmatprep.subr.bf16.mxu0 0
    %2171 = vmatpush1.bf16.msra.mxu0 0
    %2172 = vmatprep.mubr.bf16.mxu0 0
    %2173 = vmatmul.mubr.bf16.gmra.mrb[0].mxu0 %v545
    %v2174 = vpop.f32.mrb[0].mxu0
    %v2175 = vadd.f32 %v2132, %v2174
    %v2176 = vpop.f32.mrb[0].mxu0
    %v2177 = vadd.f32 %v2134, %v2176
    %v2178 = vpop.f32.mrb[0].mxu0
    %v2179 = vadd.f32 %v2136, %v2178
    %v2180 = vpop.f32.mrb[0].mxu0
    %v2181 = vadd.f32 %v2138, %v2180
    %2182 = vdwg.mxu0
    %v2183 = vld [vmem:[#allocation7 + $0x8] sm:$0xff]
    %v2184 = vld [vmem:[#allocation7 + $0x20] sm:$0xff]
    %v2185 = vld [vmem:[#allocation7 + $0x38] sm:$0xff]
    %v2186 = vld [vmem:[#allocation7 + $0x50] sm:$0xff]
    %v2187 = vld [vmem:[#allocation7 + $0x68] sm:$0xff]
    %v2188 = vld [vmem:[#allocation7 + $0x80] sm:$0xff]
    %v2189 = vld [vmem:[#allocation7 + $0x98] sm:$0x33]
    %v2197 = vunpack.c.l.b16 %v2183
    %v2198 = vunpack.c.h.b16 %v2183
    %v2199 = vunpack.c.l.b16 %v2184
    %v2200 = vunpack.c.h.b16 %v2184
    %v2201 = vunpack.c.l.b16 %v2185
    %v2202 = vunpack.c.h.b16 %v2185
    %v2203 = vunpack.c.l.b16 %v2186
    %v2204 = vunpack.c.h.b16 %v2186
    %v2205 = vunpack.c.l.b16 %v2187
    %v2206 = vunpack.c.h.b16 %v2187
    %v2207 = vunpack.c.l.b16 %v2188
    %v2208 = vunpack.c.h.b16 %v2188
    %v2209 = vunpack.c.l.b16 %v2189
    %v2210 = vunpack.c.h.b16 %v2189
    %v2211 = vpack.c.b16 %v2199, %v2197
    %v2212 = vpack.c.b16 %v2200, %v2198
    %v2213 = vpack.c.b16 %v2203, %v2201
    %v2214 = vpack.c.b16 %v2204, %v2202
    %v2215 = vpack.c.b16 %v2207, %v2205
    %v2216 = vpack.c.b16 %v2208, %v2206
    %v2217 = vpack.c.b16 %v2209, %v2209
    %v2218 = vpack.c.b16 %v2210, %v2210
    %v2226 = vand.u32 %v2217, %v459
    %v2229 = vand.u32 %v2218, %v459
    %2231 = vmatprep.subr.bf16.mxu0 %v2212
    %2232 = vmatpush1.bf16.msra.mxu0 %v2211
    %2233 = vmatprep.subr.bf16.mxu0 %v2214
    %2234 = vmatpush1.bf16.msra.mxu0 %v2213
    %2235 = vmatprep.subr.bf16.mxu0 %v2216
    %2236 = vmatpush1.bf16.msra.mxu0 %v2215
    %2237 = vmatprep.subr.bf16.mxu0 %v2229
    %2238 = vmatpush1.bf16.msra.mxu0 %v2226
    %2239 = vmatprep.subr.bf16.mxu0 0
    %2240 = vmatpush1.bf16.msra.mxu0 0
    %2241 = vmatprep.subr.bf16.mxu0 0
    %2242 = vmatpush1.bf16.msra.mxu0 0
    %2243 = vmatprep.subr.bf16.mxu0 0
    %2244 = vmatpush1.bf16.msra.mxu0 0
    %2245 = vmatprep.subr.bf16.mxu0 0
    %2246 = vmatpush1.bf16.msra.mxu0 0
    %2247 = vmatprep.subr.bf16.mxu0 0
    %2248 = vmatpush1.bf16.msra.mxu0 0
    %2249 = vmatprep.subr.bf16.mxu0 0
    %2250 = vmatpush1.bf16.msra.mxu0 0
    %2251 = vmatprep.subr.bf16.mxu0 0
    %2252 = vmatpush1.bf16.msra.mxu0 0
    %2253 = vmatprep.subr.bf16.mxu0 0
    %2254 = vmatpush1.bf16.msra.mxu0 0
    %2255 = vmatprep.subr.bf16.mxu0 0
    %2256 = vmatpush1.bf16.msra.mxu0 0
    %2257 = vmatprep.subr.bf16.mxu0 0
    %2258 = vmatpush1.bf16.msra.mxu0 0
    %2259 = vmatprep.subr.bf16.mxu0 0
    %2260 = vmatpush1.bf16.msra.mxu0 0
    %2261 = vmatprep.subr.bf16.mxu0 0
    %2262 = vmatpush1.bf16.msra.mxu0 0
    %2263 = vmatprep.mubr.bf16.mxu0 0
    %2264 = vmatmul.mubr.bf16.gmra.mrb[0].mxu0 %v454
    %v2265 = vpop.f32.mrb[0].mxu0
    %v2266 = vadd.f32 0.0, %v2265
    %v2267 = vpop.f32.mrb[0].mxu0
    %v2268 = vadd.f32 0.0, %v2267
    %v2269 = vpop.f32.mrb[0].mxu0
    %v2270 = vadd.f32 0.0, %v2269
    %v2271 = vpop.f32.mrb[0].mxu0
    %v2272 = vadd.f32 0.0, %v2271
    %2273 = vdwg.mxu0
    %2274 = vmatprep.subr.bf16.mxu0 %v2212
    %2275 = vmatpush1.bf16.msra.mxu0 %v2211
    %2276 = vmatprep.subr.bf16.mxu0 %v2214
    %2277 = vmatpush1.bf16.msra.mxu0 %v2213
    %2278 = vmatprep.subr.bf16.mxu0 %v2216
    %2279 = vmatpush1.bf16.msra.mxu0 %v2215
    %2280 = vmatprep.subr.bf16.mxu0 %v2229
    %2281 = vmatpush1.bf16.msra.mxu0 %v2226
    %2282 = vmatprep.subr.bf16.mxu0 0
    %2283 = vmatpush1.bf16.msra.mxu0 0
    %2284 = vmatprep.subr.bf16.mxu0 0
    %2285 = vmatpush1.bf16.msra.mxu0 0
    %2286 = vmatprep.subr.bf16.mxu0 0
    %2287 = vmatpush1.bf16.msra.mxu0 0
    %2288 = vmatprep.subr.bf16.mxu0 0
    %2289 = vmatpush1.bf16.msra.mxu0 0
    %2290 = vmatprep.subr.bf16.mxu0 0
    %2291 = vmatpush1.bf16.msra.mxu0 0
    %2292 = vmatprep.subr.bf16.mxu0 0
    %2293 = vmatpush1.bf16.msra.mxu0 0
    %2294 = vmatprep.subr.bf16.mxu0 0
    %2295 = vmatpush1.bf16.msra.mxu0 0
    %2296 = vmatprep.subr.bf16.mxu0 0
    %2297 = vmatpush1.bf16.msra.mxu0 0
    %2298 = vmatprep.subr.bf16.mxu0 0
    %2299 = vmatpush1.bf16.msra.mxu0 0
    %2300 = vmatprep.subr.bf16.mxu0 0
    %2301 = vmatpush1.bf16.msra.mxu0 0
    %2302 = vmatprep.subr.bf16.mxu0 0
    %2303 = vmatpush1.bf16.msra.mxu0 0
    %2304 = vmatprep.subr.bf16.mxu0 0
    %2305 = vmatpush1.bf16.msra.mxu0 0
    %2306 = vmatprep.mubr.bf16.mxu0 0
    %2307 = vmatmul.mubr.bf16.gmra.mrb[0].mxu0 %v545
    %v2308 = vpop.f32.mrb[0].mxu0
    %v2309 = vadd.f32 %v2266, %v2308
    %v2310 = vpop.f32.mrb[0].mxu0
    %v2311 = vadd.f32 %v2268, %v2310
    %v2312 = vpop.f32.mrb[0].mxu0
    %v2313 = vadd.f32 %v2270, %v2312
    %v2314 = vpop.f32.mrb[0].mxu0
    %v2315 = vadd.f32 %v2272, %v2314
    %2316 = vdwg.mxu0
    %v2317 = vmul.f32 %v2175, %v2309
    %v2318 = vmul.f32 %v2177, %v2311
    %v2319 = vmul.f32 %v2179, %v2313
    %v2320 = vmul.f32 %v2181, %v2315
    %v2321 = vadd.f32 %v2045, %v2317
    %v2322 = vadd.f32 %v2046, %v2318
    %v2323 = vadd.f32 %v2047, %v2319
    %v2324 = vadd.f32 %v2048, %v2320
    %v2325 = vld [vmem:[#allocation5 + $0x10] sm:$0xff]
    %v2326 = vld [vmem:[#allocation5 + $0x28] sm:$0xff]
    %v2327 = vld [vmem:[#allocation5 + $0x40] sm:$0xff]
    %v2328 = vld [vmem:[#allocation5 + $0x58] sm:$0xff]
    %v2329 = vld [vmem:[#allocation5 + $0x70] sm:$0xff]
    %v2330 = vld [vmem:[#allocation5 + $0x88] sm:$0xff]
    %v2331 = vld [vmem:[#allocation5 + $0xa0] sm:$0x33]
    %v2339 = vunpack.c.l.b16 %v2325
    %v2340 = vunpack.c.h.b16 %v2325
    %v2341 = vunpack.c.l.b16 %v2326
    %v2342 = vunpack.c.h.b16 %v2326
    %v2343 = vunpack.c.l.b16 %v2327
    %v2344 = vunpack.c.h.b16 %v2327
    %v2345 = vunpack.c.l.b16 %v2328
    %v2346 = vunpack.c.h.b16 %v2328
    %v2347 = vunpack.c.l.b16 %v2329
    %v2348 = vunpack.c.h.b16 %v2329
    %v2349 = vunpack.c.l.b16 %v2330
    %v2350 = vunpack.c.h.b16 %v2330
    %v2351 = vunpack.c.l.b16 %v2331
    %v2352 = vunpack.c.h.b16 %v2331
    %v2353 = vpack.c.b16 %v2341, %v2339
    %v2354 = vpack.c.b16 %v2342, %v2340
    %v2355 = vpack.c.b16 %v2345, %v2343
    %v2356 = vpack.c.b16 %v2346, %v2344
    %v2357 = vpack.c.b16 %v2349, %v2347
    %v2358 = vpack.c.b16 %v2350, %v2348
    %v2359 = vpack.c.b16 %v2351, %v2351
    %v2360 = vpack.c.b16 %v2352, %v2352
    %v2368 = vand.u32 %v2359, %v459
    %v2371 = vand.u32 %v2360, %v459
    %2373 = vmatprep.subr.bf16.mxu0 %v2354
    %2374 = vmatpush1.bf16.msra.mxu0 %v2353
    %2375 = vmatprep.subr.bf16.mxu0 %v2356
    %2376 = vmatpush1.bf16.msra.mxu0 %v2355
    %2377 = vmatprep.subr.bf16.mxu0 %v2358
    %2378 = vmatpush1.bf16.msra.mxu0 %v2357
    %2379 = vmatprep.subr.bf16.mxu0 %v2371
    %2380 = vmatpush1.bf16.msra.mxu0 %v2368
    %2381 = vmatprep.subr.bf16.mxu0 0
    %2382 = vmatpush1.bf16.msra.mxu0 0
    %2383 = vmatprep.subr.bf16.mxu0 0
    %2384 = vmatpush1.bf16.msra.mxu0 0
    %2385 = vmatprep.subr.bf16.mxu0 0
    %2386 = vmatpush1.bf16.msra.mxu0 0
    %2387 = vmatprep.subr.bf16.mxu0 0
    %2388 = vmatpush1.bf16.msra.mxu0 0
    %2389 = vmatprep.subr.bf16.mxu0 0
    %2390 = vmatpush1.bf16.msra.mxu0 0
    %2391 = vmatprep.subr.bf16.mxu0 0
    %2392 = vmatpush1.bf16.msra.mxu0 0
    %2393 = vmatprep.subr.bf16.mxu0 0
    %2394 = vmatpush1.bf16.msra.mxu0 0
    %2395 = vmatprep.subr.bf16.mxu0 0
    %2396 = vmatpush1.bf16.msra.mxu0 0
    %2397 = vmatprep.subr.bf16.mxu0 0
    %2398 = vmatpush1.bf16.msra.mxu0 0
    %2399 = vmatprep.subr.bf16.mxu0 0
    %2400 = vmatpush1.bf16.msra.mxu0 0
    %2401 = vmatprep.subr.bf16.mxu0 0
    %2402 = vmatpush1.bf16.msra.mxu0 0
    %2403 = vmatprep.subr.bf16.mxu0 0
    %2404 = vmatpush1.bf16.msra.mxu0 0
    %2405 = vmatprep.mubr.bf16.mxu0 0
    %2406 = vmatmul.mubr.bf16.gmra.mrb[0].mxu0 %v454
    %v2407 = vpop.f32.mrb[0].mxu0
    %v2408 = vadd.f32 0.0, %v2407
    %v2409 = vpop.f32.mrb[0].mxu0
    %v2410 = vadd.f32 0.0, %v2409
    %v2411 = vpop.f32.mrb[0].mxu0
    %v2412 = vadd.f32 0.0, %v2411
    %v2413 = vpop.f32.mrb[0].mxu0
    %v2414 = vadd.f32 0.0, %v2413
    %2415 = vdwg.mxu0
    %2416 = vmatprep.subr.bf16.mxu0 %v2354
    %2417 = vmatpush1.bf16.msra.mxu0 %v2353
    %2418 = vmatprep.subr.bf16.mxu0 %v2356
    %2419 = vmatpush1.bf16.msra.mxu0 %v2355
    %2420 = vmatprep.subr.bf16.mxu0 %v2358
    %2421 = vmatpush1.bf16.msra.mxu0 %v2357
    %2422 = vmatprep.subr.bf16.mxu0 %v2371
    %2423 = vmatpush1.bf16.msra.mxu0 %v2368
    %2424 = vmatprep.subr.bf16.mxu0 0
    %2425 = vmatpush1.bf16.msra.mxu0 0
    %2426 = vmatprep.subr.bf16.mxu0 0
    %2427 = vmatpush1.bf16.msra.mxu0 0
    %2428 = vmatprep.subr.bf16.mxu0 0
    %2429 = vmatpush1.bf16.msra.mxu0 0
    %2430 = vmatprep.subr.bf16.mxu0 0
    %2431 = vmatpush1.bf16.msra.mxu0 0
    %2432 = vmatprep.subr.bf16.mxu0 0
    %2433 = vmatpush1.bf16.msra.mxu0 0
    %2434 = vmatprep.subr.bf16.mxu0 0
    %2435 = vmatpush1.bf16.msra.mxu0 0
    %2436 = vmatprep.subr.bf16.mxu0 0
    %2437 = vmatpush1.bf16.msra.mxu0 0
    %2438 = vmatprep.subr.bf16.mxu0 0
    %2439 = vmatpush1.bf16.msra.mxu0 0
    %2440 = vmatprep.subr.bf16.mxu0 0
    %2441 = vmatpush1.bf16.msra.mxu0 0
    %2442 = vmatprep.subr.bf16.mxu0 0
    %2443 = vmatpush1.bf16.msra.mxu0 0
    %2444 = vmatprep.subr.bf16.mxu0 0
    %2445 = vmatpush1.bf16.msra.mxu0 0
    %2446 = vmatprep.subr.bf16.mxu0 0
    %2447 = vmatpush1.bf16.msra.mxu0 0
    %2448 = vmatprep.mubr.bf16.mxu0 0
    %2449 = vmatmul.mubr.bf16.gmra.mrb[0].mxu0 %v545
    %v2450 = vpop.f32.mrb[0].mxu0
    %v2451 = vadd.f32 %v2408, %v2450
    %v2452 = vpop.f32.mrb[0].mxu0
    %v2453 = vadd.f32 %v2410, %v2452
    %v2454 = vpop.f32.mrb[0].mxu0
    %v2455 = vadd.f32 %v2412, %v2454
    %v2456 = vpop.f32.mrb[0].mxu0
    %v2457 = vadd.f32 %v2414, %v2456
    %2458 = vdwg.mxu0
    %v2459 = vld [vmem:[#allocation7 + $0x10] sm:$0xff]
    %v2460 = vld [vmem:[#allocation7 + $0x28] sm:$0xff]
    %v2461 = vld [vmem:[#allocation7 + $0x40] sm:$0xff]
    %v2462 = vld [vmem:[#allocation7 + $0x58] sm:$0xff]
    %v2463 = vld [vmem:[#allocation7 + $0x70] sm:$0xff]
    %v2464 = vld [vmem:[#allocation7 + $0x88] sm:$0xff]
    %v2465 = vld [vmem:[#allocation7 + $0xa0] sm:$0x33]
    %v2473 = vunpack.c.l.b16 %v2459
    %v2474 = vunpack.c.h.b16 %v2459
    %v2475 = vunpack.c.l.b16 %v2460
    %v2476 = vunpack.c.h.b16 %v2460
    %v2477 = vunpack.c.l.b16 %v2461
    %v2478 = vunpack.c.h.b16 %v2461
    %v2479 = vunpack.c.l.b16 %v2462
    %v2480 = vunpack.c.h.b16 %v2462
    %v2481 = vunpack.c.l.b16 %v2463
    %v2482 = vunpack.c.h.b16 %v2463
    %v2483 = vunpack.c.l.b16 %v2464
    %v2484 = vunpack.c.h.b16 %v2464
    %v2485 = vunpack.c.l.b16 %v2465
    %v2486 = vunpack.c.h.b16 %v2465
    %v2487 = vpack.c.b16 %v2475, %v2473
    %v2488 = vpack.c.b16 %v2476, %v2474
    %v2489 = vpack.c.b16 %v2479, %v2477
    %v2490 = vpack.c.b16 %v2480, %v2478
    %v2491 = vpack.c.b16 %v2483, %v2481
    %v2492 = vpack.c.b16 %v2484, %v2482
    %v2493 = vpack.c.b16 %v2485, %v2485
    %v2494 = vpack.c.b16 %v2486, %v2486
    %v2502 = vand.u32 %v2493, %v459
    %v2505 = vand.u32 %v2494, %v459
    %2507 = vmatprep.subr.bf16.mxu0 %v2488
    %2508 = vmatpush1.bf16.msra.mxu0 %v2487
    %2509 = vmatprep.subr.bf16.mxu0 %v2490
    %2510 = vmatpush1.bf16.msra.mxu0 %v2489
    %2511 = vmatprep.subr.bf16.mxu0 %v2492
    %2512 = vmatpush1.bf16.msra.mxu0 %v2491
    %2513 = vmatprep.subr.bf16.mxu0 %v2505
    %2514 = vmatpush1.bf16.msra.mxu0 %v2502
    %2515 = vmatprep.subr.bf16.mxu0 0
    %2516 = vmatpush1.bf16.msra.mxu0 0
    %2517 = vmatprep.subr.bf16.mxu0 0
    %2518 = vmatpush1.bf16.msra.mxu0 0
    %2519 = vmatprep.subr.bf16.mxu0 0
    %2520 = vmatpush1.bf16.msra.mxu0 0
    %2521 = vmatprep.subr.bf16.mxu0 0
    %2522 = vmatpush1.bf16.msra.mxu0 0
    %2523 = vmatprep.subr.bf16.mxu0 0
    %2524 = vmatpush1.bf16.msra.mxu0 0
    %2525 = vmatprep.subr.bf16.mxu0 0
    %2526 = vmatpush1.bf16.msra.mxu0 0
    %2527 = vmatprep.subr.bf16.mxu0 0
    %2528 = vmatpush1.bf16.msra.mxu0 0
    %2529 = vmatprep.subr.bf16.mxu0 0
    %2530 = vmatpush1.bf16.msra.mxu0 0
    %2531 = vmatprep.subr.bf16.mxu0 0
    %2532 = vmatpush1.bf16.msra.mxu0 0
    %2533 = vmatprep.subr.bf16.mxu0 0
    %2534 = vmatpush1.bf16.msra.mxu0 0
    %2535 = vmatprep.subr.bf16.mxu0 0
    %2536 = vmatpush1.bf16.msra.mxu0 0
    %2537 = vmatprep.subr.bf16.mxu0 0
    %2538 = vmatpush1.bf16.msra.mxu0 0
    %2539 = vmatprep.mubr.bf16.mxu0 0
    %2540 = vmatmul.mubr.bf16.gmra.mrb[0].mxu0 %v454
    %v2541 = vpop.f32.mrb[0].mxu0
    %v2542 = vadd.f32 0.0, %v2541
    %v2543 = vpop.f32.mrb[0].mxu0
    %v2544 = vadd.f32 0.0, %v2543
    %v2545 = vpop.f32.mrb[0].mxu0
    %v2546 = vadd.f32 0.0, %v2545
    %v2547 = vpop.f32.mrb[0].mxu0
    %v2548 = vadd.f32 0.0, %v2547
    %2549 = vdwg.mxu0
    %2550 = vmatprep.subr.bf16.mxu0 %v2488
    %2551 = vmatpush1.bf16.msra.mxu0 %v2487
    %2552 = vmatprep.subr.bf16.mxu0 %v2490
    %2553 = vmatpush1.bf16.msra.mxu0 %v2489
    %2554 = vmatprep.subr.bf16.mxu0 %v2492
    %2555 = vmatpush1.bf16.msra.mxu0 %v2491
    %2556 = vmatprep.subr.bf16.mxu0 %v2505
    %2557 = vmatpush1.bf16.msra.mxu0 %v2502
    %2558 = vmatprep.subr.bf16.mxu0 0
    %2559 = vmatpush1.bf16.msra.mxu0 0
    %2560 = vmatprep.subr.bf16.mxu0 0
    %2561 = vmatpush1.bf16.msra.mxu0 0
    %2562 = vmatprep.subr.bf16.mxu0 0
    %2563 = vmatpush1.bf16.msra.mxu0 0
    %2564 = vmatprep.subr.bf16.mxu0 0
    %2565 = vmatpush1.bf16.msra.mxu0 0
    %2566 = vmatprep.subr.bf16.mxu0 0
    %2567 = vmatpush1.bf16.msra.mxu0 0
    %2568 = vmatprep.subr.bf16.mxu0 0
    %2569 = vmatpush1.bf16.msra.mxu0 0
    %2570 = vmatprep.subr.bf16.mxu0 0
    %2571 = vmatpush1.bf16.msra.mxu0 0
    %2572 = vmatprep.subr.bf16.mxu0 0
    %2573 = vmatpush1.bf16.msra.mxu0 0
    %2574 = vmatprep.subr.bf16.mxu0 0
    %2575 = vmatpush1.bf16.msra.mxu0 0
    %2576 = vmatprep.subr.bf16.mxu0 0
    %2577 = vmatpush1.bf16.msra.mxu0 0
    %2578 = vmatprep.subr.bf16.mxu0 0
    %2579 = vmatpush1.bf16.msra.mxu0 0
    %2580 = vmatprep.subr.bf16.mxu0 0
    %2581 = vmatpush1.bf16.msra.mxu0 0
    %2582 = vmatprep.mubr.bf16.mxu0 0
    %2583 = vmatmul.mubr.bf16.gmra.mrb[0].mxu0 %v545
    %v2584 = vpop.f32.mrb[0].mxu0
    %v2585 = vadd.f32 %v2542, %v2584
    %v2586 = vpop.f32.mrb[0].mxu0
    %v2587 = vadd.f32 %v2544, %v2586
    %v2588 = vpop.f32.mrb[0].mxu0
    %v2589 = vadd.f32 %v2546, %v2588
    %v2590 = vpop.f32.mrb[0].mxu0
    %v2591 = vadd.f32 %v2548, %v2590
    %2592 = vdwg.mxu0
    %v2593 = vmul.f32 %v2451, %v2585
    %v2594 = vmul.f32 %v2453, %v2587
    %v2595 = vmul.f32 %v2455, %v2589
    %v2596 = vmul.f32 %v2457, %v2591
    %v2597 = vadd.f32 %v2321, %v2593
    %v2598 = vadd.f32 %v2322, %v2594
    %v2599 = vadd.f32 %v2323, %v2595
    %v2600 = vadd.f32 %v2324, %v2596
    %v2601 = vpack.c.bf16 %v2599, %v2597
    %v2602 = vpack.c.bf16 %v2600, %v2598
    %v2603 = vunpack.c.l.bf16 %v2601
    %v2604 = vunpack.c.l.bf16 %v2602
    %v2605 = vunpack.c.h.bf16 %v2601
    %v2606 = vunpack.c.h.bf16 %v2602
    %v2607 = vsub.f32 %v2597, %v2603
    %v2608 = vsub.f32 %v2598, %v2604
    %v2609 = vsub.f32 %v2599, %v2605
    %v2610 = vsub.f32 %v2600, %v2606
    %v2611 = vpack.c.bf16 %v2609, %v2607
    %v2612 = vpack.c.bf16 %v2610, %v2608
    %v2613 = vld [vmem:[#allocation17] sm:$0xff]
    %v2614 = vld [vmem:[#allocation17 + $0x8] sm:$0xff]
    %v2615 = vld [vmem:[#allocation17 + $0x10] sm:$0xff]
    %v2616 = vld [vmem:[#allocation17 + $0x18] sm:$0xff]
    %v2617 = vld [vmem:[#allocation17 + $0x20] sm:$0xff]
    %v2618 = vld [vmem:[#allocation17 + $0x28] sm:$0xff]
    %v2619 = vld [vmem:[#allocation17 + $0x30] sm:$0xff]
    %v2620 = vld [vmem:[#allocation17 + $0x38] sm:$0xff]
    %v2621 = vld [vmem:[#allocation17 + $0x40] sm:$0xff]
    %v2622 = vld [vmem:[#allocation17 + $0x48] sm:$0xff]
    %v2623 = vld [vmem:[#allocation17 + $0x50] sm:$0xff]
    %v2624 = vld [vmem:[#allocation17 + $0x58] sm:$0xff]
    %v2625 = vld [vmem:[#allocation17 + $0x60] sm:$0xff]
    %v2626 = vld [vmem:[#allocation17 + $0x68] sm:$0xff]
    %v2627 = vld [vmem:[#allocation17 + $0x70] sm:$0xff]
    %v2628 = vld [vmem:[#allocation17 + $0x78] sm:$0xff]
    %v2629 = vld [vmem:[#allocation17 + $0x80] sm:$0xff]
    %v2630 = vld [vmem:[#allocation17 + $0x88] sm:$0xff]
    %v2631 = vld [vmem:[#allocation17 + $0x90] sm:$0xff]
    %v2632 = vld [vmem:[#allocation17 + $0x98] sm:$0xff]
    %v2633 = vld [vmem:[#allocation17 + $0xa0] sm:$0xff]
    %v2634 = vld [vmem:[#allocation17 + $0xa8] sm:$0xff]
    %v2635 = vld [vmem:[#allocation17 + $0xb0] sm:$0xff]
    %v2636 = vld [vmem:[#allocation17 + $0xb8] sm:$0xff]
    %v2637 = vld [vmem:[#allocation17 + $0xc0] sm:$0xff]
    %v2638 = vld [vmem:[#allocation17 + $0xc8] sm:$0xff]
    %v2639 = vld [vmem:[#allocation17 + $0xd0] sm:$0xff]
    %v2640 = vld [vmem:[#allocation17 + $0xd8] sm:$0xff]
    %v2641 = vld [vmem:[#allocation17 + $0xe0] sm:$0xff]
    %v2642 = vld [vmem:[#allocation17 + $0xe8] sm:$0xff]
    %v2643 = vld [vmem:[#allocation17 + $0xf0] sm:$0xff]
    %v2644 = vld [vmem:[#allocation17 + $0xf8] sm:$0xff]
    %v2645 = vld [vmem:[#allocation19] sm:$0xff]
    %v2646 = vld [vmem:[#allocation19 + $0x8] sm:$0xff]
    %v2647 = vld [vmem:[#allocation19 + $0x10] sm:$0xff]
    %v2648 = vld [vmem:[#allocation19 + $0x18] sm:$0xff]
    %v2649 = vld [vmem:[#allocation19 + $0x20] sm:$0xff]
    %v2650 = vld [vmem:[#allocation19 + $0x28] sm:$0xff]
    %v2651 = vld [vmem:[#allocation19 + $0x30] sm:$0xff]
    %v2652 = vld [vmem:[#allocation19 + $0x38] sm:$0xff]
    %v2653 = vld [vmem:[#allocation19 + $0x40] sm:$0xff]
    %v2654 = vld [vmem:[#allocation19 + $0x48] sm:$0xff]
    %v2655 = vld [vmem:[#allocation19 + $0x50] sm:$0xff]
    %v2656 = vld [vmem:[#allocation19 + $0x58] sm:$0xff]
    %v2657 = vld [vmem:[#allocation19 + $0x60] sm:$0xff]
    %v2658 = vld [vmem:[#allocation19 + $0x68] sm:$0xff]
    %v2659 = vld [vmem:[#allocation19 + $0x70] sm:$0xff]
    %v2660 = vld [vmem:[#allocation19 + $0x78] sm:$0xff]
    %v2661 = vld [vmem:[#allocation19 + $0x80] sm:$0xff]
    %v2662 = vld [vmem:[#allocation19 + $0x88] sm:$0xff]
    %v2663 = vld [vmem:[#allocation19 + $0x90] sm:$0xff]
    %v2664 = vld [vmem:[#allocation19 + $0x98] sm:$0xff]
    %v2665 = vld [vmem:[#allocation19 + $0xa0] sm:$0xff]
    %v2666 = vld [vmem:[#allocation19 + $0xa8] sm:$0xff]
    %v2667 = vld [vmem:[#allocation19 + $0xb0] sm:$0xff]
    %v2668 = vld [vmem:[#allocation19 + $0xb8] sm:$0xff]
    %v2669 = vld [vmem:[#allocation19 + $0xc0] sm:$0xff]
    %v2670 = vld [vmem:[#allocation19 + $0xc8] sm:$0xff]
    %v2671 = vld [vmem:[#allocation19 + $0xd0] sm:$0xff]
    %v2672 = vld [vmem:[#allocation19 + $0xd8] sm:$0xff]
    %v2673 = vld [vmem:[#allocation19 + $0xe0] sm:$0xff]
    %v2674 = vld [vmem:[#allocation19 + $0xe8] sm:$0xff]
    %v2675 = vld [vmem:[#allocation19 + $0xf0] sm:$0xff]
    %v2676 = vld [vmem:[#allocation19 + $0xf8] sm:$0xff]
    %v2709 = vunpack.c.l.b16 %v2613
    %v2710 = vunpack.c.h.b16 %v2613
    %v2711 = vunpack.c.l.b16 %v2614
    %v2712 = vunpack.c.h.b16 %v2614
    %v2713 = vunpack.c.l.b16 %v2615
    %v2714 = vunpack.c.h.b16 %v2615
    %v2715 = vunpack.c.l.b16 %v2616
    %v2716 = vunpack.c.h.b16 %v2616
    %v2717 = vunpack.c.l.b16 %v2617
    %v2718 = vunpack.c.h.b16 %v2617
    %v2719 = vunpack.c.l.b16 %v2618
    %v2720 = vunpack.c.h.b16 %v2618
    %v2721 = vunpack.c.l.b16 %v2619
    %v2722 = vunpack.c.h.b16 %v2619
    %v2723 = vunpack.c.l.b16 %v2620
    %v2724 = vunpack.c.h.b16 %v2620
    %v2725 = vunpack.c.l.b16 %v2621
    %v2726 = vunpack.c.h.b16 %v2621
    %v2727 = vunpack.c.l.b16 %v2622
    %v2728 = vunpack.c.h.b16 %v2622
    %v2729 = vunpack.c.l.b16 %v2623
    %v2730 = vunpack.c.h.b16 %v2623
    %v2731 = vunpack.c.l.b16 %v2624
    %v2732 = vunpack.c.h.b16 %v2624
    %v2733 = vunpack.c.l.b16 %v2625
    %v2734 = vunpack.c.h.b16 %v2625
    %v2735 = vunpack.c.l.b16 %v2626
    %v2736 = vunpack.c.h.b16 %v2626
    %v2737 = vunpack.c.l.b16 %v2627
    %v2738 = vunpack.c.h.b16 %v2627
    %v2739 = vunpack.c.l.b16 %v2628
    %v2740 = vunpack.c.h.b16 %v2628
    %v2741 = vunpack.c.l.b16 %v2629
    %v2742 = vunpack.c.h.b16 %v2629
    %v2743 = vunpack.c.l.b16 %v2630
    %v2744 = vunpack.c.h.b16 %v2630
    %v2745 = vunpack.c.l.b16 %v2631
    %v2746 = vunpack.c.h.b16 %v2631
    %v2747 = vunpack.c.l.b16 %v2632
    %v2748 = vunpack.c.h.b16 %v2632
    %v2749 = vunpack.c.l.b16 %v2633
    %v2750 = vunpack.c.h.b16 %v2633
    %v2751 = vunpack.c.l.b16 %v2634
    %v2752 = vunpack.c.h.b16 %v2634
    %v2753 = vunpack.c.l.b16 %v2635
    %v2754 = vunpack.c.h.b16 %v2635
    %v2755 = vunpack.c.l.b16 %v2636
    %v2756 = vunpack.c.h.b16 %v2636
    %v2757 = vunpack.c.l.b16 %v2637
    %v2758 = vunpack.c.h.b16 %v2637
    %v2759 = vunpack.c.l.b16 %v2638
    %v2760 = vunpack.c.h.b16 %v2638
    %v2761 = vunpack.c.l.b16 %v2639
    %v2762 = vunpack.c.h.b16 %v2639
    %v2763 = vunpack.c.l.b16 %v2640
    %v2764 = vunpack.c.h.b16 %v2640
    %v2765 = vunpack.c.l.b16 %v2641
    %v2766 = vunpack.c.h.b16 %v2641
    %v2767 = vunpack.c.l.b16 %v2642
    %v2768 = vunpack.c.h.b16 %v2642
    %v2769 = vunpack.c.l.b16 %v2643
    %v2770 = vunpack.c.h.b16 %v2643
    %v2771 = vunpack.c.l.b16 %v2644
    %v2772 = vunpack.c.h.b16 %v2644
    %v2773 = vpack.c.b16 %v2711, %v2709
    %v2774 = vpack.c.b16 %v2712, %v2710
    %v2775 = vpack.c.b16 %v2715, %v2713
    %v2776 = vpack.c.b16 %v2716, %v2714
    %v2777 = vpack.c.b16 %v2719, %v2717
    %v2778 = vpack.c.b16 %v2720, %v2718
    %v2779 = vpack.c.b16 %v2723, %v2721
    %v2780 = vpack.c.b16 %v2724, %v2722
    %v2781 = vpack.c.b16 %v2727, %v2725
    %v2782 = vpack.c.b16 %v2728, %v2726
    %v2783 = vpack.c.b16 %v2731, %v2729
    %v2784 = vpack.c.b16 %v2732, %v2730
    %v2785 = vpack.c.b16 %v2735, %v2733
    %v2786 = vpack.c.b16 %v2736, %v2734
    %v2787 = vpack.c.b16 %v2739, %v2737
    %v2788 = vpack.c.b16 %v2740, %v2738
    %v2789 = vpack.c.b16 %v2743, %v2741
    %v2790 = vpack.c.b16 %v2744, %v2742
    %v2791 = vpack.c.b16 %v2747, %v2745
    %v2792 = vpack.c.b16 %v2748, %v2746
    %v2793 = vpack.c.b16 %v2751, %v2749
    %v2794 = vpack.c.b16 %v2752, %v2750
    %v2795 = vpack.c.b16 %v2755, %v2753
    %v2796 = vpack.c.b16 %v2756, %v2754
    %v2797 = vpack.c.b16 %v2759, %v2757
    %v2798 = vpack.c.b16 %v2760, %v2758
    %v2799 = vpack.c.b16 %v2763, %v2761
    %v2800 = vpack.c.b16 %v2764, %v2762
    %v2801 = vpack.c.b16 %v2767, %v2765
    %v2802 = vpack.c.b16 %v2768, %v2766
    %v2803 = vpack.c.b16 %v2771, %v2769
    %v2804 = vpack.c.b16 %v2772, %v2770
    %2837 = vmatprep.subr.bf16.mxu0 %v2774
    %2838 = vmatpush1.bf16.msra.mxu0 %v2773
    %2839 = vmatprep.subr.bf16.mxu0 %v2776
    %2840 = vmatpush1.bf16.msra.mxu0 %v2775
    %2841 = vmatprep.subr.bf16.mxu0 %v2778
    %2842 = vmatpush1.bf16.msra.mxu0 %v2777
    %2843 = vmatprep.subr.bf16.mxu0 %v2780
    %2844 = vmatpush1.bf16.msra.mxu0 %v2779
    %2845 = vmatprep.subr.bf16.mxu0 %v2782
    %2846 = vmatpush1.bf16.msra.mxu0 %v2781
    %2847 = vmatprep.subr.bf16.mxu0 %v2784
    %2848 = vmatpush1.bf16.msra.mxu0 %v2783
    %2849 = vmatprep.subr.bf16.mxu0 %v2786
    %2850 = vmatpush1.bf16.msra.mxu0 %v2785
    %2851 = vmatprep.subr.bf16.mxu0 %v2788
    %2852 = vmatpush1.bf16.msra.mxu0 %v2787
    %2853 = vmatprep.subr.bf16.mxu0 %v2790
    %2854 = vmatpush1.bf16.msra.mxu0 %v2789
    %2855 = vmatprep.subr.bf16.mxu0 %v2792
    %2856 = vmatpush1.bf16.msra.mxu0 %v2791
    %2857 = vmatprep.subr.bf16.mxu0 %v2794
    %2858 = vmatpush1.bf16.msra.mxu0 %v2793
    %2859 = vmatprep.subr.bf16.mxu0 %v2796
    %2860 = vmatpush1.bf16.msra.mxu0 %v2795
    %2861 = vmatprep.subr.bf16.mxu0 %v2798
    %2862 = vmatpush1.bf16.msra.mxu0 %v2797
    %2863 = vmatprep.subr.bf16.mxu0 %v2800
    %2864 = vmatpush1.bf16.msra.mxu0 %v2799
    %2865 = vmatprep.subr.bf16.mxu0 %v2802
    %2866 = vmatpush1.bf16.msra.mxu0 %v2801
    %2867 = vmatprep.subr.bf16.mxu0 %v2804
    %2868 = vmatpush1.bf16.msra.mxu0 %v2803
    %2869 = vmatprep.mubr.bf16.mxu0 %v2612
    %2870 = vmatmul.mubr.bf16.gmra.mrb[0].mxu0 %v2611
    %v2871 = vpop.f32.mrb[0].mxu0
    %v2872 = vadd.f32 0.0, %v2871
    %v2873 = vpop.f32.mrb[0].mxu0
    %v2874 = vadd.f32 0.0, %v2873
    %v2875 = vpop.f32.mrb[0].mxu0
    %v2876 = vadd.f32 0.0, %v2875
    %v2877 = vpop.f32.mrb[0].mxu0
    %v2878 = vadd.f32 0.0, %v2877
    %2879 = vdwg.mxu0
    %v2912 = vunpack.c.l.b16 %v2645
    %v2913 = vunpack.c.h.b16 %v2645
    %v2914 = vunpack.c.l.b16 %v2646
    %v2915 = vunpack.c.h.b16 %v2646
    %v2916 = vunpack.c.l.b16 %v2647
    %v2917 = vunpack.c.h.b16 %v2647
    %v2918 = vunpack.c.l.b16 %v2648
    %v2919 = vunpack.c.h.b16 %v2648
    %v2920 = vunpack.c.l.b16 %v2649
    %v2921 = vunpack.c.h.b16 %v2649
    %v2922 = vunpack.c.l.b16 %v2650
    %v2923 = vunpack.c.h.b16 %v2650
    %v2924 = vunpack.c.l.b16 %v2651
    %v2925 = vunpack.c.h.b16 %v2651
    %v2926 = vunpack.c.l.b16 %v2652
    %v2927 = vunpack.c.h.b16 %v2652
    %v2928 = vunpack.c.l.b16 %v2653
    %v2929 = vunpack.c.h.b16 %v2653
    %v2930 = vunpack.c.l.b16 %v2654
    %v2931 = vunpack.c.h.b16 %v2654
    %v2932 = vunpack.c.l.b16 %v2655
    %v2933 = vunpack.c.h.b16 %v2655
    %v2934 = vunpack.c.l.b16 %v2656
    %v2935 = vunpack.c.h.b16 %v2656
    %v2936 = vunpack.c.l.b16 %v2657
    %v2937 = vunpack.c.h.b16 %v2657
    %v2938 = vunpack.c.l.b16 %v2658
    %v2939 = vunpack.c.h.b16 %v2658
    %v2940 = vunpack.c.l.b16 %v2659
    %v2941 = vunpack.c.h.b16 %v2659
    %v2942 = vunpack.c.l.b16 %v2660
    %v2943 = vunpack.c.h.b16 %v2660
    %v2944 = vunpack.c.l.b16 %v2661
    %v2945 = vunpack.c.h.b16 %v2661
    %v2946 = vunpack.c.l.b16 %v2662
    %v2947 = vunpack.c.h.b16 %v2662
    %v2948 = vunpack.c.l.b16 %v2663
    %v2949 = vunpack.c.h.b16 %v2663
    %v2950 = vunpack.c.l.b16 %v2664
    %v2951 = vunpack.c.h.b16 %v2664
    %v2952 = vunpack.c.l.b16 %v2665
    %v2953 = vunpack.c.h.b16 %v2665
    %v2954 = vunpack.c.l.b16 %v2666
    %v2955 = vunpack.c.h.b16 %v2666
    %v2956 = vunpack.c.l.b16 %v2667
    %v2957 = vunpack.c.h.b16 %v2667
    %v2958 = vunpack.c.l.b16 %v2668
    %v2959 = vunpack.c.h.b16 %v2668
    %v2960 = vunpack.c.l.b16 %v2669
    %v2961 = vunpack.c.h.b16 %v2669
    %v2962 = vunpack.c.l.b16 %v2670
    %v2963 = vunpack.c.h.b16 %v2670
    %v2964 = vunpack.c.l.b16 %v2671
    %v2965 = vunpack.c.h.b16 %v2671
    %v2966 = vunpack.c.l.b16 %v2672
    %v2967 = vunpack.c.h.b16 %v2672
    %v2968 = vunpack.c.l.b16 %v2673
    %v2969 = vunpack.c.h.b16 %v2673
    %v2970 = vunpack.c.l.b16 %v2674
    %v2971 = vunpack.c.h.b16 %v2674
    %v2972 = vunpack.c.l.b16 %v2675
    %v2973 = vunpack.c.h.b16 %v2675
    %v2974 = vunpack.c.l.b16 %v2676
    %v2975 = vunpack.c.h.b16 %v2676
    %v2976 = vpack.c.b16 %v2914, %v2912
    %v2977 = vpack.c.b16 %v2915, %v2913
    %v2978 = vpack.c.b16 %v2918, %v2916
    %v2979 = vpack.c.b16 %v2919, %v2917
    %v2980 = vpack.c.b16 %v2922, %v2920
    %v2981 = vpack.c.b16 %v2923, %v2921
    %v2982 = vpack.c.b16 %v2926, %v2924
    %v2983 = vpack.c.b16 %v2927, %v2925
    %v2984 = vpack.c.b16 %v2930, %v2928
    %v2985 = vpack.c.b16 %v2931, %v2929
    %v2986 = vpack.c.b16 %v2934, %v2932
    %v2987 = vpack.c.b16 %v2935, %v2933
    %v2988 = vpack.c.b16 %v2938, %v2936
    %v2989 = vpack.c.b16 %v2939, %v2937
    %v2990 = vpack.c.b16 %v2942, %v2940
    %v2991 = vpack.c.b16 %v2943, %v2941
    %v2992 = vpack.c.b16 %v2946, %v2944
    %v2993 = vpack.c.b16 %v2947, %v2945
    %v2994 = vpack.c.b16 %v2950, %v2948
    %v2995 = vpack.c.b16 %v2951, %v2949
    %v2996 = vpack.c.b16 %v2954, %v2952
    %v2997 = vpack.c.b16 %v2955, %v2953
    %v2998 = vpack.c.b16 %v2958, %v2956
    %v2999 = vpack.c.b16 %v2959, %v2957
    %v3000 = vpack.c.b16 %v2962, %v2960
    %v3001 = vpack.c.b16 %v2963, %v2961
    %v3002 = vpack.c.b16 %v2966, %v2964
    %v3003 = vpack.c.b16 %v2967, %v2965
    %v3004 = vpack.c.b16 %v2970, %v2968
    %v3005 = vpack.c.b16 %v2971, %v2969
    %v3006 = vpack.c.b16 %v2974, %v2972
    %v3007 = vpack.c.b16 %v2975, %v2973
    %3040 = vmatprep.subr.bf16.mxu0 %v2977
    %3041 = vmatpush1.bf16.msra.mxu0 %v2976
    %3042 = vmatprep.subr.bf16.mxu0 %v2979
    %3043 = vmatpush1.bf16.msra.mxu0 %v2978
    %3044 = vmatprep.subr.bf16.mxu0 %v2981
    %3045 = vmatpush1.bf16.msra.mxu0 %v2980
    %3046 = vmatprep.subr.bf16.mxu0 %v2983
    %3047 = vmatpush1.bf16.msra.mxu0 %v2982
    %3048 = vmatprep.subr.bf16.mxu0 %v2985
    %3049 = vmatpush1.bf16.msra.mxu0 %v2984
    %3050 = vmatprep.subr.bf16.mxu0 %v2987
    %3051 = vmatpush1.bf16.msra.mxu0 %v2986
    %3052 = vmatprep.subr.bf16.mxu0 %v2989
    %3053 = vmatpush1.bf16.msra.mxu0 %v2988
    %3054 = vmatprep.subr.bf16.mxu0 %v2991
    %3055 = vmatpush1.bf16.msra.mxu0 %v2990
    %3056 = vmatprep.subr.bf16.mxu0 %v2993
    %3057 = vmatpush1.bf16.msra.mxu0 %v2992
    %3058 = vmatprep.subr.bf16.mxu0 %v2995
    %3059 = vmatpush1.bf16.msra.mxu0 %v2994
    %3060 = vmatprep.subr.bf16.mxu0 %v2997
    %3061 = vmatpush1.bf16.msra.mxu0 %v2996
    %3062 = vmatprep.subr.bf16.mxu0 %v2999
    %3063 = vmatpush1.bf16.msra.mxu0 %v2998
    %3064 = vmatprep.subr.bf16.mxu0 %v3001
    %3065 = vmatpush1.bf16.msra.mxu0 %v3000
    %3066 = vmatprep.subr.bf16.mxu0 %v3003
    %3067 = vmatpush1.bf16.msra.mxu0 %v3002
    %3068 = vmatprep.subr.bf16.mxu0 %v3005
    %3069 = vmatpush1.bf16.msra.mxu0 %v3004
    %3070 = vmatprep.subr.bf16.mxu0 %v3007
    %3071 = vmatpush1.bf16.msra.mxu0 %v3006
    %3072 = vmatprep.mubr.bf16.mxu0 %v2602
    %3073 = vmatmul.mubr.bf16.gmra.mrb[0].mxu0 %v2601
    %v3074 = vpop.f32.mrb[0].mxu0
    %v3075 = vadd.f32 %v2872, %v3074
    %v3076 = vpop.f32.mrb[0].mxu0
    %v3077 = vadd.f32 %v2874, %v3076
    %v3078 = vpop.f32.mrb[0].mxu0
    %v3079 = vadd.f32 %v2876, %v3078
    %v3080 = vpop.f32.mrb[0].mxu0
    %v3081 = vadd.f32 %v2878, %v3080
    %3082 = vdwg.mxu0
    %3083 = vmatprep.subr.bf16.mxu0 %v2774
    %3084 = vmatpush1.bf16.msra.mxu0 %v2773
    %3085 = vmatprep.subr.bf16.mxu0 %v2776
    %3086 = vmatpush1.bf16.msra.mxu0 %v2775
    %3087 = vmatprep.subr.bf16.mxu0 %v2778
    %3088 = vmatpush1.bf16.msra.mxu0 %v2777
    %3089 = vmatprep.subr.bf16.mxu0 %v2780
    %3090 = vmatpush1.bf16.msra.mxu0 %v2779
    %3091 = vmatprep.subr.bf16.mxu0 %v2782
    %3092 = vmatpush1.bf16.msra.mxu0 %v2781
    %3093 = vmatprep.subr.bf16.mxu0 %v2784
    %3094 = vmatpush1.bf16.msra.mxu0 %v2783
    %3095 = vmatprep.subr.bf16.mxu0 %v2786
    %3096 = vmatpush1.bf16.msra.mxu0 %v2785
    %3097 = vmatprep.subr.bf16.mxu0 %v2788
    %3098 = vmatpush1.bf16.msra.mxu0 %v2787
    %3099 = vmatprep.subr.bf16.mxu0 %v2790
    %3100 = vmatpush1.bf16.msra.mxu0 %v2789
    %3101 = vmatprep.subr.bf16.mxu0 %v2792
    %3102 = vmatpush1.bf16.msra.mxu0 %v2791
    %3103 = vmatprep.subr.bf16.mxu0 %v2794
    %3104 = vmatpush1.bf16.msra.mxu0 %v2793
    %3105 = vmatprep.subr.bf16.mxu0 %v2796
    %3106 = vmatpush1.bf16.msra.mxu0 %v2795
    %3107 = vmatprep.subr.bf16.mxu0 %v2798
    %3108 = vmatpush1.bf16.msra.mxu0 %v2797
    %3109 = vmatprep.subr.bf16.mxu0 %v2800
    %3110 = vmatpush1.bf16.msra.mxu0 %v2799
    %3111 = vmatprep.subr.bf16.mxu0 %v2802
    %3112 = vmatpush1.bf16.msra.mxu0 %v2801
    %3113 = vmatprep.subr.bf16.mxu0 %v2804
    %3114 = vmatpush1.bf16.msra.mxu0 %v2803
    %3115 = vmatprep.mubr.bf16.mxu0 %v2602
    %3116 = vmatmul.mubr.bf16.gmra.mrb[0].mxu0 %v2601
    %v3117 = vpop.f32.mrb[0].mxu0
    %v3118 = vadd.f32 %v3075, %v3117
    %v3119 = vpop.f32.mrb[0].mxu0
    %v3120 = vadd.f32 %v3077, %v3119
    %v3121 = vpop.f32.mrb[0].mxu0
    %v3122 = vadd.f32 %v3079, %v3121
    %v3123 = vpop.f32.mrb[0].mxu0
    %v3124 = vadd.f32 %v3081, %v3123
    %3125 = vdwg.mxu0
    %v3126 = vld [vmem:[%s29] sm:$0x3]
    %v3128 = vlaneseq
    %v3129 = vshrl.u32 %v3128, 7
    %v3130 = vsub.s32 0, %v3129
    %v3131 = vrot.slane %v3126, %v3130
    %v3132 = vlaneseq
    %v3133 = vshrl.u32 %v3132, 7
    %v3134 = vsub.s32 1, %v3133
    %v3135 = vrot.slane %v3126, %v3134
    %v3138 = vadd.f32 %v3118, %v3131
    %v3139 = vadd.f32 %v3120, %v3135
    %v3140 = vadd.f32 %v3122, %v3131
    %v3141 = vadd.f32 %v3124, %v3135
    %vm3142 = vcmp.gt.f32.partialorder %v3138, 0.0
    %vm3143 = vcmp.gt.f32.partialorder %v3139, 0.0
    %vm3144 = vcmp.gt.f32.partialorder %v3140, 0.0
    %vm3145 = vcmp.gt.f32.partialorder %v3141, 0.0
    %v3146 = vmul.f32 %v3138, 0.2
    %v3147 = vmul.f32 %v3139, 0.2
    %v3148 = vmul.f32 %v3140, 0.2
    %v3149 = vmul.f32 %v3141, 0.2
    %v3150 = vsel %vm3142, %v3138, %v3146
    %v3151 = vsel %vm3143, %v3139, %v3147
    %v3152 = vsel %vm3144, %v3140, %v3148
    %v3153 = vsel %vm3145, %v3141, %v3149
    %v3154 = vpack.c.bf16 %v3152, %v3150
    %v3155 = vpack.c.bf16 %v3153, %v3151
    %v3156 = vunpack.c.l.bf16 %v3154
    %v3157 = vunpack.c.l.bf16 %v3155
    %v3158 = vunpack.c.h.bf16 %v3154
    %v3159 = vunpack.c.h.bf16 %v3155
    %v3160 = vsub.f32 %v3150, %v3156
    %v3161 = vsub.f32 %v3151, %v3157
    %v3162 = vsub.f32 %v3152, %v3158
    %v3163 = vsub.f32 %v3153, %v3159
    %v3164 = vpack.c.bf16 %v3162, %v3160
    %v3165 = vpack.c.bf16 %v3163, %v3161
    %v3166 = vld [vmem:[#allocation20] sm:$0xff]
    %v3167 = vld [vmem:[#allocation20 + $0x8] sm:$0xff]
    %v3168 = vld [vmem:[#allocation20 + $0x10] sm:$0xff]
    %v3169 = vld [vmem:[#allocation20 + $0x18] sm:$0xff]
    %v3170 = vld [vmem:[#allocation20 + $0x20] sm:$0xff]
    %v3171 = vld [vmem:[#allocation20 + $0x28] sm:$0xff]
    %v3172 = vld [vmem:[#allocation20 + $0x30] sm:$0xff]
    %v3173 = vld [vmem:[#allocation20 + $0x38] sm:$0xff]
    %v3174 = vld [vmem:[#allocation20 + $0x40] sm:$0xff]
    %v3175 = vld [vmem:[#allocation20 + $0x48] sm:$0xff]
    %v3176 = vld [vmem:[#allocation20 + $0x50] sm:$0xff]
    %v3177 = vld [vmem:[#allocation20 + $0x58] sm:$0xff]
    %v3178 = vld [vmem:[#allocation20 + $0x60] sm:$0xff]
    %v3179 = vld [vmem:[#allocation20 + $0x68] sm:$0xff]
    %v3180 = vld [vmem:[#allocation20 + $0x70] sm:$0xff]
    %v3181 = vld [vmem:[#allocation20 + $0x78] sm:$0xff]
    %v3182 = vld [vmem:[#allocation20 + $0x80] sm:$0xff]
    %v3183 = vld [vmem:[#allocation20 + $0x88] sm:$0xff]
    %v3184 = vld [vmem:[#allocation20 + $0x90] sm:$0xff]
    %v3185 = vld [vmem:[#allocation20 + $0x98] sm:$0xff]
    %v3186 = vld [vmem:[#allocation20 + $0xa0] sm:$0xff]
    %v3187 = vld [vmem:[#allocation20 + $0xa8] sm:$0xff]
    %v3188 = vld [vmem:[#allocation20 + $0xb0] sm:$0xff]
    %v3189 = vld [vmem:[#allocation20 + $0xb8] sm:$0xff]
    %v3190 = vld [vmem:[#allocation20 + $0xc0] sm:$0xff]
    %v3191 = vld [vmem:[#allocation20 + $0xc8] sm:$0xff]
    %v3192 = vld [vmem:[#allocation20 + $0xd0] sm:$0xff]
    %v3193 = vld [vmem:[#allocation20 + $0xd8] sm:$0xff]
    %v3194 = vld [vmem:[#allocation20 + $0xe0] sm:$0xff]
    %v3195 = vld [vmem:[#allocation20 + $0xe8] sm:$0xff]
    %v3196 = vld [vmem:[#allocation20 + $0xf0] sm:$0xff]
    %v3197 = vld [vmem:[#allocation20 + $0xf8] sm:$0xff]
    %v3198 = vld [vmem:[#allocation22] sm:$0xff]
    %v3199 = vld [vmem:[#allocation22 + $0x8] sm:$0xff]
    %v3200 = vld [vmem:[#allocation22 + $0x10] sm:$0xff]
    %v3201 = vld [vmem:[#allocation22 + $0x18] sm:$0xff]
    %v3202 = vld [vmem:[#allocation22 + $0x20] sm:$0xff]
    %v3203 = vld [vmem:[#allocation22 + $0x28] sm:$0xff]
    %v3204 = vld [vmem:[#allocation22 + $0x30] sm:$0xff]
    %v3205 = vld [vmem:[#allocation22 + $0x38] sm:$0xff]
    %v3206 = vld [vmem:[#allocation22 + $0x40] sm:$0xff]
    %v3207 = vld [vmem:[#allocation22 + $0x48] sm:$0xff]
    %v3208 = vld [vmem:[#allocation22 + $0x50] sm:$0xff]
    %v3209 = vld [vmem:[#allocation22 + $0x58] sm:$0xff]
    %v3210 = vld [vmem:[#allocation22 + $0x60] sm:$0xff]
    %v3211 = vld [vmem:[#allocation22 + $0x68] sm:$0xff]
    %v3212 = vld [vmem:[#allocation22 + $0x70] sm:$0xff]
    %v3213 = vld [vmem:[#allocation22 + $0x78] sm:$0xff]
    %v3214 = vld [vmem:[#allocation22 + $0x80] sm:$0xff]
    %v3215 = vld [vmem:[#allocation22 + $0x88] sm:$0xff]
    %v3216 = vld [vmem:[#allocation22 + $0x90] sm:$0xff]
    %v3217 = vld [vmem:[#allocation22 + $0x98] sm:$0xff]
    %v3218 = vld [vmem:[#allocation22 + $0xa0] sm:$0xff]
    %v3219 = vld [vmem:[#allocation22 + $0xa8] sm:$0xff]
    %v3220 = vld [vmem:[#allocation22 + $0xb0] sm:$0xff]
    %v3221 = vld [vmem:[#allocation22 + $0xb8] sm:$0xff]
    %v3222 = vld [vmem:[#allocation22 + $0xc0] sm:$0xff]
    %v3223 = vld [vmem:[#allocation22 + $0xc8] sm:$0xff]
    %v3224 = vld [vmem:[#allocation22 + $0xd0] sm:$0xff]
    %v3225 = vld [vmem:[#allocation22 + $0xd8] sm:$0xff]
    %v3226 = vld [vmem:[#allocation22 + $0xe0] sm:$0xff]
    %v3227 = vld [vmem:[#allocation22 + $0xe8] sm:$0xff]
    %v3228 = vld [vmem:[#allocation22 + $0xf0] sm:$0xff]
    %v3229 = vld [vmem:[#allocation22 + $0xf8] sm:$0xff]
    %v3262 = vunpack.c.l.b16 %v3166
    %v3263 = vunpack.c.h.b16 %v3166
    %v3264 = vunpack.c.l.b16 %v3167
    %v3265 = vunpack.c.h.b16 %v3167
    %v3266 = vunpack.c.l.b16 %v3168
    %v3267 = vunpack.c.h.b16 %v3168
    %v3268 = vunpack.c.l.b16 %v3169
    %v3269 = vunpack.c.h.b16 %v3169
    %v3270 = vunpack.c.l.b16 %v3170
    %v3271 = vunpack.c.h.b16 %v3170
    %v3272 = vunpack.c.l.b16 %v3171
    %v3273 = vunpack.c.h.b16 %v3171
    %v3274 = vunpack.c.l.b16 %v3172
    %v3275 = vunpack.c.h.b16 %v3172
    %v3276 = vunpack.c.l.b16 %v3173
    %v3277 = vunpack.c.h.b16 %v3173
    %v3278 = vunpack.c.l.b16 %v3174
    %v3279 = vunpack.c.h.b16 %v3174
    %v3280 = vunpack.c.l.b16 %v3175
    %v3281 = vunpack.c.h.b16 %v3175
    %v3282 = vunpack.c.l.b16 %v3176
    %v3283 = vunpack.c.h.b16 %v3176
    %v3284 = vunpack.c.l.b16 %v3177
    %v3285 = vunpack.c.h.b16 %v3177
    %v3286 = vunpack.c.l.b16 %v3178
    %v3287 = vunpack.c.h.b16 %v3178
    %v3288 = vunpack.c.l.b16 %v3179
    %v3289 = vunpack.c.h.b16 %v3179
    %v3290 = vunpack.c.l.b16 %v3180
    %v3291 = vunpack.c.h.b16 %v3180
    %v3292 = vunpack.c.l.b16 %v3181
    %v3293 = vunpack.c.h.b16 %v3181
    %v3294 = vunpack.c.l.b16 %v3182
    %v3295 = vunpack.c.h.b16 %v3182
    %v3296 = vunpack.c.l.b16 %v3183
    %v3297 = vunpack.c.h.b16 %v3183
    %v3298 = vunpack.c.l.b16 %v3184
    %v3299 = vunpack.c.h.b16 %v3184
    %v3300 = vunpack.c.l.b16 %v3185
    %v3301 = vunpack.c.h.b16 %v3185
    %v3302 = vunpack.c.l.b16 %v3186
    %v3303 = vunpack.c.h.b16 %v3186
    %v3304 = vunpack.c.l.b16 %v3187
    %v3305 = vunpack.c.h.b16 %v3187
    %v3306 = vunpack.c.l.b16 %v3188
    %v3307 = vunpack.c.h.b16 %v3188
    %v3308 = vunpack.c.l.b16 %v3189
    %v3309 = vunpack.c.h.b16 %v3189
    %v3310 = vunpack.c.l.b16 %v3190
    %v3311 = vunpack.c.h.b16 %v3190
    %v3312 = vunpack.c.l.b16 %v3191
    %v3313 = vunpack.c.h.b16 %v3191
    %v3314 = vunpack.c.l.b16 %v3192
    %v3315 = vunpack.c.h.b16 %v3192
    %v3316 = vunpack.c.l.b16 %v3193
    %v3317 = vunpack.c.h.b16 %v3193
    %v3318 = vunpack.c.l.b16 %v3194
    %v3319 = vunpack.c.h.b16 %v3194
    %v3320 = vunpack.c.l.b16 %v3195
    %v3321 = vunpack.c.h.b16 %v3195
    %v3322 = vunpack.c.l.b16 %v3196
    %v3323 = vunpack.c.h.b16 %v3196
    %v3324 = vunpack.c.l.b16 %v3197
    %v3325 = vunpack.c.h.b16 %v3197
    %v3326 = vpack.c.b16 %v3264, %v3262
    %v3327 = vpack.c.b16 %v3265, %v3263
    %v3328 = vpack.c.b16 %v3268, %v3266
    %v3329 = vpack.c.b16 %v3269, %v3267
    %v3330 = vpack.c.b16 %v3272, %v3270
    %v3331 = vpack.c.b16 %v3273, %v3271
    %v3332 = vpack.c.b16 %v3276, %v3274
    %v3333 = vpack.c.b16 %v3277, %v3275
    %v3334 = vpack.c.b16 %v3280, %v3278
    %v3335 = vpack.c.b16 %v3281, %v3279
    %v3336 = vpack.c.b16 %v3284, %v3282
    %v3337 = vpack.c.b16 %v3285, %v3283
    %v3338 = vpack.c.b16 %v3288, %v3286
    %v3339 = vpack.c.b16 %v3289, %v3287
    %v3340 = vpack.c.b16 %v3292, %v3290
    %v3341 = vpack.c.b16 %v3293, %v3291
    %v3342 = vpack.c.b16 %v3296, %v3294
    %v3343 = vpack.c.b16 %v3297, %v3295
    %v3344 = vpack.c.b16 %v3300, %v3298
    %v3345 = vpack.c.b16 %v3301, %v3299
    %v3346 = vpack.c.b16 %v3304, %v3302
    %v3347 = vpack.c.b16 %v3305, %v3303
    %v3348 = vpack.c.b16 %v3308, %v3306
    %v3349 = vpack.c.b16 %v3309, %v3307
    %v3350 = vpack.c.b16 %v3312, %v3310
    %v3351 = vpack.c.b16 %v3313, %v3311
    %v3352 = vpack.c.b16 %v3316, %v3314
    %v3353 = vpack.c.b16 %v3317, %v3315
    %v3354 = vpack.c.b16 %v3320, %v3318
    %v3355 = vpack.c.b16 %v3321, %v3319
    %v3356 = vpack.c.b16 %v3324, %v3322
    %v3357 = vpack.c.b16 %v3325, %v3323
    %3390 = vmatprep.subr.bf16.mxu0 %v3327
    %3391 = vmatpush1.bf16.msra.mxu0 %v3326
    %3392 = vmatprep.subr.bf16.mxu0 %v3329
    %3393 = vmatpush1.bf16.msra.mxu0 %v3328
    %3394 = vmatprep.subr.bf16.mxu0 %v3331
    %3395 = vmatpush1.bf16.msra.mxu0 %v3330
    %3396 = vmatprep.subr.bf16.mxu0 %v3333
    %3397 = vmatpush1.bf16.msra.mxu0 %v3332
    %3398 = vmatprep.subr.bf16.mxu0 %v3335
    %3399 = vmatpush1.bf16.msra.mxu0 %v3334
    %3400 = vmatprep.subr.bf16.mxu0 %v3337
    %3401 = vmatpush1.bf16.msra.mxu0 %v3336
    %3402 = vmatprep.subr.bf16.mxu0 %v3339
    %3403 = vmatpush1.bf16.msra.mxu0 %v3338
    %3404 = vmatprep.subr.bf16.mxu0 %v3341
    %3405 = vmatpush1.bf16.msra.mxu0 %v3340
    %3406 = vmatprep.subr.bf16.mxu0 %v3343
    %3407 = vmatpush1.bf16.msra.mxu0 %v3342
    %3408 = vmatprep.subr.bf16.mxu0 %v3345
    %3409 = vmatpush1.bf16.msra.mxu0 %v3344
    %3410 = vmatprep.subr.bf16.mxu0 %v3347
    %3411 = vmatpush1.bf16.msra.mxu0 %v3346
    %3412 = vmatprep.subr.bf16.mxu0 %v3349
    %3413 = vmatpush1.bf16.msra.mxu0 %v3348
    %3414 = vmatprep.subr.bf16.mxu0 %v3351
    %3415 = vmatpush1.bf16.msra.mxu0 %v3350
    %3416 = vmatprep.subr.bf16.mxu0 %v3353
    %3417 = vmatpush1.bf16.msra.mxu0 %v3352
    %3418 = vmatprep.subr.bf16.mxu0 %v3355
    %3419 = vmatpush1.bf16.msra.mxu0 %v3354
    %3420 = vmatprep.subr.bf16.mxu0 %v3357
    %3421 = vmatpush1.bf16.msra.mxu0 %v3356
    %3422 = vmatprep.mubr.bf16.mxu0 %v3165
    %3423 = vmatmul.mubr.bf16.gmra.mrb[0].mxu0 %v3164
    %v3424 = vpop.f32.mrb[0].mxu0
    %v3425 = vadd.f32 0.0, %v3424
    %v3426 = vpop.f32.mrb[0].mxu0
    %v3427 = vadd.f32 0.0, %v3426
    %v3428 = vpop.f32.mrb[0].mxu0
    %v3429 = vadd.f32 0.0, %v3428
    %v3430 = vpop.f32.mrb[0].mxu0
    %v3431 = vadd.f32 0.0, %v3430
    %3432 = vdwg.mxu0
    %v3465 = vunpack.c.l.b16 %v3198
    %v3466 = vunpack.c.h.b16 %v3198
    %v3467 = vunpack.c.l.b16 %v3199
    %v3468 = vunpack.c.h.b16 %v3199
    %v3469 = vunpack.c.l.b16 %v3200
    %v3470 = vunpack.c.h.b16 %v3200
    %v3471 = vunpack.c.l.b16 %v3201
    %v3472 = vunpack.c.h.b16 %v3201
    %v3473 = vunpack.c.l.b16 %v3202
    %v3474 = vunpack.c.h.b16 %v3202
    %v3475 = vunpack.c.l.b16 %v3203
    %v3476 = vunpack.c.h.b16 %v3203
    %v3477 = vunpack.c.l.b16 %v3204
    %v3478 = vunpack.c.h.b16 %v3204
    %v3479 = vunpack.c.l.b16 %v3205
    %v3480 = vunpack.c.h.b16 %v3205
    %v3481 = vunpack.c.l.b16 %v3206
    %v3482 = vunpack.c.h.b16 %v3206
    %v3483 = vunpack.c.l.b16 %v3207
    %v3484 = vunpack.c.h.b16 %v3207
    %v3485 = vunpack.c.l.b16 %v3208
    %v3486 = vunpack.c.h.b16 %v3208
    %v3487 = vunpack.c.l.b16 %v3209
    %v3488 = vunpack.c.h.b16 %v3209
    %v3489 = vunpack.c.l.b16 %v3210
    %v3490 = vunpack.c.h.b16 %v3210
    %v3491 = vunpack.c.l.b16 %v3211
    %v3492 = vunpack.c.h.b16 %v3211
    %v3493 = vunpack.c.l.b16 %v3212
    %v3494 = vunpack.c.h.b16 %v3212
    %v3495 = vunpack.c.l.b16 %v3213
    %v3496 = vunpack.c.h.b16 %v3213
    %v3497 = vunpack.c.l.b16 %v3214
    %v3498 = vunpack.c.h.b16 %v3214
    %v3499 = vunpack.c.l.b16 %v3215
    %v3500 = vunpack.c.h.b16 %v3215
    %v3501 = vunpack.c.l.b16 %v3216
    %v3502 = vunpack.c.h.b16 %v3216
    %v3503 = vunpack.c.l.b16 %v3217
    %v3504 = vunpack.c.h.b16 %v3217
    %v3505 = vunpack.c.l.b16 %v3218
    %v3506 = vunpack.c.h.b16 %v3218
    %v3507 = vunpack.c.l.b16 %v3219
    %v3508 = vunpack.c.h.b16 %v3219
    %v3509 = vunpack.c.l.b16 %v3220
    %v3510 = vunpack.c.h.b16 %v3220
    %v3511 = vunpack.c.l.b16 %v3221
    %v3512 = vunpack.c.h.b16 %v3221
    %v3513 = vunpack.c.l.b16 %v3222
    %v3514 = vunpack.c.h.b16 %v3222
    %v3515 = vunpack.c.l.b16 %v3223
    %v3516 = vunpack.c.h.b16 %v3223
    %v3517 = vunpack.c.l.b16 %v3224
    %v3518 = vunpack.c.h.b16 %v3224
    %v3519 = vunpack.c.l.b16 %v3225
    %v3520 = vunpack.c.h.b16 %v3225
    %v3521 = vunpack.c.l.b16 %v3226
    %v3522 = vunpack.c.h.b16 %v3226
    %v3523 = vunpack.c.l.b16 %v3227
    %v3524 = vunpack.c.h.b16 %v3227
    %v3525 = vunpack.c.l.b16 %v3228
    %v3526 = vunpack.c.h.b16 %v3228
    %v3527 = vunpack.c.l.b16 %v3229
    %v3528 = vunpack.c.h.b16 %v3229
    %v3529 = vpack.c.b16 %v3467, %v3465
    %v3530 = vpack.c.b16 %v3468, %v3466
    %v3531 = vpack.c.b16 %v3471, %v3469
    %v3532 = vpack.c.b16 %v3472, %v3470
    %v3533 = vpack.c.b16 %v3475, %v3473
    %v3534 = vpack.c.b16 %v3476, %v3474
    %v3535 = vpack.c.b16 %v3479, %v3477
    %v3536 = vpack.c.b16 %v3480, %v3478
    %v3537 = vpack.c.b16 %v3483, %v3481
    %v3538 = vpack.c.b16 %v3484, %v3482
    %v3539 = vpack.c.b16 %v3487, %v3485
    %v3540 = vpack.c.b16 %v3488, %v3486
    %v3541 = vpack.c.b16 %v3491, %v3489
    %v3542 = vpack.c.b16 %v3492, %v3490
    %v3543 = vpack.c.b16 %v3495, %v3493
    %v3544 = vpack.c.b16 %v3496, %v3494
    %v3545 = vpack.c.b16 %v3499, %v3497
    %v3546 = vpack.c.b16 %v3500, %v3498
    %v3547 = vpack.c.b16 %v3503, %v3501
    %v3548 = vpack.c.b16 %v3504, %v3502
    %v3549 = vpack.c.b16 %v3507, %v3505
    %v3550 = vpack.c.b16 %v3508, %v3506
    %v3551 = vpack.c.b16 %v3511, %v3509
    %v3552 = vpack.c.b16 %v3512, %v3510
    %v3553 = vpack.c.b16 %v3515, %v3513
    %v3554 = vpack.c.b16 %v3516, %v3514
    %v3555 = vpack.c.b16 %v3519, %v3517
    %v3556 = vpack.c.b16 %v3520, %v3518
    %v3557 = vpack.c.b16 %v3523, %v3521
    %v3558 = vpack.c.b16 %v3524, %v3522
    %v3559 = vpack.c.b16 %v3527, %v3525
    %v3560 = vpack.c.b16 %v3528, %v3526
    %3593 = vmatprep.subr.bf16.mxu0 %v3530
    %3594 = vmatpush1.bf16.msra.mxu0 %v3529
    %3595 = vmatprep.subr.bf16.mxu0 %v3532
    %3596 = vmatpush1.bf16.msra.mxu0 %v3531
    %3597 = vmatprep.subr.bf16.mxu0 %v3534
    %3598 = vmatpush1.bf16.msra.mxu0 %v3533
    %3599 = vmatprep.subr.bf16.mxu0 %v3536
    %3600 = vmatpush1.bf16.msra.mxu0 %v3535
    %3601 = vmatprep.subr.bf16.mxu0 %v3538
    %3602 = vmatpush1.bf16.msra.mxu0 %v3537
    %3603 = vmatprep.subr.bf16.mxu0 %v3540
    %3604 = vmatpush1.bf16.msra.mxu0 %v3539
    %3605 = vmatprep.subr.bf16.mxu0 %v3542
    %3606 = vmatpush1.bf16.msra.mxu0 %v3541
    %3607 = vmatprep.subr.bf16.mxu0 %v3544
    %3608 = vmatpush1.bf16.msra.mxu0 %v3543
    %3609 = vmatprep.subr.bf16.mxu0 %v3546
    %3610 = vmatpush1.bf16.msra.mxu0 %v3545
    %3611 = vmatprep.subr.bf16.mxu0 %v3548
    %3612 = vmatpush1.bf16.msra.mxu0 %v3547
    %3613 = vmatprep.subr.bf16.mxu0 %v3550
    %3614 = vmatpush1.bf16.msra.mxu0 %v3549
    %3615 = vmatprep.subr.bf16.mxu0 %v3552
    %3616 = vmatpush1.bf16.msra.mxu0 %v3551
    %3617 = vmatprep.subr.bf16.mxu0 %v3554
    %3618 = vmatpush1.bf16.msra.mxu0 %v3553
    %3619 = vmatprep.subr.bf16.mxu0 %v3556
    %3620 = vmatpush1.bf16.msra.mxu0 %v3555
    %3621 = vmatprep.subr.bf16.mxu0 %v3558
    %3622 = vmatpush1.bf16.msra.mxu0 %v3557
    %3623 = vmatprep.subr.bf16.mxu0 %v3560
    %3624 = vmatpush1.bf16.msra.mxu0 %v3559
    %3625 = vmatprep.mubr.bf16.mxu0 %v3155
    %3626 = vmatmul.mubr.bf16.gmra.mrb[0].mxu0 %v3154
    %v3627 = vpop.f32.mrb[0].mxu0
    %v3628 = vadd.f32 %v3425, %v3627
    %v3629 = vpop.f32.mrb[0].mxu0
    %v3630 = vadd.f32 %v3427, %v3629
    %v3631 = vpop.f32.mrb[0].mxu0
    %v3632 = vadd.f32 %v3429, %v3631
    %v3633 = vpop.f32.mrb[0].mxu0
    %v3634 = vadd.f32 %v3431, %v3633
    %3635 = vdwg.mxu0
    %3636 = vmatprep.subr.bf16.mxu0 %v3327
    %3637 = vmatpush1.bf16.msra.mxu0 %v3326
    %3638 = vmatprep.subr.bf16.mxu0 %v3329
    %3639 = vmatpush1.bf16.msra.mxu0 %v3328
    %3640 = vmatprep.subr.bf16.mxu0 %v3331
    %3641 = vmatpush1.bf16.msra.mxu0 %v3330
    %3642 = vmatprep.subr.bf16.mxu0 %v3333
    %3643 = vmatpush1.bf16.msra.mxu0 %v3332
    %3644 = vmatprep.subr.bf16.mxu0 %v3335
    %3645 = vmatpush1.bf16.msra.mxu0 %v3334
    %3646 = vmatprep.subr.bf16.mxu0 %v3337
    %3647 = vmatpush1.bf16.msra.mxu0 %v3336
    %3648 = vmatprep.subr.bf16.mxu0 %v3339
    %3649 = vmatpush1.bf16.msra.mxu0 %v3338
    %3650 = vmatprep.subr.bf16.mxu0 %v3341
    %3651 = vmatpush1.bf16.msra.mxu0 %v3340
    %3652 = vmatprep.subr.bf16.mxu0 %v3343
    %3653 = vmatpush1.bf16.msra.mxu0 %v3342
    %3654 = vmatprep.subr.bf16.mxu0 %v3345
    %3655 = vmatpush1.bf16.msra.mxu0 %v3344
    %3656 = vmatprep.subr.bf16.mxu0 %v3347
    %3657 = vmatpush1.bf16.msra.mxu0 %v3346
    %3658 = vmatprep.subr.bf16.mxu0 %v3349
    %3659 = vmatpush1.bf16.msra.mxu0 %v3348
    %3660 = vmatprep.subr.bf16.mxu0 %v3351
    %3661 = vmatpush1.bf16.msra.mxu0 %v3350
    %3662 = vmatprep.subr.bf16.mxu0 %v3353
    %3663 = vmatpush1.bf16.msra.mxu0 %v3352
    %3664 = vmatprep.subr.bf16.mxu0 %v3355
    %3665 = vmatpush1.bf16.msra.mxu0 %v3354
    %3666 = vmatprep.subr.bf16.mxu0 %v3357
    %3667 = vmatpush1.bf16.msra.mxu0 %v3356
    %3668 = vmatprep.mubr.bf16.mxu0 %v3155
    %3669 = vmatmul.mubr.bf16.gmra.mrb[0].mxu0 %v3154
    %v3670 = vpop.f32.mrb[0].mxu0
    %v3671 = vadd.f32 %v3628, %v3670
    %v3672 = vpop.f32.mrb[0].mxu0
    %v3673 = vadd.f32 %v3630, %v3672
    %v3674 = vpop.f32.mrb[0].mxu0
    %v3675 = vadd.f32 %v3632, %v3674
    %v3676 = vpop.f32.mrb[0].mxu0
    %v3677 = vadd.f32 %v3634, %v3676
    %3678 = vdwg.mxu0
    %v3679 = vld [vmem:[%s35] sm:$0x3]
    %v3681 = vlaneseq
    %v3682 = vshrl.u32 %v3681, 7
    %v3683 = vsub.s32 0, %v3682
    %v3684 = vrot.slane %v3679, %v3683
    %v3685 = vlaneseq
    %v3686 = vshrl.u32 %v3685, 7
    %v3687 = vsub.s32 1, %v3686
    %v3688 = vrot.slane %v3679, %v3687
    %v3691 = vadd.f32 %v3671, %v3684
    %v3692 = vadd.f32 %v3673, %v3688
    %v3693 = vadd.f32 %v3675, %v3684
    %v3694 = vadd.f32 %v3677, %v3688
    %vm3695 = vcmp.gt.f32.partialorder %v3691, 0.0
    %vm3696 = vcmp.gt.f32.partialorder %v3692, 0.0
    %vm3697 = vcmp.gt.f32.partialorder %v3693, 0.0
    %vm3698 = vcmp.gt.f32.partialorder %v3694, 0.0
    %v3699 = vmul.f32 %v3691, 0.2
    %v3700 = vmul.f32 %v3692, 0.2
    %v3701 = vmul.f32 %v3693, 0.2
    %v3702 = vmul.f32 %v3694, 0.2
    %v3703 = vsel %vm3695, %v3691, %v3699
    %v3704 = vsel %vm3696, %v3692, %v3700
    %v3705 = vsel %vm3697, %v3693, %v3701
    %v3706 = vsel %vm3698, %v3694, %v3702
    %v3707 = vpack.c.bf16 %v3705, %v3703
    %v3708 = vpack.c.bf16 %v3706, %v3704
    %v3709 = vunpack.c.l.bf16 %v3707
    %v3710 = vunpack.c.l.bf16 %v3708
    %v3711 = vunpack.c.h.bf16 %v3707
    %v3712 = vunpack.c.h.bf16 %v3708
    %v3713 = vsub.f32 %v3703, %v3709
    %v3714 = vsub.f32 %v3704, %v3710
    %v3715 = vsub.f32 %v3705, %v3711
    %v3716 = vsub.f32 %v3706, %v3712
    %v3717 = vpack.c.bf16 %v3715, %v3713
    %v3718 = vpack.c.bf16 %v3716, %v3714
    %v3719 = vld [vmem:[#allocation23] sm:$0xff]
    %v3720 = vld [vmem:[#allocation23 + $0x8] sm:$0xff]
    %v3721 = vld [vmem:[#allocation23 + $0x10] sm:$0xff]
    %v3722 = vld [vmem:[#allocation23 + $0x18] sm:$0xff]
    %v3723 = vld [vmem:[#allocation23 + $0x20] sm:$0xff]
    %v3724 = vld [vmem:[#allocation23 + $0x28] sm:$0xff]
    %v3725 = vld [vmem:[#allocation23 + $0x30] sm:$0xff]
    %v3726 = vld [vmem:[#allocation23 + $0x38] sm:$0xff]
    %v3727 = vld [vmem:[#allocation23 + $0x40] sm:$0xff]
    %v3728 = vld [vmem:[#allocation23 + $0x48] sm:$0xff]
    %v3729 = vld [vmem:[#allocation23 + $0x50] sm:$0xff]
    %v3730 = vld [vmem:[#allocation23 + $0x58] sm:$0xff]
    %v3731 = vld [vmem:[#allocation23 + $0x60] sm:$0xff]
    %v3732 = vld [vmem:[#allocation23 + $0x68] sm:$0xff]
    %v3733 = vld [vmem:[#allocation23 + $0x70] sm:$0xff]
    %v3734 = vld [vmem:[#allocation23 + $0x78] sm:$0xff]
    %v3735 = vld [vmem:[#allocation23 + $0x80] sm:$0xff]
    %v3736 = vld [vmem:[#allocation23 + $0x88] sm:$0xff]
    %v3737 = vld [vmem:[#allocation23 + $0x90] sm:$0xff]
    %v3738 = vld [vmem:[#allocation23 + $0x98] sm:$0xff]
    %v3739 = vld [vmem:[#allocation23 + $0xa0] sm:$0xff]
    %v3740 = vld [vmem:[#allocation23 + $0xa8] sm:$0xff]
    %v3741 = vld [vmem:[#allocation23 + $0xb0] sm:$0xff]
    %v3742 = vld [vmem:[#allocation23 + $0xb8] sm:$0xff]
    %v3743 = vld [vmem:[#allocation23 + $0xc0] sm:$0xff]
    %v3744 = vld [vmem:[#allocation23 + $0xc8] sm:$0xff]
    %v3745 = vld [vmem:[#allocation23 + $0xd0] sm:$0xff]
    %v3746 = vld [vmem:[#allocation23 + $0xd8] sm:$0xff]
    %v3747 = vld [vmem:[#allocation23 + $0xe0] sm:$0xff]
    %v3748 = vld [vmem:[#allocation23 + $0xe8] sm:$0xff]
    %v3749 = vld [vmem:[#allocation23 + $0xf0] sm:$0xff]
    %v3750 = vld [vmem:[#allocation23 + $0xf8] sm:$0xff]
    %v3751 = vld [vmem:[#allocation25] sm:$0xff]
    %v3752 = vld [vmem:[#allocation25 + $0x8] sm:$0xff]
    %v3753 = vld [vmem:[#allocation25 + $0x10] sm:$0xff]
    %v3754 = vld [vmem:[#allocation25 + $0x18] sm:$0xff]
    %v3755 = vld [vmem:[#allocation25 + $0x20] sm:$0xff]
    %v3756 = vld [vmem:[#allocation25 + $0x28] sm:$0xff]
    %v3757 = vld [vmem:[#allocation25 + $0x30] sm:$0xff]
    %v3758 = vld [vmem:[#allocation25 + $0x38] sm:$0xff]
    %v3759 = vld [vmem:[#allocation25 + $0x40] sm:$0xff]
    %v3760 = vld [vmem:[#allocation25 + $0x48] sm:$0xff]
    %v3761 = vld [vmem:[#allocation25 + $0x50] sm:$0xff]
    %v3762 = vld [vmem:[#allocation25 + $0x58] sm:$0xff]
    %v3763 = vld [vmem:[#allocation25 + $0x60] sm:$0xff]
    %v3764 = vld [vmem:[#allocation25 + $0x68] sm:$0xff]
    %v3765 = vld [vmem:[#allocation25 + $0x70] sm:$0xff]
    %v3766 = vld [vmem:[#allocation25 + $0x78] sm:$0xff]
    %v3767 = vld [vmem:[#allocation25 + $0x80] sm:$0xff]
    %v3768 = vld [vmem:[#allocation25 + $0x88] sm:$0xff]
    %v3769 = vld [vmem:[#allocation25 + $0x90] sm:$0xff]
    %v3770 = vld [vmem:[#allocation25 + $0x98] sm:$0xff]
    %v3771 = vld [vmem:[#allocation25 + $0xa0] sm:$0xff]
    %v3772 = vld [vmem:[#allocation25 + $0xa8] sm:$0xff]
    %v3773 = vld [vmem:[#allocation25 + $0xb0] sm:$0xff]
    %v3774 = vld [vmem:[#allocation25 + $0xb8] sm:$0xff]
    %v3775 = vld [vmem:[#allocation25 + $0xc0] sm:$0xff]
    %v3776 = vld [vmem:[#allocation25 + $0xc8] sm:$0xff]
    %v3777 = vld [vmem:[#allocation25 + $0xd0] sm:$0xff]
    %v3778 = vld [vmem:[#allocation25 + $0xd8] sm:$0xff]
    %v3779 = vld [vmem:[#allocation25 + $0xe0] sm:$0xff]
    %v3780 = vld [vmem:[#allocation25 + $0xe8] sm:$0xff]
    %v3781 = vld [vmem:[#allocation25 + $0xf0] sm:$0xff]
    %v3782 = vld [vmem:[#allocation25 + $0xf8] sm:$0xff]
    %v3815 = vunpack.c.l.b16 %v3719
    %v3816 = vunpack.c.h.b16 %v3719
    %v3817 = vunpack.c.l.b16 %v3720
    %v3818 = vunpack.c.h.b16 %v3720
    %v3819 = vunpack.c.l.b16 %v3721
    %v3820 = vunpack.c.h.b16 %v3721
    %v3821 = vunpack.c.l.b16 %v3722
    %v3822 = vunpack.c.h.b16 %v3722
    %v3823 = vunpack.c.l.b16 %v3723
    %v3824 = vunpack.c.h.b16 %v3723
    %v3825 = vunpack.c.l.b16 %v3724
    %v3826 = vunpack.c.h.b16 %v3724
    %v3827 = vunpack.c.l.b16 %v3725
    %v3828 = vunpack.c.h.b16 %v3725
    %v3829 = vunpack.c.l.b16 %v3726
    %v3830 = vunpack.c.h.b16 %v3726
    %v3831 = vunpack.c.l.b16 %v3727
    %v3832 = vunpack.c.h.b16 %v3727
    %v3833 = vunpack.c.l.b16 %v3728
    %v3834 = vunpack.c.h.b16 %v3728
    %v3835 = vunpack.c.l.b16 %v3729
    %v3836 = vunpack.c.h.b16 %v3729
    %v3837 = vunpack.c.l.b16 %v3730
    %v3838 = vunpack.c.h.b16 %v3730
    %v3839 = vunpack.c.l.b16 %v3731
    %v3840 = vunpack.c.h.b16 %v3731
    %v3841 = vunpack.c.l.b16 %v3732
    %v3842 = vunpack.c.h.b16 %v3732
    %v3843 = vunpack.c.l.b16 %v3733
    %v3844 = vunpack.c.h.b16 %v3733
    %v3845 = vunpack.c.l.b16 %v3734
    %v3846 = vunpack.c.h.b16 %v3734
    %v3847 = vunpack.c.l.b16 %v3735
    %v3848 = vunpack.c.h.b16 %v3735
    %v3849 = vunpack.c.l.b16 %v3736
    %v3850 = vunpack.c.h.b16 %v3736
    %v3851 = vunpack.c.l.b16 %v3737
    %v3852 = vunpack.c.h.b16 %v3737
    %v3853 = vunpack.c.l.b16 %v3738
    %v3854 = vunpack.c.h.b16 %v3738
    %v3855 = vunpack.c.l.b16 %v3739
    %v3856 = vunpack.c.h.b16 %v3739
    %v3857 = vunpack.c.l.b16 %v3740
    %v3858 = vunpack.c.h.b16 %v3740
    %v3859 = vunpack.c.l.b16 %v3741
    %v3860 = vunpack.c.h.b16 %v3741
    %v3861 = vunpack.c.l.b16 %v3742
    %v3862 = vunpack.c.h.b16 %v3742
    %v3863 = vunpack.c.l.b16 %v3743
    %v3864 = vunpack.c.h.b16 %v3743
    %v3865 = vunpack.c.l.b16 %v3744
    %v3866 = vunpack.c.h.b16 %v3744
    %v3867 = vunpack.c.l.b16 %v3745
    %v3868 = vunpack.c.h.b16 %v3745
    %v3869 = vunpack.c.l.b16 %v3746
    %v3870 = vunpack.c.h.b16 %v3746
    %v3871 = vunpack.c.l.b16 %v3747
    %v3872 = vunpack.c.h.b16 %v3747
    %v3873 = vunpack.c.l.b16 %v3748
    %v3874 = vunpack.c.h.b16 %v3748
    %v3875 = vunpack.c.l.b16 %v3749
    %v3876 = vunpack.c.h.b16 %v3749
    %v3877 = vunpack.c.l.b16 %v3750
    %v3878 = vunpack.c.h.b16 %v3750
    %v3879 = vpack.c.b16 %v3817, %v3815
    %v3880 = vpack.c.b16 %v3818, %v3816
    %v3881 = vpack.c.b16 %v3821, %v3819
    %v3882 = vpack.c.b16 %v3822, %v3820
    %v3883 = vpack.c.b16 %v3825, %v3823
    %v3884 = vpack.c.b16 %v3826, %v3824
    %v3885 = vpack.c.b16 %v3829, %v3827
    %v3886 = vpack.c.b16 %v3830, %v3828
    %v3887 = vpack.c.b16 %v3833, %v3831
    %v3888 = vpack.c.b16 %v3834, %v3832
    %v3889 = vpack.c.b16 %v3837, %v3835
    %v3890 = vpack.c.b16 %v3838, %v3836
    %v3891 = vpack.c.b16 %v3841, %v3839
    %v3892 = vpack.c.b16 %v3842, %v3840
    %v3893 = vpack.c.b16 %v3845, %v3843
    %v3894 = vpack.c.b16 %v3846, %v3844
    %v3895 = vpack.c.b16 %v3849, %v3847
    %v3896 = vpack.c.b16 %v3850, %v3848
    %v3897 = vpack.c.b16 %v3853, %v3851
    %v3898 = vpack.c.b16 %v3854, %v3852
    %v3899 = vpack.c.b16 %v3857, %v3855
    %v3900 = vpack.c.b16 %v3858, %v3856
    %v3901 = vpack.c.b16 %v3861, %v3859
    %v3902 = vpack.c.b16 %v3862, %v3860
    %v3903 = vpack.c.b16 %v3865, %v3863
    %v3904 = vpack.c.b16 %v3866, %v3864
    %v3905 = vpack.c.b16 %v3869, %v3867
    %v3906 = vpack.c.b16 %v3870, %v3868
    %v3907 = vpack.c.b16 %v3873, %v3871
    %v3908 = vpack.c.b16 %v3874, %v3872
    %v3909 = vpack.c.b16 %v3877, %v3875
    %v3910 = vpack.c.b16 %v3878, %v3876
    %3943 = vmatprep.subr.bf16.mxu0 %v3880
    %3944 = vmatpush1.bf16.msra.mxu0 %v3879
    %3945 = vmatprep.subr.bf16.mxu0 %v3882
    %3946 = vmatpush1.bf16.msra.mxu0 %v3881
    %3947 = vmatprep.subr.bf16.mxu0 %v3884
    %3948 = vmatpush1.bf16.msra.mxu0 %v3883
    %3949 = vmatprep.subr.bf16.mxu0 %v3886
    %3950 = vmatpush1.bf16.msra.mxu0 %v3885
    %3951 = vmatprep.subr.bf16.mxu0 %v3888
    %3952 = vmatpush1.bf16.msra.mxu0 %v3887
    %3953 = vmatprep.subr.bf16.mxu0 %v3890
    %3954 = vmatpush1.bf16.msra.mxu0 %v3889
    %3955 = vmatprep.subr.bf16.mxu0 %v3892
    %3956 = vmatpush1.bf16.msra.mxu0 %v3891
    %3957 = vmatprep.subr.bf16.mxu0 %v3894
    %3958 = vmatpush1.bf16.msra.mxu0 %v3893
    %3959 = vmatprep.subr.bf16.mxu0 %v3896
    %3960 = vmatpush1.bf16.msra.mxu0 %v3895
    %3961 = vmatprep.subr.bf16.mxu0 %v3898
    %3962 = vmatpush1.bf16.msra.mxu0 %v3897
    %3963 = vmatprep.subr.bf16.mxu0 %v3900
    %3964 = vmatpush1.bf16.msra.mxu0 %v3899
    %3965 = vmatprep.subr.bf16.mxu0 %v3902
    %3966 = vmatpush1.bf16.msra.mxu0 %v3901
    %3967 = vmatprep.subr.bf16.mxu0 %v3904
    %3968 = vmatpush1.bf16.msra.mxu0 %v3903
    %3969 = vmatprep.subr.bf16.mxu0 %v3906
    %3970 = vmatpush1.bf16.msra.mxu0 %v3905
    %3971 = vmatprep.subr.bf16.mxu0 %v3908
    %3972 = vmatpush1.bf16.msra.mxu0 %v3907
    %3973 = vmatprep.subr.bf16.mxu0 %v3910
    %3974 = vmatpush1.bf16.msra.mxu0 %v3909
    %3975 = vmatprep.mubr.bf16.mxu0 %v3718
    %3976 = vmatmul.mubr.bf16.gmra.mrb[0].mxu0 %v3717
    %v3977 = vpop.f32.mrb[0].mxu0
    %v3978 = vadd.f32 0.0, %v3977
    %v3979 = vpop.f32.mrb[0].mxu0
    %v3980 = vadd.f32 0.0, %v3979
    %v3981 = vpop.f32.mrb[0].mxu0
    %v3982 = vadd.f32 0.0, %v3981
    %v3983 = vpop.f32.mrb[0].mxu0
    %v3984 = vadd.f32 0.0, %v3983
    %3985 = vdwg.mxu0
    %v4018 = vunpack.c.l.b16 %v3751
    %v4019 = vunpack.c.h.b16 %v3751
    %v4020 = vunpack.c.l.b16 %v3752
    %v4021 = vunpack.c.h.b16 %v3752
    %v4022 = vunpack.c.l.b16 %v3753
    %v4023 = vunpack.c.h.b16 %v3753
    %v4024 = vunpack.c.l.b16 %v3754
    %v4025 = vunpack.c.h.b16 %v3754
    %v4026 = vunpack.c.l.b16 %v3755
    %v4027 = vunpack.c.h.b16 %v3755
    %v4028 = vunpack.c.l.b16 %v3756
    %v4029 = vunpack.c.h.b16 %v3756
    %v4030 = vunpack.c.l.b16 %v3757
    %v4031 = vunpack.c.h.b16 %v3757
    %v4032 = vunpack.c.l.b16 %v3758
    %v4033 = vunpack.c.h.b16 %v3758
    %v4034 = vunpack.c.l.b16 %v3759
    %v4035 = vunpack.c.h.b16 %v3759
    %v4036 = vunpack.c.l.b16 %v3760
    %v4037 = vunpack.c.h.b16 %v3760
    %v4038 = vunpack.c.l.b16 %v3761
    %v4039 = vunpack.c.h.b16 %v3761
    %v4040 = vunpack.c.l.b16 %v3762
    %v4041 = vunpack.c.h.b16 %v3762
    %v4042 = vunpack.c.l.b16 %v3763
    %v4043 = vunpack.c.h.b16 %v3763
    %v4044 = vunpack.c.l.b16 %v3764
    %v4045 = vunpack.c.h.b16 %v3764
    %v4046 = vunpack.c.l.b16 %v3765
    %v4047 = vunpack.c.h.b16 %v3765
    %v4048 = vunpack.c.l.b16 %v3766
    %v4049 = vunpack.c.h.b16 %v3766
    %v4050 = vunpack.c.l.b16 %v3767
    %v4051 = vunpack.c.h.b16 %v3767
    %v4052 = vunpack.c.l.b16 %v3768
    %v4053 = vunpack.c.h.b16 %v3768
    %v4054 = vunpack.c.l.b16 %v3769
    %v4055 = vunpack.c.h.b16 %v3769
    %v4056 = vunpack.c.l.b16 %v3770
    %v4057 = vunpack.c.h.b16 %v3770
    %v4058 = vunpack.c.l.b16 %v3771
    %v4059 = vunpack.c.h.b16 %v3771
    %v4060 = vunpack.c.l.b16 %v3772
    %v4061 = vunpack.c.h.b16 %v3772
    %v4062 = vunpack.c.l.b16 %v3773
    %v4063 = vunpack.c.h.b16 %v3773
    %v4064 = vunpack.c.l.b16 %v3774
    %v4065 = vunpack.c.h.b16 %v3774
    %v4066 = vunpack.c.l.b16 %v3775
    %v4067 = vunpack.c.h.b16 %v3775
    %v4068 = vunpack.c.l.b16 %v3776
    %v4069 = vunpack.c.h.b16 %v3776
    %v4070 = vunpack.c.l.b16 %v3777
    %v4071 = vunpack.c.h.b16 %v3777
    %v4072 = vunpack.c.l.b16 %v3778
    %v4073 = vunpack.c.h.b16 %v3778
    %v4074 = vunpack.c.l.b16 %v3779
    %v4075 = vunpack.c.h.b16 %v3779
    %v4076 = vunpack.c.l.b16 %v3780
    %v4077 = vunpack.c.h.b16 %v3780
    %v4078 = vunpack.c.l.b16 %v3781
    %v4079 = vunpack.c.h.b16 %v3781
    %v4080 = vunpack.c.l.b16 %v3782
    %v4081 = vunpack.c.h.b16 %v3782
    %v4082 = vpack.c.b16 %v4020, %v4018
    %v4083 = vpack.c.b16 %v4021, %v4019
    %v4084 = vpack.c.b16 %v4024, %v4022
    %v4085 = vpack.c.b16 %v4025, %v4023
    %v4086 = vpack.c.b16 %v4028, %v4026
    %v4087 = vpack.c.b16 %v4029, %v4027
    %v4088 = vpack.c.b16 %v4032, %v4030
    %v4089 = vpack.c.b16 %v4033, %v4031
    %v4090 = vpack.c.b16 %v4036, %v4034
    %v4091 = vpack.c.b16 %v4037, %v4035
    %v4092 = vpack.c.b16 %v4040, %v4038
    %v4093 = vpack.c.b16 %v4041, %v4039
    %v4094 = vpack.c.b16 %v4044, %v4042
    %v4095 = vpack.c.b16 %v4045, %v4043
    %v4096 = vpack.c.b16 %v4048, %v4046
    %v4097 = vpack.c.b16 %v4049, %v4047
    %v4098 = vpack.c.b16 %v4052, %v4050
    %v4099 = vpack.c.b16 %v4053, %v4051
    %v4100 = vpack.c.b16 %v4056, %v4054
    %v4101 = vpack.c.b16 %v4057, %v4055
    %v4102 = vpack.c.b16 %v4060, %v4058
    %v4103 = vpack.c.b16 %v4061, %v4059
    %v4104 = vpack.c.b16 %v4064, %v4062
    %v4105 = vpack.c.b16 %v4065, %v4063
    %v4106 = vpack.c.b16 %v4068, %v4066
    %v4107 = vpack.c.b16 %v4069, %v4067
    %v4108 = vpack.c.b16 %v4072, %v4070
    %v4109 = vpack.c.b16 %v4073, %v4071
    %v4110 = vpack.c.b16 %v4076, %v4074
    %v4111 = vpack.c.b16 %v4077, %v4075
    %v4112 = vpack.c.b16 %v4080, %v4078
    %v4113 = vpack.c.b16 %v4081, %v4079
    %4146 = vmatprep.subr.bf16.mxu0 %v4083
    %4147 = vmatpush1.bf16.msra.mxu0 %v4082
    %4148 = vmatprep.subr.bf16.mxu0 %v4085
    %4149 = vmatpush1.bf16.msra.mxu0 %v4084
    %4150 = vmatprep.subr.bf16.mxu0 %v4087
    %4151 = vmatpush1.bf16.msra.mxu0 %v4086
    %4152 = vmatprep.subr.bf16.mxu0 %v4089
    %4153 = vmatpush1.bf16.msra.mxu0 %v4088
    %4154 = vmatprep.subr.bf16.mxu0 %v4091
    %4155 = vmatpush1.bf16.msra.mxu0 %v4090
    %4156 = vmatprep.subr.bf16.mxu0 %v4093
    %4157 = vmatpush1.bf16.msra.mxu0 %v4092
    %4158 = vmatprep.subr.bf16.mxu0 %v4095
    %4159 = vmatpush1.bf16.msra.mxu0 %v4094
    %4160 = vmatprep.subr.bf16.mxu0 %v4097
    %4161 = vmatpush1.bf16.msra.mxu0 %v4096
    %4162 = vmatprep.subr.bf16.mxu0 %v4099
    %4163 = vmatpush1.bf16.msra.mxu0 %v4098
    %4164 = vmatprep.subr.bf16.mxu0 %v4101
    %4165 = vmatpush1.bf16.msra.mxu0 %v4100
    %4166 = vmatprep.subr.bf16.mxu0 %v4103
    %4167 = vmatpush1.bf16.msra.mxu0 %v4102
    %4168 = vmatprep.subr.bf16.mxu0 %v4105
    %4169 = vmatpush1.bf16.msra.mxu0 %v4104
    %4170 = vmatprep.subr.bf16.mxu0 %v4107
    %4171 = vmatpush1.bf16.msra.mxu0 %v4106
    %4172 = vmatprep.subr.bf16.mxu0 %v4109
    %4173 = vmatpush1.bf16.msra.mxu0 %v4108
    %4174 = vmatprep.subr.bf16.mxu0 %v4111
    %4175 = vmatpush1.bf16.msra.mxu0 %v4110
    %4176 = vmatprep.subr.bf16.mxu0 %v4113
    %4177 = vmatpush1.bf16.msra.mxu0 %v4112
    %4178 = vmatprep.mubr.bf16.mxu0 %v3708
    %4179 = vmatmul.mubr.bf16.gmra.mrb[0].mxu0 %v3707
    %v4180 = vpop.f32.mrb[0].mxu0
    %v4181 = vadd.f32 %v3978, %v4180
    %v4182 = vpop.f32.mrb[0].mxu0
    %v4183 = vadd.f32 %v3980, %v4182
    %v4184 = vpop.f32.mrb[0].mxu0
    %v4185 = vadd.f32 %v3982, %v4184
    %v4186 = vpop.f32.mrb[0].mxu0
    %v4187 = vadd.f32 %v3984, %v4186
    %4188 = vdwg.mxu0
    %4189 = vmatprep.subr.bf16.mxu0 %v3880
    %4190 = vmatpush1.bf16.msra.mxu0 %v3879
    %4191 = vmatprep.subr.bf16.mxu0 %v3882
    %4192 = vmatpush1.bf16.msra.mxu0 %v3881
    %4193 = vmatprep.subr.bf16.mxu0 %v3884
    %4194 = vmatpush1.bf16.msra.mxu0 %v3883
    %4195 = vmatprep.subr.bf16.mxu0 %v3886
    %4196 = vmatpush1.bf16.msra.mxu0 %v3885
    %4197 = vmatprep.subr.bf16.mxu0 %v3888
    %4198 = vmatpush1.bf16.msra.mxu0 %v3887
    %4199 = vmatprep.subr.bf16.mxu0 %v3890
    %4200 = vmatpush1.bf16.msra.mxu0 %v3889
    %4201 = vmatprep.subr.bf16.mxu0 %v3892
    %4202 = vmatpush1.bf16.msra.mxu0 %v3891
    %4203 = vmatprep.subr.bf16.mxu0 %v3894
    %4204 = vmatpush1.bf16.msra.mxu0 %v3893
    %4205 = vmatprep.subr.bf16.mxu0 %v3896
    %4206 = vmatpush1.bf16.msra.mxu0 %v3895
    %4207 = vmatprep.subr.bf16.mxu0 %v3898
    %4208 = vmatpush1.bf16.msra.mxu0 %v3897
    %4209 = vmatprep.subr.bf16.mxu0 %v3900
    %4210 = vmatpush1.bf16.msra.mxu0 %v3899
    %4211 = vmatprep.subr.bf16.mxu0 %v3902
    %4212 = vmatpush1.bf16.msra.mxu0 %v3901
    %4213 = vmatprep.subr.bf16.mxu0 %v3904
    %4214 = vmatpush1.bf16.msra.mxu0 %v3903
    %4215 = vmatprep.subr.bf16.mxu0 %v3906
    %4216 = vmatpush1.bf16.msra.mxu0 %v3905
    %4217 = vmatprep.subr.bf16.mxu0 %v3908
    %4218 = vmatpush1.bf16.msra.mxu0 %v3907
    %4219 = vmatprep.subr.bf16.mxu0 %v3910
    %4220 = vmatpush1.bf16.msra.mxu0 %v3909
    %4221 = vmatprep.mubr.bf16.mxu0 %v3708
    %4222 = vmatmul.mubr.bf16.gmra.mrb[0].mxu0 %v3707
    %v4223 = vpop.f32.mrb[0].mxu0
    %v4224 = vadd.f32 %v4181, %v4223
    %v4225 = vpop.f32.mrb[0].mxu0
    %v4226 = vadd.f32 %v4183, %v4225
    %v4227 = vpop.f32.mrb[0].mxu0
    %v4228 = vadd.f32 %v4185, %v4227
    %v4229 = vpop.f32.mrb[0].mxu0
    %v4230 = vadd.f32 %v4187, %v4229
    %4231 = vdwg.mxu0
    %v4232 = vld [vmem:[%s41] sm:$0x3]
    %v4234 = vlaneseq
    %v4235 = vshrl.u32 %v4234, 7
    %v4236 = vsub.s32 0, %v4235
    %v4237 = vrot.slane %v4232, %v4236
    %v4238 = vlaneseq
    %v4239 = vshrl.u32 %v4238, 7
    %v4240 = vsub.s32 1, %v4239
    %v4241 = vrot.slane %v4232, %v4240
    %v4244 = vadd.f32 %v4224, %v4237
    %v4245 = vadd.f32 %v4226, %v4241
    %v4246 = vadd.f32 %v4228, %v4237
    %v4247 = vadd.f32 %v4230, %v4241
    %v4248 = vadd.f32 %v3150, %v4244
    %v4249 = vadd.f32 %v3151, %v4245
    %v4250 = vadd.f32 %v3152, %v4246
    %v4251 = vadd.f32 %v3153, %v4247
    %vm4252 = vcmp.gt.f32.partialorder %v4248, 0.0
    %vm4253 = vcmp.gt.f32.partialorder %v4249, 0.0
    %vm4254 = vcmp.gt.f32.partialorder %v4250, 0.0
    %vm4255 = vcmp.gt.f32.partialorder %v4251, 0.0
    %v4256 = vmul.f32 %v4248, 0.2
    %v4257 = vmul.f32 %v4249, 0.2
    %v4258 = vmul.f32 %v4250, 0.2
    %v4259 = vmul.f32 %v4251, 0.2
    %v4260 = vsel %vm4252, %v4248, %v4256
    %v4261 = vsel %vm4253, %v4249, %v4257
    %v4262 = vsel %vm4254, %v4250, %v4258
    %v4263 = vsel %vm4255, %v4251, %v4259
    %v4264 = vpack.c.bf16 %v1775, %v1773
    %v4265 = vpack.c.bf16 %v1776, %v1774
    %v4266 = vunpack.c.l.bf16 %v4264
    %v4267 = vunpack.c.l.bf16 %v4265
    %v4268 = vunpack.c.h.bf16 %v4264
    %v4269 = vunpack.c.h.bf16 %v4265
    %v4270 = vsub.f32 %v1773, %v4266
    %v4271 = vsub.f32 %v1774, %v4267
    %v4272 = vsub.f32 %v1775, %v4268
    %v4273 = vsub.f32 %v1776, %v4269
    %v4274 = vpack.c.bf16 %v4272, %v4270
    %v4275 = vpack.c.bf16 %v4273, %v4271
    %v4276 = vld [vmem:[#allocation26] sm:$0xf]
    %v4277 = vld [vmem:[#allocation26 + $0x4] sm:$0xf]
    %v4278 = vld [vmem:[#allocation26 + $0x8] sm:$0xf]
    %v4279 = vld [vmem:[#allocation26 + $0xc] sm:$0xf]
    %v4280 = vld [vmem:[#allocation26 + $0x10] sm:$0xf]
    %v4281 = vld [vmem:[#allocation26 + $0x14] sm:$0xf]
    %v4282 = vld [vmem:[#allocation26 + $0x18] sm:$0xf]
    %v4283 = vld [vmem:[#allocation26 + $0x1c] sm:$0xf]
    %v4284 = vld [vmem:[#allocation26 + $0x20] sm:$0xf]
    %v4285 = vld [vmem:[#allocation26 + $0x24] sm:$0xf]
    %v4286 = vld [vmem:[#allocation26 + $0x28] sm:$0xf]
    %v4287 = vld [vmem:[#allocation26 + $0x2c] sm:$0xf]
    %v4288 = vld [vmem:[#allocation26 + $0x30] sm:$0xf]
    %v4289 = vld [vmem:[#allocation26 + $0x34] sm:$0xf]
    %v4290 = vld [vmem:[#allocation26 + $0x38] sm:$0xf]
    %v4291 = vld [vmem:[#allocation26 + $0x3c] sm:$0xf]
    %v4292 = vld [vmem:[#allocation26 + $0x40] sm:$0xf]
    %v4293 = vld [vmem:[#allocation26 + $0x44] sm:$0xf]
    %v4294 = vld [vmem:[#allocation26 + $0x48] sm:$0xf]
    %v4295 = vld [vmem:[#allocation26 + $0x4c] sm:$0xf]
    %v4296 = vld [vmem:[#allocation26 + $0x50] sm:$0xf]
    %v4297 = vld [vmem:[#allocation26 + $0x54] sm:$0xf]
    %v4298 = vld [vmem:[#allocation26 + $0x58] sm:$0xf]
    %v4299 = vld [vmem:[#allocation26 + $0x5c] sm:$0xf]
    %v4300 = vld [vmem:[#allocation26 + $0x60] sm:$0xf]
    %v4301 = vld [vmem:[#allocation26 + $0x64] sm:$0xf]
    %v4302 = vld [vmem:[#allocation26 + $0x68] sm:$0xf]
    %v4303 = vld [vmem:[#allocation26 + $0x6c] sm:$0xf]
    %v4304 = vld [vmem:[#allocation26 + $0x70] sm:$0xf]
    %v4305 = vld [vmem:[#allocation26 + $0x74] sm:$0xf]
    %v4306 = vld [vmem:[#allocation26 + $0x78] sm:$0xf]
    %v4307 = vld [vmem:[#allocation26 + $0x7c] sm:$0xf]
    %v4308 = vld [vmem:[#allocation28] sm:$0xf]
    %v4309 = vld [vmem:[#allocation28 + $0x4] sm:$0xf]
    %v4310 = vld [vmem:[#allocation28 + $0x8] sm:$0xf]
    %v4311 = vld [vmem:[#allocation28 + $0xc] sm:$0xf]
    %v4312 = vld [vmem:[#allocation28 + $0x10] sm:$0xf]
    %v4313 = vld [vmem:[#allocation28 + $0x14] sm:$0xf]
    %v4314 = vld [vmem:[#allocation28 + $0x18] sm:$0xf]
    %v4315 = vld [vmem:[#allocation28 + $0x1c] sm:$0xf]
    %v4316 = vld [vmem:[#allocation28 + $0x20] sm:$0xf]
    %v4317 = vld [vmem:[#allocation28 + $0x24] sm:$0xf]
    %v4318 = vld [vmem:[#allocation28 + $0x28] sm:$0xf]
    %v4319 = vld [vmem:[#allocation28 + $0x2c] sm:$0xf]
    %v4320 = vld [vmem:[#allocation28 + $0x30] sm:$0xf]
    %v4321 = vld [vmem:[#allocation28 + $0x34] sm:$0xf]
    %v4322 = vld [vmem:[#allocation28 + $0x38] sm:$0xf]
    %v4323 = vld [vmem:[#allocation28 + $0x3c] sm:$0xf]
    %v4324 = vld [vmem:[#allocation28 + $0x40] sm:$0xf]
    %v4325 = vld [vmem:[#allocation28 + $0x44] sm:$0xf]
    %v4326 = vld [vmem:[#allocation28 + $0x48] sm:$0xf]
    %v4327 = vld [vmem:[#allocation28 + $0x4c] sm:$0xf]
    %v4328 = vld [vmem:[#allocation28 + $0x50] sm:$0xf]
    %v4329 = vld [vmem:[#allocation28 + $0x54] sm:$0xf]
    %v4330 = vld [vmem:[#allocation28 + $0x58] sm:$0xf]
    %v4331 = vld [vmem:[#allocation28 + $0x5c] sm:$0xf]
    %v4332 = vld [vmem:[#allocation28 + $0x60] sm:$0xf]
    %v4333 = vld [vmem:[#allocation28 + $0x64] sm:$0xf]
    %v4334 = vld [vmem:[#allocation28 + $0x68] sm:$0xf]
    %v4335 = vld [vmem:[#allocation28 + $0x6c] sm:$0xf]
    %v4336 = vld [vmem:[#allocation28 + $0x70] sm:$0xf]
    %v4337 = vld [vmem:[#allocation28 + $0x74] sm:$0xf]
    %v4338 = vld [vmem:[#allocation28 + $0x78] sm:$0xf]
    %v4339 = vld [vmem:[#allocation28 + $0x7c] sm:$0xf]
    %v4372 = vunpack.c.l.b16 %v4276
    %v4373 = vunpack.c.l.b16 %v4277
    %v4374 = vunpack.c.l.b16 %v4278
    %v4375 = vunpack.c.l.b16 %v4279
    %v4376 = vunpack.c.l.b16 %v4280
    %v4377 = vunpack.c.l.b16 %v4281
    %v4378 = vunpack.c.l.b16 %v4282
    %v4379 = vunpack.c.l.b16 %v4283
    %v4380 = vunpack.c.l.b16 %v4284
    %v4381 = vunpack.c.l.b16 %v4285
    %v4382 = vunpack.c.l.b16 %v4286
    %v4383 = vunpack.c.l.b16 %v4287
    %v4384 = vunpack.c.l.b16 %v4288
    %v4385 = vunpack.c.l.b16 %v4289
    %v4386 = vunpack.c.l.b16 %v4290
    %v4387 = vunpack.c.l.b16 %v4291
    %v4388 = vunpack.c.l.b16 %v4292
    %v4389 = vunpack.c.l.b16 %v4293
    %v4390 = vunpack.c.l.b16 %v4294
    %v4391 = vunpack.c.l.b16 %v4295
    %v4392 = vunpack.c.l.b16 %v4296
    %v4393 = vunpack.c.l.b16 %v4297
    %v4394 = vunpack.c.l.b16 %v4298
    %v4395 = vunpack.c.l.b16 %v4299
    %v4396 = vunpack.c.l.b16 %v4300
    %v4397 = vunpack.c.l.b16 %v4301
    %v4398 = vunpack.c.l.b16 %v4302
    %v4399 = vunpack.c.l.b16 %v4303
    %v4400 = vunpack.c.l.b16 %v4304
    %v4401 = vunpack.c.l.b16 %v4305
    %v4402 = vunpack.c.l.b16 %v4306
    %v4403 = vunpack.c.l.b16 %v4307
    %v4404 = vpack.c.b16 %v4373, %v4372
    %v4405 = vpack.c.b16 %v4375, %v4374
    %v4406 = vpack.c.b16 %v4377, %v4376
    %v4407 = vpack.c.b16 %v4379, %v4378
    %v4408 = vpack.c.b16 %v4381, %v4380
    %v4409 = vpack.c.b16 %v4383, %v4382
    %v4410 = vpack.c.b16 %v4385, %v4384
    %v4411 = vpack.c.b16 %v4387, %v4386
    %v4412 = vpack.c.b16 %v4389, %v4388
    %v4413 = vpack.c.b16 %v4391, %v4390
    %v4414 = vpack.c.b16 %v4393, %v4392
    %v4415 = vpack.c.b16 %v4395, %v4394
    %v4416 = vpack.c.b16 %v4397, %v4396
    %v4417 = vpack.c.b16 %v4399, %v4398
    %v4418 = vpack.c.b16 %v4401, %v4400
    %v4419 = vpack.c.b16 %v4403, %v4402
    %4436 = vmatprep.subr.bf16.mxu0 0
    %4437 = vmatpush1.bf16.msra.mxu0 %v4404
    %4438 = vmatprep.subr.bf16.mxu0 0
    %4439 = vmatpush1.bf16.msra.mxu0 %v4405
    %4440 = vmatprep.subr.bf16.mxu0 0
    %4441 = vmatpush1.bf16.msra.mxu0 %v4406
    %4442 = vmatprep.subr.bf16.mxu0 0
    %4443 = vmatpush1.bf16.msra.mxu0 %v4407
    %4444 = vmatprep.subr.bf16.mxu0 0
    %4445 = vmatpush1.bf16.msra.mxu0 %v4408
    %4446 = vmatprep.subr.bf16.mxu0 0
    %4447 = vmatpush1.bf16.msra.mxu0 %v4409
    %4448 = vmatprep.subr.bf16.mxu0 0
    %4449 = vmatpush1.bf16.msra.mxu0 %v4410
    %4450 = vmatprep.subr.bf16.mxu0 0
    %4451 = vmatpush1.bf16.msra.mxu0 %v4411
    %4452 = vmatprep.subr.bf16.mxu0 0
    %4453 = vmatpush1.bf16.msra.mxu0 %v4412
    %4454 = vmatprep.subr.bf16.mxu0 0
    %4455 = vmatpush1.bf16.msra.mxu0 %v4413
    %4456 = vmatprep.subr.bf16.mxu0 0
    %4457 = vmatpush1.bf16.msra.mxu0 %v4414
    %4458 = vmatprep.subr.bf16.mxu0 0
    %4459 = vmatpush1.bf16.msra.mxu0 %v4415
    %4460 = vmatprep.subr.bf16.mxu0 0
    %4461 = vmatpush1.bf16.msra.mxu0 %v4416
    %4462 = vmatprep.subr.bf16.mxu0 0
    %4463 = vmatpush1.bf16.msra.mxu0 %v4417
    %4464 = vmatprep.subr.bf16.mxu0 0
    %4465 = vmatpush1.bf16.msra.mxu0 %v4418
    %4466 = vmatprep.subr.bf16.mxu0 0
    %4467 = vmatpush1.bf16.msra.mxu0 %v4419
    %4468 = vmatprep.mubr.bf16.mxu0 %v4275
    %4469 = vmatmul.mubr.bf16.gmra.mrb[0].mxu0 %v4274
    %v4470 = vpop.f32.mrb[0].mxu0
    %v4471 = vadd.f32 0.0, %v4470
    %v4472 = vpop.f32.mrb[0].mxu0
    %v4473 = vpop.f32.mrb[0].mxu0
    %v4474 = vadd.f32 0.0, %v4473
    %v4475 = vpop.f32.mrb[0].mxu0
    %4476 = vdwg.mxu0
    %v4509 = vunpack.c.l.b16 %v4308
    %v4510 = vunpack.c.l.b16 %v4309
    %v4511 = vunpack.c.l.b16 %v4310
    %v4512 = vunpack.c.l.b16 %v4311
    %v4513 = vunpack.c.l.b16 %v4312
    %v4514 = vunpack.c.l.b16 %v4313
    %v4515 = vunpack.c.l.b16 %v4314
    %v4516 = vunpack.c.l.b16 %v4315
    %v4517 = vunpack.c.l.b16 %v4316
    %v4518 = vunpack.c.l.b16 %v4317
    %v4519 = vunpack.c.l.b16 %v4318
    %v4520 = vunpack.c.l.b16 %v4319
    %v4521 = vunpack.c.l.b16 %v4320
    %v4522 = vunpack.c.l.b16 %v4321
    %v4523 = vunpack.c.l.b16 %v4322
    %v4524 = vunpack.c.l.b16 %v4323
    %v4525 = vunpack.c.l.b16 %v4324
    %v4526 = vunpack.c.l.b16 %v4325
    %v4527 = vunpack.c.l.b16 %v4326
    %v4528 = vunpack.c.l.b16 %v4327
    %v4529 = vunpack.c.l.b16 %v4328
    %v4530 = vunpack.c.l.b16 %v4329
    %v4531 = vunpack.c.l.b16 %v4330
    %v4532 = vunpack.c.l.b16 %v4331
    %v4533 = vunpack.c.l.b16 %v4332
    %v4534 = vunpack.c.l.b16 %v4333
    %v4535 = vunpack.c.l.b16 %v4334
    %v4536 = vunpack.c.l.b16 %v4335
    %v4537 = vunpack.c.l.b16 %v4336
    %v4538 = vunpack.c.l.b16 %v4337
    %v4539 = vunpack.c.l.b16 %v4338
    %v4540 = vunpack.c.l.b16 %v4339
    %v4541 = vpack.c.b16 %v4510, %v4509
    %v4542 = vpack.c.b16 %v4512, %v4511
    %v4543 = vpack.c.b16 %v4514, %v4513
    %v4544 = vpack.c.b16 %v4516, %v4515
    %v4545 = vpack.c.b16 %v4518, %v4517
    %v4546 = vpack.c.b16 %v4520, %v4519
    %v4547 = vpack.c.b16 %v4522, %v4521
    %v4548 = vpack.c.b16 %v4524, %v4523
    %v4549 = vpack.c.b16 %v4526, %v4525
    %v4550 = vpack.c.b16 %v4528, %v4527
    %v4551 = vpack.c.b16 %v4530, %v4529
    %v4552 = vpack.c.b16 %v4532, %v4531
    %v4553 = vpack.c.b16 %v4534, %v4533
    %v4554 = vpack.c.b16 %v4536, %v4535
    %v4555 = vpack.c.b16 %v4538, %v4537
    %v4556 = vpack.c.b16 %v4540, %v4539
    %4573 = vmatprep.subr.bf16.mxu0 0
    %4574 = vmatpush1.bf16.msra.mxu0 %v4541
    %4575 = vmatprep.subr.bf16.mxu0 0
    %4576 = vmatpush1.bf16.msra.mxu0 %v4542
    %4577 = vmatprep.subr.bf16.mxu0 0
    %4578 = vmatpush1.bf16.msra.mxu0 %v4543
    %4579 = vmatprep.subr.bf16.mxu0 0
    %4580 = vmatpush1.bf16.msra.mxu0 %v4544
    %4581 = vmatprep.subr.bf16.mxu0 0
    %4582 = vmatpush1.bf16.msra.mxu0 %v4545
    %4583 = vmatprep.subr.bf16.mxu0 0
    %4584 = vmatpush1.bf16.msra.mxu0 %v4546
    %4585 = vmatprep.subr.bf16.mxu0 0
    %4586 = vmatpush1.bf16.msra.mxu0 %v4547
    %4587 = vmatprep.subr.bf16.mxu0 0
    %4588 = vmatpush1.bf16.msra.mxu0 %v4548
    %4589 = vmatprep.subr.bf16.mxu0 0
    %4590 = vmatpush1.bf16.msra.mxu0 %v4549
    %4591 = vmatprep.subr.bf16.mxu0 0
    %4592 = vmatpush1.bf16.msra.mxu0 %v4550
    %4593 = vmatprep.subr.bf16.mxu0 0
    %4594 = vmatpush1.bf16.msra.mxu0 %v4551
    %4595 = vmatprep.subr.bf16.mxu0 0
    %4596 = vmatpush1.bf16.msra.mxu0 %v4552
    %4597 = vmatprep.subr.bf16.mxu0 0
    %4598 = vmatpush1.bf16.msra.mxu0 %v4553
    %4599 = vmatprep.subr.bf16.mxu0 0
    %4600 = vmatpush1.bf16.msra.mxu0 %v4554
    %4601 = vmatprep.subr.bf16.mxu0 0
    %4602 = vmatpush1.bf16.msra.mxu0 %v4555
    %4603 = vmatprep.subr.bf16.mxu0 0
    %4604 = vmatpush1.bf16.msra.mxu0 %v4556
    %4605 = vmatprep.mubr.bf16.mxu0 %v4265
    %4606 = vmatmul.mubr.bf16.gmra.mrb[0].mxu0 %v4264
    %v4607 = vpop.f32.mrb[0].mxu0
    %v4608 = vadd.f32 %v4471, %v4607
    %v4609 = vpop.f32.mrb[0].mxu0
    %v4610 = vpop.f32.mrb[0].mxu0
    %v4611 = vadd.f32 %v4474, %v4610
    %v4612 = vpop.f32.mrb[0].mxu0
    %4613 = vdwg.mxu0
    %4614 = vmatprep.subr.bf16.mxu0 0
    %4615 = vmatpush1.bf16.msra.mxu0 %v4404
    %4616 = vmatprep.subr.bf16.mxu0 0
    %4617 = vmatpush1.bf16.msra.mxu0 %v4405
    %4618 = vmatprep.subr.bf16.mxu0 0
    %4619 = vmatpush1.bf16.msra.mxu0 %v4406
    %4620 = vmatprep.subr.bf16.mxu0 0
    %4621 = vmatpush1.bf16.msra.mxu0 %v4407
    %4622 = vmatprep.subr.bf16.mxu0 0
    %4623 = vmatpush1.bf16.msra.mxu0 %v4408
    %4624 = vmatprep.subr.bf16.mxu0 0
    %4625 = vmatpush1.bf16.msra.mxu0 %v4409
    %4626 = vmatprep.subr.bf16.mxu0 0
    %4627 = vmatpush1.bf16.msra.mxu0 %v4410
    %4628 = vmatprep.subr.bf16.mxu0 0
    %4629 = vmatpush1.bf16.msra.mxu0 %v4411
    %4630 = vmatprep.subr.bf16.mxu0 0
    %4631 = vmatpush1.bf16.msra.mxu0 %v4412
    %4632 = vmatprep.subr.bf16.mxu0 0
    %4633 = vmatpush1.bf16.msra.mxu0 %v4413
    %4634 = vmatprep.subr.bf16.mxu0 0
    %4635 = vmatpush1.bf16.msra.mxu0 %v4414
    %4636 = vmatprep.subr.bf16.mxu0 0
    %4637 = vmatpush1.bf16.msra.mxu0 %v4415
    %4638 = vmatprep.subr.bf16.mxu0 0
    %4639 = vmatpush1.bf16.msra.mxu0 %v4416
    %4640 = vmatprep.subr.bf16.mxu0 0
    %4641 = vmatpush1.bf16.msra.mxu0 %v4417
    %4642 = vmatprep.subr.bf16.mxu0 0
    %4643 = vmatpush1.bf16.msra.mxu0 %v4418
    %4644 = vmatprep.subr.bf16.mxu0 0
    %4645 = vmatpush1.bf16.msra.mxu0 %v4419
    %4646 = vmatprep.mubr.bf16.mxu0 %v4265
    %4647 = vmatmul.mubr.bf16.gmra.mrb[0].mxu0 %v4264
    %v4648 = vpop.f32.mrb[0].mxu0
    %v4649 = vadd.f32 %v4608, %v4648
    %v4650 = vpop.f32.mrb[0].mxu0
    %v4651 = vpop.f32.mrb[0].mxu0
    %v4652 = vadd.f32 %v4611, %v4651
    %v4653 = vpop.f32.mrb[0].mxu0
    %4654 = vdwg.mxu0
    %v4655 = vpack.c.bf16 %v4262, %v4260
    %v4656 = vpack.c.bf16 %v4263, %v4261
    %v4657 = vunpack.c.l.bf16 %v4655
    %v4658 = vunpack.c.l.bf16 %v4656
    %v4659 = vunpack.c.h.bf16 %v4655
    %v4660 = vunpack.c.h.bf16 %v4656
    %v4661 = vsub.f32 %v4260, %v4657
    %v4662 = vsub.f32 %v4261, %v4658
    %v4663 = vsub.f32 %v4262, %v4659
    %v4664 = vsub.f32 %v4263, %v4660
    %v4665 = vpack.c.bf16 %v4663, %v4661
    %v4666 = vpack.c.bf16 %v4664, %v4662
    %v4667 = vld [vmem:[#allocation29] sm:$0xf]
    %v4668 = vld [vmem:[#allocation29 + $0x4] sm:$0xf]
    %v4669 = vld [vmem:[#allocation29 + $0x8] sm:$0xf]
    %v4670 = vld [vmem:[#allocation29 + $0xc] sm:$0xf]
    %v4671 = vld [vmem:[#allocation29 + $0x10] sm:$0xf]
    %v4672 = vld [vmem:[#allocation29 + $0x14] sm:$0xf]
    %v4673 = vld [vmem:[#allocation29 + $0x18] sm:$0xf]
    %v4674 = vld [vmem:[#allocation29 + $0x1c] sm:$0xf]
    %v4675 = vld [vmem:[#allocation29 + $0x20] sm:$0xf]
    %v4676 = vld [vmem:[#allocation29 + $0x24] sm:$0xf]
    %v4677 = vld [vmem:[#allocation29 + $0x28] sm:$0xf]
    %v4678 = vld [vmem:[#allocation29 + $0x2c] sm:$0xf]
    %v4679 = vld [vmem:[#allocation29 + $0x30] sm:$0xf]
    %v4680 = vld [vmem:[#allocation29 + $0x34] sm:$0xf]
    %v4681 = vld [vmem:[#allocation29 + $0x38] sm:$0xf]
    %v4682 = vld [vmem:[#allocation29 + $0x3c] sm:$0xf]
    %v4683 = vld [vmem:[#allocation29 + $0x40] sm:$0xf]
    %v4684 = vld [vmem:[#allocation29 + $0x44] sm:$0xf]
    %v4685 = vld [vmem:[#allocation29 + $0x48] sm:$0xf]
    %v4686 = vld [vmem:[#allocation29 + $0x4c] sm:$0xf]
    %v4687 = vld [vmem:[#allocation29 + $0x50] sm:$0xf]
    %v4688 = vld [vmem:[#allocation29 + $0x54] sm:$0xf]
    %v4689 = vld [vmem:[#allocation29 + $0x58] sm:$0xf]
    %v4690 = vld [vmem:[#allocation29 + $0x5c] sm:$0xf]
    %v4691 = vld [vmem:[#allocation29 + $0x60] sm:$0xf]
    %v4692 = vld [vmem:[#allocation29 + $0x64] sm:$0xf]
    %v4693 = vld [vmem:[#allocation29 + $0x68] sm:$0xf]
    %v4694 = vld [vmem:[#allocation29 + $0x6c] sm:$0xf]
    %v4695 = vld [vmem:[#allocation29 + $0x70] sm:$0xf]
    %v4696 = vld [vmem:[#allocation29 + $0x74] sm:$0xf]
    %v4697 = vld [vmem:[#allocation29 + $0x78] sm:$0xf]
    %v4698 = vld [vmem:[#allocation29 + $0x7c] sm:$0xf]
    %v4699 = vld [vmem:[#allocation31] sm:$0xf]
    %v4700 = vld [vmem:[#allocation31 + $0x4] sm:$0xf]
    %v4701 = vld [vmem:[#allocation31 + $0x8] sm:$0xf]
    %v4702 = vld [vmem:[#allocation31 + $0xc] sm:$0xf]
    %v4703 = vld [vmem:[#allocation31 + $0x10] sm:$0xf]
    %v4704 = vld [vmem:[#allocation31 + $0x14] sm:$0xf]
    %v4705 = vld [vmem:[#allocation31 + $0x18] sm:$0xf]
    %v4706 = vld [vmem:[#allocation31 + $0x1c] sm:$0xf]
    %v4707 = vld [vmem:[#allocation31 + $0x20] sm:$0xf]
    %v4708 = vld [vmem:[#allocation31 + $0x24] sm:$0xf]
    %v4709 = vld [vmem:[#allocation31 + $0x28] sm:$0xf]
    %v4710 = vld [vmem:[#allocation31 + $0x2c] sm:$0xf]
    %v4711 = vld [vmem:[#allocation31 + $0x30] sm:$0xf]
    %v4712 = vld [vmem:[#allocation31 + $0x34] sm:$0xf]
    %v4713 = vld [vmem:[#allocation31 + $0x38] sm:$0xf]
    %v4714 = vld [vmem:[#allocation31 + $0x3c] sm:$0xf]
    %v4715 = vld [vmem:[#allocation31 + $0x40] sm:$0xf]
    %v4716 = vld [vmem:[#allocation31 + $0x44] sm:$0xf]
    %v4717 = vld [vmem:[#allocation31 + $0x48] sm:$0xf]
    %v4718 = vld [vmem:[#allocation31 + $0x4c] sm:$0xf]
    %v4719 = vld [vmem:[#allocation31 + $0x50] sm:$0xf]
    %v4720 = vld [vmem:[#allocation31 + $0x54] sm:$0xf]
    %v4721 = vld [vmem:[#allocation31 + $0x58] sm:$0xf]
    %v4722 = vld [vmem:[#allocation31 + $0x5c] sm:$0xf]
    %v4723 = vld [vmem:[#allocation31 + $0x60] sm:$0xf]
    %v4724 = vld [vmem:[#allocation31 + $0x64] sm:$0xf]
    %v4725 = vld [vmem:[#allocation31 + $0x68] sm:$0xf]
    %v4726 = vld [vmem:[#allocation31 + $0x6c] sm:$0xf]
    %v4727 = vld [vmem:[#allocation31 + $0x70] sm:$0xf]
    %v4728 = vld [vmem:[#allocation31 + $0x74] sm:$0xf]
    %v4729 = vld [vmem:[#allocation31 + $0x78] sm:$0xf]
    %v4730 = vld [vmem:[#allocation31 + $0x7c] sm:$0xf]
    %v4763 = vunpack.c.l.b16 %v4667
    %v4764 = vunpack.c.l.b16 %v4668
    %v4765 = vunpack.c.l.b16 %v4669
    %v4766 = vunpack.c.l.b16 %v4670
    %v4767 = vunpack.c.l.b16 %v4671
    %v4768 = vunpack.c.l.b16 %v4672
    %v4769 = vunpack.c.l.b16 %v4673
    %v4770 = vunpack.c.l.b16 %v4674
    %v4771 = vunpack.c.l.b16 %v4675
    %v4772 = vunpack.c.l.b16 %v4676
    %v4773 = vunpack.c.l.b16 %v4677
    %v4774 = vunpack.c.l.b16 %v4678
    %v4775 = vunpack.c.l.b16 %v4679
    %v4776 = vunpack.c.l.b16 %v4680
    %v4777 = vunpack.c.l.b16 %v4681
    %v4778 = vunpack.c.l.b16 %v4682
    %v4779 = vunpack.c.l.b16 %v4683
    %v4780 = vunpack.c.l.b16 %v4684
    %v4781 = vunpack.c.l.b16 %v4685
    %v4782 = vunpack.c.l.b16 %v4686
    %v4783 = vunpack.c.l.b16 %v4687
    %v4784 = vunpack.c.l.b16 %v4688
    %v4785 = vunpack.c.l.b16 %v4689
    %v4786 = vunpack.c.l.b16 %v4690
    %v4787 = vunpack.c.l.b16 %v4691
    %v4788 = vunpack.c.l.b16 %v4692
    %v4789 = vunpack.c.l.b16 %v4693
    %v4790 = vunpack.c.l.b16 %v4694
    %v4791 = vunpack.c.l.b16 %v4695
    %v4792 = vunpack.c.l.b16 %v4696
    %v4793 = vunpack.c.l.b16 %v4697
    %v4794 = vunpack.c.l.b16 %v4698
    %v4795 = vpack.c.b16 %v4764, %v4763
    %v4796 = vpack.c.b16 %v4766, %v4765
    %v4797 = vpack.c.b16 %v4768, %v4767
    %v4798 = vpack.c.b16 %v4770, %v4769
    %v4799 = vpack.c.b16 %v4772, %v4771
    %v4800 = vpack.c.b16 %v4774, %v4773
    %v4801 = vpack.c.b16 %v4776, %v4775
    %v4802 = vpack.c.b16 %v4778, %v4777
    %v4803 = vpack.c.b16 %v4780, %v4779
    %v4804 = vpack.c.b16 %v4782, %v4781
    %v4805 = vpack.c.b16 %v4784, %v4783
    %v4806 = vpack.c.b16 %v4786, %v4785
    %v4807 = vpack.c.b16 %v4788, %v4787
    %v4808 = vpack.c.b16 %v4790, %v4789
    %v4809 = vpack.c.b16 %v4792, %v4791
    %v4810 = vpack.c.b16 %v4794, %v4793
    %4827 = vmatprep.subr.bf16.mxu0 0
    %4828 = vmatpush1.bf16.msra.mxu0 %v4795
    %4829 = vmatprep.subr.bf16.mxu0 0
    %4830 = vmatpush1.bf16.msra.mxu0 %v4796
    %4831 = vmatprep.subr.bf16.mxu0 0
    %4832 = vmatpush1.bf16.msra.mxu0 %v4797
    %4833 = vmatprep.subr.bf16.mxu0 0
    %4834 = vmatpush1.bf16.msra.mxu0 %v4798
    %4835 = vmatprep.subr.bf16.mxu0 0
    %4836 = vmatpush1.bf16.msra.mxu0 %v4799
    %4837 = vmatprep.subr.bf16.mxu0 0
    %4838 = vmatpush1.bf16.msra.mxu0 %v4800
    %4839 = vmatprep.subr.bf16.mxu0 0
    %4840 = vmatpush1.bf16.msra.mxu0 %v4801
    %4841 = vmatprep.subr.bf16.mxu0 0
    %4842 = vmatpush1.bf16.msra.mxu0 %v4802
    %4843 = vmatprep.subr.bf16.mxu0 0
    %4844 = vmatpush1.bf16.msra.mxu0 %v4803
    %4845 = vmatprep.subr.bf16.mxu0 0
    %4846 = vmatpush1.bf16.msra.mxu0 %v4804
    %4847 = vmatprep.subr.bf16.mxu0 0
    %4848 = vmatpush1.bf16.msra.mxu0 %v4805
    %4849 = vmatprep.subr.bf16.mxu0 0
    %4850 = vmatpush1.bf16.msra.mxu0 %v4806
    %4851 = vmatprep.subr.bf16.mxu0 0
    %4852 = vmatpush1.bf16.msra.mxu0 %v4807
    %4853 = vmatprep.subr.bf16.mxu0 0
    %4854 = vmatpush1.bf16.msra.mxu0 %v4808
    %4855 = vmatprep.subr.bf16.mxu0 0
    %4856 = vmatpush1.bf16.msra.mxu0 %v4809
    %4857 = vmatprep.subr.bf16.mxu0 0
    %4858 = vmatpush1.bf16.msra.mxu0 %v4810
    %4859 = vmatprep.mubr.bf16.mxu0 %v4666
    %4860 = vmatmul.mubr.bf16.gmra.mrb[0].mxu0 %v4665
    %v4861 = vpop.f32.mrb[0].mxu0
    %v4862 = vadd.f32 0.0, %v4861
    %v4863 = vpop.f32.mrb[0].mxu0
    %v4864 = vpop.f32.mrb[0].mxu0
    %v4865 = vadd.f32 0.0, %v4864
    %v4866 = vpop.f32.mrb[0].mxu0
    %4867 = vdwg.mxu0
    %v4900 = vunpack.c.l.b16 %v4699
    %v4901 = vunpack.c.l.b16 %v4700
    %v4902 = vunpack.c.l.b16 %v4701
    %v4903 = vunpack.c.l.b16 %v4702
    %v4904 = vunpack.c.l.b16 %v4703
    %v4905 = vunpack.c.l.b16 %v4704
    %v4906 = vunpack.c.l.b16 %v4705
    %v4907 = vunpack.c.l.b16 %v4706
    %v4908 = vunpack.c.l.b16 %v4707
    %v4909 = vunpack.c.l.b16 %v4708
    %v4910 = vunpack.c.l.b16 %v4709
    %v4911 = vunpack.c.l.b16 %v4710
    %v4912 = vunpack.c.l.b16 %v4711
    %v4913 = vunpack.c.l.b16 %v4712
    %v4914 = vunpack.c.l.b16 %v4713
    %v4915 = vunpack.c.l.b16 %v4714
    %v4916 = vunpack.c.l.b16 %v4715
    %v4917 = vunpack.c.l.b16 %v4716
    %v4918 = vunpack.c.l.b16 %v4717
    %v4919 = vunpack.c.l.b16 %v4718
    %v4920 = vunpack.c.l.b16 %v4719
    %v4921 = vunpack.c.l.b16 %v4720
    %v4922 = vunpack.c.l.b16 %v4721
    %v4923 = vunpack.c.l.b16 %v4722
    %v4924 = vunpack.c.l.b16 %v4723
    %v4925 = vunpack.c.l.b16 %v4724
    %v4926 = vunpack.c.l.b16 %v4725
    %v4927 = vunpack.c.l.b16 %v4726
    %v4928 = vunpack.c.l.b16 %v4727
    %v4929 = vunpack.c.l.b16 %v4728
    %v4930 = vunpack.c.l.b16 %v4729
    %v4931 = vunpack.c.l.b16 %v4730
    %v4932 = vpack.c.b16 %v4901, %v4900
    %v4933 = vpack.c.b16 %v4903, %v4902
    %v4934 = vpack.c.b16 %v4905, %v4904
    %v4935 = vpack.c.b16 %v4907, %v4906
    %v4936 = vpack.c.b16 %v4909, %v4908
    %v4937 = vpack.c.b16 %v4911, %v4910
    %v4938 = vpack.c.b16 %v4913, %v4912
    %v4939 = vpack.c.b16 %v4915, %v4914
    %v4940 = vpack.c.b16 %v4917, %v4916
    %v4941 = vpack.c.b16 %v4919, %v4918
    %v4942 = vpack.c.b16 %v4921, %v4920
    %v4943 = vpack.c.b16 %v4923, %v4922
    %v4944 = vpack.c.b16 %v4925, %v4924
    %v4945 = vpack.c.b16 %v4927, %v4926
    %v4946 = vpack.c.b16 %v4929, %v4928
    %v4947 = vpack.c.b16 %v4931, %v4930
    %4964 = vmatprep.subr.bf16.mxu0 0
    %4965 = vmatpush1.bf16.msra.mxu0 %v4932
    %4966 = vmatprep.subr.bf16.mxu0 0
    %4967 = vmatpush1.bf16.msra.mxu0 %v4933
    %4968 = vmatprep.subr.bf16.mxu0 0
    %4969 = vmatpush1.bf16.msra.mxu0 %v4934
    %4970 = vmatprep.subr.bf16.mxu0 0
    %4971 = vmatpush1.bf16.msra.mxu0 %v4935
    %4972 = vmatprep.subr.bf16.mxu0 0
    %4973 = vmatpush1.bf16.msra.mxu0 %v4936
    %4974 = vmatprep.subr.bf16.mxu0 0
    %4975 = vmatpush1.bf16.msra.mxu0 %v4937
    %4976 = vmatprep.subr.bf16.mxu0 0
    %4977 = vmatpush1.bf16.msra.mxu0 %v4938
    %4978 = vmatprep.subr.bf16.mxu0 0
    %4979 = vmatpush1.bf16.msra.mxu0 %v4939
    %4980 = vmatprep.subr.bf16.mxu0 0
    %4981 = vmatpush1.bf16.msra.mxu0 %v4940
    %4982 = vmatprep.subr.bf16.mxu0 0
    %4983 = vmatpush1.bf16.msra.mxu0 %v4941
    %4984 = vmatprep.subr.bf16.mxu0 0
    %4985 = vmatpush1.bf16.msra.mxu0 %v4942
    %4986 = vmatprep.subr.bf16.mxu0 0
    %4987 = vmatpush1.bf16.msra.mxu0 %v4943
    %4988 = vmatprep.subr.bf16.mxu0 0
    %4989 = vmatpush1.bf16.msra.mxu0 %v4944
    %4990 = vmatprep.subr.bf16.mxu0 0
    %4991 = vmatpush1.bf16.msra.mxu0 %v4945
    %4992 = vmatprep.subr.bf16.mxu0 0
    %4993 = vmatpush1.bf16.msra.mxu0 %v4946
    %4994 = vmatprep.subr.bf16.mxu0 0
    %4995 = vmatpush1.bf16.msra.mxu0 %v4947
    %4996 = vmatprep.mubr.bf16.mxu0 %v4656
    %4997 = vmatmul.mubr.bf16.gmra.mrb[0].mxu0 %v4655
    %v4998 = vpop.f32.mrb[0].mxu0
    %v4999 = vadd.f32 %v4862, %v4998
    %v5000 = vpop.f32.mrb[0].mxu0
    %v5001 = vpop.f32.mrb[0].mxu0
    %v5002 = vadd.f32 %v4865, %v5001
    %v5003 = vpop.f32.mrb[0].mxu0
    %5004 = vdwg.mxu0
    %5005 = vmatprep.subr.bf16.mxu0 0
    %5006 = vmatpush1.bf16.msra.mxu0 %v4795
    %5007 = vmatprep.subr.bf16.mxu0 0
    %5008 = vmatpush1.bf16.msra.mxu0 %v4796
    %5009 = vmatprep.subr.bf16.mxu0 0
    %5010 = vmatpush1.bf16.msra.mxu0 %v4797
    %5011 = vmatprep.subr.bf16.mxu0 0
    %5012 = vmatpush1.bf16.msra.mxu0 %v4798
    %5013 = vmatprep.subr.bf16.mxu0 0
    %5014 = vmatpush1.bf16.msra.mxu0 %v4799
    %5015 = vmatprep.subr.bf16.mxu0 0
    %5016 = vmatpush1.bf16.msra.mxu0 %v4800
    %5017 = vmatprep.subr.bf16.mxu0 0
    %5018 = vmatpush1.bf16.msra.mxu0 %v4801
    %5019 = vmatprep.subr.bf16.mxu0 0
    %5020 = vmatpush1.bf16.msra.mxu0 %v4802
    %5021 = vmatprep.subr.bf16.mxu0 0
    %5022 = vmatpush1.bf16.msra.mxu0 %v4803
    %5023 = vmatprep.subr.bf16.mxu0 0
    %5024 = vmatpush1.bf16.msra.mxu0 %v4804
    %5025 = vmatprep.subr.bf16.mxu0 0
    %5026 = vmatpush1.bf16.msra.mxu0 %v4805
    %5027 = vmatprep.subr.bf16.mxu0 0
    %5028 = vmatpush1.bf16.msra.mxu0 %v4806
    %5029 = vmatprep.subr.bf16.mxu0 0
    %5030 = vmatpush1.bf16.msra.mxu0 %v4807
    %5031 = vmatprep.subr.bf16.mxu0 0
    %5032 = vmatpush1.bf16.msra.mxu0 %v4808
    %5033 = vmatprep.subr.bf16.mxu0 0
    %5034 = vmatpush1.bf16.msra.mxu0 %v4809
    %5035 = vmatprep.subr.bf16.mxu0 0
    %5036 = vmatpush1.bf16.msra.mxu0 %v4810
    %5037 = vmatprep.mubr.bf16.mxu0 %v4656
    %5038 = vmatmul.mubr.bf16.gmra.mrb[0].mxu0 %v4655
    %v5039 = vpop.f32.mrb[0].mxu0
    %v5040 = vadd.f32 %v4999, %v5039
    %v5041 = vpop.f32.mrb[0].mxu0
    %v5042 = vpop.f32.mrb[0].mxu0
    %v5043 = vadd.f32 %v5002, %v5042
    %v5044 = vpop.f32.mrb[0].mxu0
    %5045 = vdwg.mxu0
    %v5046 = vadd.f32 %v4649, %v5040
    %v5047 = vadd.f32 %v4652, %v5043
    %v5048 = vld [vmem:[%s51] sm:$0x1]
    %v5050 = vlaneseq
    %v5051 = vshrl.u32 %v5050, 7
    %v5052 = vsub.s32 0, %v5051
    %v5053 = vrot.slane %v5048, %v5052
    %v5055 = vadd.f32 %v5046, %v5053
    %v5056 = vadd.f32 %v5047, %v5053
    %vm5057 = vcmp.gt.f32.partialorder %v5055, 0.0
    %vm5058 = vcmp.gt.f32.partialorder %v5056, 0.0
    %v5059 = vmul.f32 %v5055, 0.2
    %v5060 = vmul.f32 %v5056, 0.2
    %v5061 = vsel %vm5057, %v5055, %v5059
    %v5062 = vsel %vm5058, %v5056, %v5060
    %v5063 = vpack.c.bf16 %v5062, %v5061
    %v5064 = vunpack.c.l.bf16 %v5063
    %v5065 = vunpack.c.h.bf16 %v5063
    %v5066 = vsub.f32 %v5061, %v5064
    %v5067 = vsub.f32 %v5062, %v5065
    %v5068 = vpack.c.bf16 %v5067, %v5066
    %v5069 = vld [vmem:[%s53] sm:$0xf]
    %v5070 = vld [vmem:[%s53 + $0x4] sm:$0xf]
    %v5071 = vld [vmem:[%s53 + $0x8] sm:$0xf]
    %v5072 = vld [vmem:[%s53 + $0xc] sm:$0xf]
    %v5073 = vld [vmem:[%s53 + $0x10] sm:$0xf]
    %v5074 = vld [vmem:[%s53 + $0x14] sm:$0xf]
    %v5075 = vld [vmem:[%s53 + $0x18] sm:$0xf]
    %v5076 = vld [vmem:[%s53 + $0x1c] sm:$0xf]
    %v5077 = vld [vmem:[%s53 + $0x20] sm:$0xf]
    %v5078 = vld [vmem:[%s53 + $0x24] sm:$0xf]
    %v5079 = vld [vmem:[%s53 + $0x28] sm:$0xf]
    %v5080 = vld [vmem:[%s53 + $0x2c] sm:$0xf]
    %v5081 = vld [vmem:[%s53 + $0x30] sm:$0xf]
    %v5082 = vld [vmem:[%s53 + $0x34] sm:$0xf]
    %v5083 = vld [vmem:[%s53 + $0x38] sm:$0xf]
    %v5084 = vld [vmem:[%s53 + $0x3c] sm:$0xf]
    %v5085 = vld [vmem:[#allocation32] sm:$0xf]
    %v5086 = vld [vmem:[#allocation32 + $0x4] sm:$0xf]
    %v5087 = vld [vmem:[#allocation32 + $0x8] sm:$0xf]
    %v5088 = vld [vmem:[#allocation32 + $0xc] sm:$0xf]
    %v5089 = vld [vmem:[#allocation32 + $0x10] sm:$0xf]
    %v5090 = vld [vmem:[#allocation32 + $0x14] sm:$0xf]
    %v5091 = vld [vmem:[#allocation32 + $0x18] sm:$0xf]
    %v5092 = vld [vmem:[#allocation32 + $0x1c] sm:$0xf]
    %v5093 = vld [vmem:[#allocation32 + $0x20] sm:$0xf]
    %v5094 = vld [vmem:[#allocation32 + $0x24] sm:$0xf]
    %v5095 = vld [vmem:[#allocation32 + $0x28] sm:$0xf]
    %v5096 = vld [vmem:[#allocation32 + $0x2c] sm:$0xf]
    %v5097 = vld [vmem:[#allocation32 + $0x30] sm:$0xf]
    %v5098 = vld [vmem:[#allocation32 + $0x34] sm:$0xf]
    %v5099 = vld [vmem:[#allocation32 + $0x38] sm:$0xf]
    %v5100 = vld [vmem:[#allocation32 + $0x3c] sm:$0xf]
    %v5117 = vunpack.c.l.b16 %v5069
    %v5118 = vunpack.c.l.b16 %v5070
    %v5119 = vunpack.c.l.b16 %v5071
    %v5120 = vunpack.c.l.b16 %v5072
    %v5121 = vunpack.c.l.b16 %v5073
    %v5122 = vunpack.c.l.b16 %v5074
    %v5123 = vunpack.c.l.b16 %v5075
    %v5124 = vunpack.c.l.b16 %v5076
    %v5125 = vunpack.c.l.b16 %v5077
    %v5126 = vunpack.c.l.b16 %v5078
    %v5127 = vunpack.c.l.b16 %v5079
    %v5128 = vunpack.c.l.b16 %v5080
    %v5129 = vunpack.c.l.b16 %v5081
    %v5130 = vunpack.c.l.b16 %v5082
    %v5131 = vunpack.c.l.b16 %v5083
    %v5132 = vunpack.c.l.b16 %v5084
    %v5133 = vpack.c.b16 %v5118, %v5117
    %v5134 = vpack.c.b16 %v5120, %v5119
    %v5135 = vpack.c.b16 %v5122, %v5121
    %v5136 = vpack.c.b16 %v5124, %v5123
    %v5137 = vpack.c.b16 %v5126, %v5125
    %v5138 = vpack.c.b16 %v5128, %v5127
    %v5139 = vpack.c.b16 %v5130, %v5129
    %v5140 = vpack.c.b16 %v5132, %v5131
    %5149 = vmatprep.subr.bf16.mxu0 0
    %5150 = vmatpush1.bf16.msra.mxu0 %v5133
    %5151 = vmatprep.subr.bf16.mxu0 0
    %5152 = vmatpush1.bf16.msra.mxu0 %v5134
    %5153 = vmatprep.subr.bf16.mxu0 0
    %5154 = vmatpush1.bf16.msra.mxu0 %v5135
    %5155 = vmatprep.subr.bf16.mxu0 0
    %5156 = vmatpush1.bf16.msra.mxu0 %v5136
    %5157 = vmatprep.subr.bf16.mxu0 0
    %5158 = vmatpush1.bf16.msra.mxu0 %v5137
    %5159 = vmatprep.subr.bf16.mxu0 0
    %5160 = vmatpush1.bf16.msra.mxu0 %v5138
    %5161 = vmatprep.subr.bf16.mxu0 0
    %5162 = vmatpush1.bf16.msra.mxu0 %v5139
    %5163 = vmatprep.subr.bf16.mxu0 0
    %5164 = vmatpush1.bf16.msra.mxu0 %v5140
    %5165 = vmatprep.subr.bf16.mxu0 0
    %5166 = vmatpush1.bf16.msra.mxu0 0
    %5167 = vmatprep.subr.bf16.mxu0 0
    %5168 = vmatpush1.bf16.msra.mxu0 0
    %5169 = vmatprep.subr.bf16.mxu0 0
    %5170 = vmatpush1.bf16.msra.mxu0 0
    %5171 = vmatprep.subr.bf16.mxu0 0
    %5172 = vmatpush1.bf16.msra.mxu0 0
    %5173 = vmatprep.subr.bf16.mxu0 0
    %5174 = vmatpush1.bf16.msra.mxu0 0
    %5175 = vmatprep.subr.bf16.mxu0 0
    %5176 = vmatpush1.bf16.msra.mxu0 0
    %5177 = vmatprep.subr.bf16.mxu0 0
    %5178 = vmatpush1.bf16.msra.mxu0 0
    %5179 = vmatprep.subr.bf16.mxu0 0
    %5180 = vmatpush1.bf16.msra.mxu0 0
    %5181 = vmatprep.mubr.bf16.mxu0 0
    %5182 = vmatmul.mubr.bf16.gmra.mrb[0].mxu0 %v5068
    %v5183 = vpop.f32.mrb[0].mxu0
    %v5184 = vadd.f32 0.0, %v5183
    %v5185 = vpop.f32.mrb[0].mxu0
    %v5186 = vpop.f32.mrb[0].mxu0
    %v5187 = vadd.f32 0.0, %v5186
    %v5188 = vpop.f32.mrb[0].mxu0
    %5189 = vdwg.mxu0
    %v5206 = vunpack.c.l.b16 %v5085
    %v5207 = vunpack.c.l.b16 %v5086
    %v5208 = vunpack.c.l.b16 %v5087
    %v5209 = vunpack.c.l.b16 %v5088
    %v5210 = vunpack.c.l.b16 %v5089
    %v5211 = vunpack.c.l.b16 %v5090
    %v5212 = vunpack.c.l.b16 %v5091
    %v5213 = vunpack.c.l.b16 %v5092
    %v5214 = vunpack.c.l.b16 %v5093
    %v5215 = vunpack.c.l.b16 %v5094
    %v5216 = vunpack.c.l.b16 %v5095
    %v5217 = vunpack.c.l.b16 %v5096
    %v5218 = vunpack.c.l.b16 %v5097
    %v5219 = vunpack.c.l.b16 %v5098
    %v5220 = vunpack.c.l.b16 %v5099
    %v5221 = vunpack.c.l.b16 %v5100
    %v5222 = vpack.c.b16 %v5207, %v5206
    %v5223 = vpack.c.b16 %v5209, %v5208
    %v5224 = vpack.c.b16 %v5211, %v5210
    %v5225 = vpack.c.b16 %v5213, %v5212
    %v5226 = vpack.c.b16 %v5215, %v5214
    %v5227 = vpack.c.b16 %v5217, %v5216
    %v5228 = vpack.c.b16 %v5219, %v5218
    %v5229 = vpack.c.b16 %v5221, %v5220
    %5238 = vmatprep.subr.bf16.mxu0 0
    %5239 = vmatpush1.bf16.msra.mxu0 %v5222
    %5240 = vmatprep.subr.bf16.mxu0 0
    %5241 = vmatpush1.bf16.msra.mxu0 %v5223
    %5242 = vmatprep.subr.bf16.mxu0 0
    %5243 = vmatpush1.bf16.msra.mxu0 %v5224
    %5244 = vmatprep.subr.bf16.mxu0 0
    %5245 = vmatpush1.bf16.msra.mxu0 %v5225
    %5246 = vmatprep.subr.bf16.mxu0 0
    %5247 = vmatpush1.bf16.msra.mxu0 %v5226
    %5248 = vmatprep.subr.bf16.mxu0 0
    %5249 = vmatpush1.bf16.msra.mxu0 %v5227
    %5250 = vmatprep.subr.bf16.mxu0 0
    %5251 = vmatpush1.bf16.msra.mxu0 %v5228
    %5252 = vmatprep.subr.bf16.mxu0 0
    %5253 = vmatpush1.bf16.msra.mxu0 %v5229
    %5254 = vmatprep.subr.bf16.mxu0 0
    %5255 = vmatpush1.bf16.msra.mxu0 0
    %5256 = vmatprep.subr.bf16.mxu0 0
    %5257 = vmatpush1.bf16.msra.mxu0 0
    %5258 = vmatprep.subr.bf16.mxu0 0
    %5259 = vmatpush1.bf16.msra.mxu0 0
    %5260 = vmatprep.subr.bf16.mxu0 0
    %5261 = vmatpush1.bf16.msra.mxu0 0
    %5262 = vmatprep.subr.bf16.mxu0 0
    %5263 = vmatpush1.bf16.msra.mxu0 0
    %5264 = vmatprep.subr.bf16.mxu0 0
    %5265 = vmatpush1.bf16.msra.mxu0 0
    %5266 = vmatprep.subr.bf16.mxu0 0
    %5267 = vmatpush1.bf16.msra.mxu0 0
    %5268 = vmatprep.subr.bf16.mxu0 0
    %5269 = vmatpush1.bf16.msra.mxu0 0
    %5270 = vmatprep.mubr.bf16.mxu0 0
    %5271 = vmatmul.mubr.bf16.gmra.mrb[0].mxu0 %v5063
    %v5272 = vpop.f32.mrb[0].mxu0
    %v5273 = vadd.f32 %v5184, %v5272
    %v5274 = vpop.f32.mrb[0].mxu0
    %v5275 = vpop.f32.mrb[0].mxu0
    %v5276 = vadd.f32 %v5187, %v5275
    %v5277 = vpop.f32.mrb[0].mxu0
    %5278 = vdwg.mxu0
    %5279 = vmatprep.subr.bf16.mxu0 0
    %5280 = vmatpush1.bf16.msra.mxu0 %v5133
    %5281 = vmatprep.subr.bf16.mxu0 0
    %5282 = vmatpush1.bf16.msra.mxu0 %v5134
    %5283 = vmatprep.subr.bf16.mxu0 0
    %5284 = vmatpush1.bf16.msra.mxu0 %v5135
    %5285 = vmatprep.subr.bf16.mxu0 0
    %5286 = vmatpush1.bf16.msra.mxu0 %v5136
    %5287 = vmatprep.subr.bf16.mxu0 0
    %5288 = vmatpush1.bf16.msra.mxu0 %v5137
    %5289 = vmatprep.subr.bf16.mxu0 0
    %5290 = vmatpush1.bf16.msra.mxu0 %v5138
    %5291 = vmatprep.subr.bf16.mxu0 0
    %5292 = vmatpush1.bf16.msra.mxu0 %v5139
    %5293 = vmatprep.subr.bf16.mxu0 0
    %5294 = vmatpush1.bf16.msra.mxu0 %v5140
    %5295 = vmatprep.subr.bf16.mxu0 0
    %5296 = vmatpush1.bf16.msra.mxu0 0
    %5297 = vmatprep.subr.bf16.mxu0 0
    %5298 = vmatpush1.bf16.msra.mxu0 0
    %5299 = vmatprep.subr.bf16.mxu0 0
    %5300 = vmatpush1.bf16.msra.mxu0 0
    %5301 = vmatprep.subr.bf16.mxu0 0
    %5302 = vmatpush1.bf16.msra.mxu0 0
    %5303 = vmatprep.subr.bf16.mxu0 0
    %5304 = vmatpush1.bf16.msra.mxu0 0
    %5305 = vmatprep.subr.bf16.mxu0 0
    %5306 = vmatpush1.bf16.msra.mxu0 0
    %5307 = vmatprep.subr.bf16.mxu0 0
    %5308 = vmatpush1.bf16.msra.mxu0 0
    %5309 = vmatprep.subr.bf16.mxu0 0
    %5310 = vmatpush1.bf16.msra.mxu0 0
    %5311 = vmatprep.mubr.bf16.mxu0 0
    %5312 = vmatmul.mubr.bf16.gmra.mrb[0].mxu0 %v5063
    %v5313 = vpop.f32.mrb[0].mxu0
    %v5314 = vadd.f32 %v5273, %v5313
    %v5315 = vpop.f32.mrb[0].mxu0
    %v5316 = vpop.f32.mrb[0].mxu0
    %v5317 = vadd.f32 %v5276, %v5316
    %v5318 = vpop.f32.mrb[0].mxu0
    %5319 = vdwg.mxu0
    %v5320 = vld [vmem:[%s57] sm:$0x1]
    %v5322 = vlaneseq
    %v5323 = vshrl.u32 %v5322, 7
    %v5324 = vsub.s32 0, %v5323
    %v5325 = vrot.slane %v5320, %v5324
    %v5327 = vadd.f32 %v5314, %v5325
    %v5328 = vadd.f32 %v5317, %v5325
    %5329 = vst [vmem:[#allocation34] sm:$0xff] %v5327
    %5330 = vst [vmem:[#allocation34 + $0x8] sm:$0xff] %v5328
    // Predicated region
    $region198: #{tpu_custom_call.1} parent=1 // pred_check
      _
    $region199: #{tpu_custom_call.1} parent=1 // pred_check_branch
      %5332 = sbr.rel (0) target = $region201
    $region200: #{tpu_custom_call.1} parent=1 // pred_region
      %s5334 = ssub.s32 256, 256
      %5335 = vsyncadd [#allocation4], %s5334
      %s5336 = sshll.u32 [#allocation34], 4
      %s5337 = int_to_ptr.vmem [resolvable:$true] %s5336
      %5342 = dma.vmem_to_hbm [thread:$0]  %s5337, 256, %s59, [#allocation4], 128, 128, 8
    $region201: #{tpu_custom_call.1} parent=1 // pred_fallthru
      _
    // Predicated region
    $region202: #{tpu_custom_call.1} parent=1 // pred_check
      _
    $region203: #{tpu_custom_call.1} parent=1 // pred_check_branch
      %5344 = sbr.rel (0) target = $region205
    $region204: #{tpu_custom_call.1} parent=1 // pred_region
      %5345 = dma.done [#allocation4], 256
    $region205: #{tpu_custom_call.1} parent=1 // pred_fallthru
      _
    %5346 = vsyncpa [#allocation3], 1
    %5347 = vsyncpa [#allocation6], 1
    %5348 = vsyncpa [#allocation9], 1
    %5349 = vsyncpa [#allocation12], 1
    %5350 = vsyncpa [#allocation15], 1
    %5351 = vsyncpa [#allocation18], 1
    %5352 = vsyncpa [#allocation21], 1
    %5353 = vsyncpa [#allocation24], 1
    %5354 = vsyncpa [#allocation27], 1
    %5355 = vsyncpa [#allocation30], 1
    %5356 = vsyncpa [#allocation33], 1
    %5357 = vsyncpa [#allocation4], 1

</llo_original>
